<compile_context>
chip_gen: v7x
topology: tpu7x:2x2x1
jax: 0.10.0
libtpu: 0.0.40
codegen_flags: <defaults>
</compile_context>

<pallas_src>
import functools

import jax
import jax.numpy as jnp
from jax.experimental import pallas as pl
from jax.experimental.pallas import tpu as pltpu

VIT_OUT = 1000
VIT_OUT_PAD = 1024
HEADS1 = 4
HEADS2 = 2
NEG_SLOPE = 0.2


def _round_up(x, m):
    return ((x + m - 1) // m) * m


def _full_spec(shape):
    # Whole array resident in VMEM for the single grid step.
    nd = len(shape)
    return pl.BlockSpec(shape, lambda i, _nd=nd: (0,) * _nd)


# ----------------------------------------------------------------------------
# Fused forward kernel.
# ----------------------------------------------------------------------------
def _fused_forward_kernel(
    num_ref,                                     # (T*Bp, F)   time-major numeric input (f32)
    img_ref,                                     # (Bp, 768)   flattened image (bf16)
    node_ref,                                    # (Bp, G)     node features (bf16)
    maskb_ref,                                   # (4*Bp, Bp)  additive adjacency bias, head-tiled (f32)
    sel1_ref,                                    # (4*Bp, 4H)  block-diag head selector {0,1} (f32)
    sel2_ref,                                    # (2*Bp, 2H)  block-diag head selector {0,1} (f32)
    w_num_enc_ref, b_num_enc_ref,                # (F, H) f32, (1, H) f32
    w_num_fc_ref, b_num_fc_ref,                  # (H, H) f32 (1/T folded), (1, H) f32
    w_vit_ref, b_vit_ref,                        # (768, 1024) bf16, (1, 1024) f32
    w_img_fc_ref, b_img_fc_ref,                  # (1024, H) bf16, (1, H) f32
    w_gat1_ref, a_src1_ref, a_dst1_ref, b_gat1_ref,   # (G,4H) bf16, (8,4H) f32, (4H,8) f32, (1,4H) f32
    w_gat2_ref, a_src2_ref, a_dst2_ref, b_gat2_ref,   # (4H,2H) bf16, (8,2H) f32, (2H,8) f32, (1,H) f32
    wg1_ref, bg1_ref, wg2_ref, bg2_ref,          # (3H,H) bf16, (1,H) f32, (H,128) bf16, (1,128) f32
    wc1_ref, bc1_ref, wc2_ref, bc2_ref, wc3_ref, bc3_ref,
    o_ref,                                       # (Bp, CLS_PAD) f32
    *, b_pad, seq_len, hidden, heads1, heads2, neg_slope):
    f32 = jnp.float32
    bf16 = jnp.bfloat16
    H = hidden

    # ---- numeric branch: per-timestep encoder + tanh, mean over T, num_fc ----
    enc = jnp.tanh(jnp.dot(num_ref[...], w_num_enc_ref[...],
                           preferred_element_type=f32) + b_num_enc_ref[...])
    summed = jnp.sum(enc.reshape(seq_len, b_pad, H), axis=0)   # 1/T folded into W_num_fc
    num_embed = (jnp.dot(summed, w_num_fc_ref[...], preferred_element_type=f32)
                 + b_num_fc_ref[...])                                  # (Bp, H)

    # ---- image branch: ViT stand-in (bf16 MXU operands) + image_fc ----------
    vit = (jnp.dot(img_ref[...], w_vit_ref[...], preferred_element_type=f32)
           + b_vit_ref[...])                                           # (Bp, 1024)
    image_embed = (jnp.dot(vit.astype(bf16), w_img_fc_ref[...],
                           preferred_element_type=f32) + b_img_fc_ref[...])  # (Bp, H)

    # ---- graph branch: two dense GATConv layers, heads batched along sublanes
    n = node_ref.shape[0]

    def gat_layer(h, a_src_ref, a_dst_ref, sel_ref, heads):
        # dst side: plain lane-dense matmul, nodes along sublanes  -> (n, 8)
        # src side: transposed-contraction einsum, nodes along lanes -> (8, n)
        alpha_dst = jnp.dot(h, a_dst_ref[...], preferred_element_type=f32)
        alpha_src = jnp.einsum("hk,nk->hn", a_src_ref[...], h,
                               preferred_element_type=f32)
        # Stack per-head (n, n) logit blocks along sublanes -> one softmax pass.
        blocks = [alpha_dst[:, hd:hd + 1] + alpha_src[hd:hd + 1, :]
                  for hd in range(heads)]
        e = jnp.concatenate(blocks, axis=0)                    # (heads*n, n)
        e = jnp.where(e > 0, e, neg_slope * e)                 # LeakyReLU
        e = e + maskb_ref[0:heads * n, :]                      # additive neighbour mask
        e = e - jnp.max(e, axis=-1, keepdims=True)
        p = jnp.exp(e)
        p = p / jnp.sum(p, axis=-1, keepdims=True)             # exact softmax
        r = jnp.dot(p, h, preferred_element_type=f32)          # (heads*n, heads*H)
        r = r * sel_ref[...]                                   # keep per-head diag blocks
        out = r[0:n, :]
        for hd in range(1, heads):
            out = out + r[hd * n:(hd + 1) * n, :]
        return out                                             # (n, heads*H) block-concat

    # GATConv 1 (heads=4, concat=True)
    h1 = jnp.dot(node_ref[...], w_gat1_ref[...], preferred_element_type=f32)
    g1 = gat_layer(h1, a_src1_ref, a_dst1_ref, sel1_ref, heads1) + b_gat1_ref[...]

    # GATConv 2 (heads=2, concat=False -> mean over heads + bias)
    h2 = jnp.dot(g1.astype(bf16), w_gat2_ref[...], preferred_element_type=f32)
    g2 = gat_layer(h2, a_src2_ref, a_dst2_ref, sel2_ref, heads2)
    acc = g2[:, 0:H]
    for hd in range(1, heads2):
        acc = acc + g2[:, hd * H:(hd + 1) * H]
    gnn_embed = acc * (1.0 / heads2) + b_gat2_ref[...]                 # (Bp, H)

    # ---- gate: Linear(3H->H)+ReLU+Linear(H->3)+Softmax (3 padded to 128) ----
    concat = jnp.concatenate([num_embed, image_embed, gnn_embed], axis=1)
    g = jnp.maximum(jnp.dot(concat.astype(bf16), wg1_ref[...],
                            preferred_element_type=f32) + bg1_ref[...], 0.0)
    gl = (jnp.dot(g.astype(bf16), wg2_ref[...], preferred_element_type=f32)
          + bg2_ref[...])                       # padded lanes carry -1e30 bias
    gl = gl - jnp.max(gl, axis=1, keepdims=True)
    gw = jnp.exp(gl)
    gw = gw / jnp.sum(gw, axis=1, keepdims=True)

    # ---- modality fusion -----------------------------------------------------
    z = gw[:, 0:1] * num_embed + gw[:, 1:2] * image_embed + gw[:, 2:3] * gnn_embed

    # ---- classifier (dropout = identity in eval mode) + softmax -------------
    h1c = jnp.maximum(jnp.dot(z.astype(bf16), wc1_ref[...],
                              preferred_element_type=f32) + bc1_ref[...], 0.0)
    h2c = jnp.maximum(jnp.dot(h1c.astype(bf16), wc2_ref[...],
                              preferred_element_type=f32) + bc2_ref[...], 0.0)
    lo = (jnp.dot(h2c.astype(bf16), wc3_ref[...], preferred_element_type=f32)
          + bc3_ref[...])                       # padded class lanes carry -1e30 bias
    lo = lo - jnp.max(lo, axis=1, keepdims=True)
    pcls = jnp.exp(lo)
    o_ref[...] = (pcls / jnp.sum(pcls, axis=1, keepdims=True)).astype(o_ref.dtype)


# ----------------------------------------------------------------------------
# Parameter construction (deterministic, synthetic, pre-padded for the kernel).
# ----------------------------------------------------------------------------
def _att_rows(a, heads, dim, rows=8):
    # (heads, dim) -> (rows, heads*dim): row hd carries a[hd] in its lane block.
    m = jnp.zeros((rows, heads * dim), jnp.float32)
    for hd in range(heads):
        m = m.at[hd, hd * dim:(hd + 1) * dim].set(a[hd])
    return m


def _att_cols(a, heads, dim, cols=8):
    # (heads, dim) -> (heads*dim, cols): column hd carries a[hd] in its sublane block.
    m = jnp.zeros((heads * dim, cols), jnp.float32)
    for hd in range(heads):
        m = m.at[hd * dim:(hd + 1) * dim, hd].set(a[hd])
    return m


def init_params(key, num_input_features, image_embed_dim, gnn_embed_dim,
                hidden_dim, num_classes, img_flat_dim):
    def nrm(k, shape, scale=0.1):
        return scale * jax.random.normal(k, shape, dtype=jnp.float32)

    keys = jax.random.split(key, 24)
    H = hidden_dim
    bf = jnp.bfloat16
    cls_pad = _round_up(num_classes, 128)
    gate_pad = 128

    # ViT stand-in: 1000 -> 1024 lane padding with zero columns/rows.
    w_vit = jnp.zeros((img_flat_dim, VIT_OUT_PAD), jnp.float32)
    w_vit = w_vit.at[:, :VIT_OUT].set(nrm(keys[4], (img_flat_dim, VIT_OUT), 0.02))
    b_vit = jnp.zeros((1, VIT_OUT_PAD), jnp.float32)
    b_vit = b_vit.at[:, :VIT_OUT].set(nrm(keys[5], (1, VIT_OUT)))
    w_img_fc = jnp.zeros((VIT_OUT_PAD, image_embed_dim), jnp.float32)
    w_img_fc = w_img_fc.at[:VIT_OUT, :].set(nrm(keys[6], (VIT_OUT, image_embed_dim), 0.05))

    # Gate Linear(H->3): lane-pad 3 -> 128; padded bias lanes = -1e30 (softmax mask).
    w_g2 = jnp.zeros((H, gate_pad), jnp.float32).at[:, :3].set(nrm(keys[18], (H, 3)))
    b_g2 = jnp.full((1, gate_pad), -1e30, jnp.float32).at[:, :3].set(nrm(keys[19], (1, 3)))

    # Classifier final layer: class dim padded to 128; padded bias lanes = -1e30.
    w_c3 = jnp.zeros((128, cls_pad), jnp.float32)
    w_c3 = w_c3.at[:, :num_classes].set(nrm(keys[22], (128, num_classes)))
    b_c3 = jnp.full((1, cls_pad), -1e30, jnp.float32).at[:, :num_classes].set(0.0)

    a_src1 = nrm(keys[9], (4, H));  a_dst1 = nrm(keys[10], (4, H))
    a_src2 = nrm(keys[13], (2, H)); a_dst2 = nrm(keys[14], (2, H))

    return {
        # ContiFormer stand-in + num_fc (kept f32: tiny)
        "W_num_enc": nrm(keys[0], (num_input_features, H)),
        "b_num_enc": nrm(keys[1], (1, H)),
        "W_num_fc": nrm(keys[2], (H, H)),
        "b_num_fc": nrm(keys[3], (1, H)),
        # ViT stand-in + image_fc (bf16 MXU operands -> half the weight DMA)
        "W_vit": w_vit.astype(bf),
        "b_vit": b_vit,
        "W_img_fc": w_img_fc.astype(bf),
        "b_img_fc": nrm(keys[7], (1, image_embed_dim)),
        # GATConv(gnn_embed_dim -> H, heads=4, concat=True)
        "W_gat1": nrm(keys[8], (gnn_embed_dim, 4 * H)).astype(bf),
        "A_src1": _att_rows(a_src1, 4, H),
        "A_dst1": _att_cols(a_dst1, 4, H),
        "b_gat1": nrm(keys[11], (1, 4 * H)),
        # GATConv(4H -> H, heads=2, concat=False)
        "W_gat2": nrm(keys[12], (4 * H, 2 * H)).astype(bf),
        "A_src2": _att_rows(a_src2, 2, H),
        "A_dst2": _att_cols(a_dst2, 2, H),
        "b_gat2": nrm(keys[15], (1, H)),
        # gate
        "Wg1": nrm(keys[16], (3 * H, H)).astype(bf),
        "bg1": nrm(keys[17], (1, H)),
        "Wg2": w_g2.astype(bf),
        "bg2": b_g2,
        # classifier
        "Wc1": nrm(keys[20], (H, 256)).astype(bf),
        "bc1": jnp.zeros((1, 256), jnp.float32),
        "Wc2": nrm(keys[21], (256, 128)).astype(bf),
        "bc2": jnp.zeros((1, 128), jnp.float32),
        "Wc3": w_c3.astype(bf),
        "bc3": b_c3,
        # alpha parameter exists in the module but is unused in forward()
        "alpha": jnp.array([0.33, 0.33, 0.33], jnp.float32),
    }


# ----------------------------------------------------------------------------
# Full forward pass (wrapper = padding / mask-building glue + one pallas_call).
# ----------------------------------------------------------------------------
def accident_prediction_forward(params, num_input, image_input, edge_index,
                                node_features, *, hidden_dim, num_classes):
    B, T, F = num_input.shape
    N = node_features.shape[0]
    # Fusion requires one graph node per batch element and matching embed dims.
    assert B == N, "fusion assumes node count == batch size"
    assert params["W_img_fc"].shape[1] == hidden_dim
    assert params["b_gat2"].shape[1] == hidden_dim

    H = hidden_dim
    b_pad = _round_up(max(B, 8), 8)
    cls_pad = params["Wc3"].shape[1]

    # Glue: sublane-pad rows to 8, lane-dense / time-major layouts, bf16 inputs.
    num_p = jnp.pad(num_input, ((0, b_pad - B), (0, 0), (0, 0)))
    num_tm = jnp.transpose(num_p, (1, 0, 2)).reshape(T * b_pad, F)     # time-major
    img_flat = jnp.pad(image_input.reshape(B, -1),
                       ((0, b_pad - B), (0, 0))).astype(jnp.bfloat16)
    node_p = jnp.pad(node_features, ((0, b_pad - N), (0, 0))).astype(jnp.bfloat16)

    # Dense adjacency (PyG-style self loops) -> additive attention bias,
    # tiled along sublanes for the 4 heads of layer 1 (layer 2 slices rows).
    src = edge_index[0].astype(jnp.int32)
    dst = edge_index[1].astype(jnp.int32)
    adj = jnp.eye(b_pad, dtype=bool).at[dst, src].set(True)
    mask_bias = jnp.where(adj, 0.0, -1e30).astype(jnp.float32)
    mask_rep = jnp.tile(mask_bias, (HEADS1, 1))                        # (4*Bp, Bp)

    # Per-head block-diagonal selectors for the batched aggregation matmul.
    sel1 = jnp.kron(jnp.eye(HEADS1, dtype=jnp.float32),
                    jnp.ones((b_pad, H), jnp.float32))                 # (4*Bp, 4H)
    sel2 = jnp.kron(jnp.eye(HEADS2, dtype=jnp.float32),
                    jnp.ones((b_pad, H), jnp.float32))                 # (2*Bp, 2H)

    # Fold the 1/T time-mean scale into the num_fc weight.
    w_num_fc = params["W_num_fc"] * (1.0 / T)

    tensor_args = (
        num_tm, img_flat, node_p, mask_rep, sel1, sel2,
        params["W_num_enc"], params["b_num_enc"], w_num_fc, params["b_num_fc"],
        params["W_vit"], params["b_vit"], params["W_img_fc"], params["b_img_fc"],
        params["W_gat1"], params["A_src1"], params["A_dst1"], params["b_gat1"],
        params["W_gat2"], params["A_src2"], params["A_dst2"], params["b_gat2"],
        params["Wg1"], params["bg1"], params["Wg2"], params["bg2"],
        params["Wc1"], params["bc1"], params["Wc2"], params["bc2"],
        params["Wc3"], params["bc3"],
    )

    kernel = functools.partial(
        _fused_forward_kernel,
        b_pad=b_pad, seq_len=T, hidden=H,
        heads1=HEADS1, heads2=HEADS2, neg_slope=NEG_SLOPE)

    out_padded = pl.pallas_call(
        kernel,
        out_shape=jax.ShapeDtypeStruct((b_pad, cls_pad), jnp.float32),
        grid=(1,),
        in_specs=[_full_spec(a.shape) for a in tensor_args],
        out_specs=_full_spec((b_pad, cls_pad)),
        compiler_params=pltpu.CompilerParams(
            dimension_semantics=("arbitrary",),
            vmem_limit_bytes=32 * 1024 * 1024),
    )(*tensor_args)

    return out_padded[:B, :num_classes]


# ----------------------------------------------------------------------------
# Driver
# ----------------------------------------------------------------------------
if __name__ == "__main__":
    B = 4                      # batch == number of graph nodes
    T = 8                      # sequence length for numeric time series
    NUM_FEATS = 8              # num_input_features
    HIDDEN = 32                # hidden_dim
    IMAGE_EMBED = 32           # image_embed_dim (== hidden for fusion)
    GNN_EMBED = 16             # gnn_embed_dim
    NUM_CLASSES = 5
    IMG_C, IMG_H, IMG_W = 3, 16, 16

    key = jax.random.PRNGKey(0)
    k_num, k_img, k_node, k_param = jax.random.split(key, 4)

    num_input = jax.random.normal(k_num, (B, T, NUM_FEATS), dtype=jnp.float32)
    image_input = jax.random.normal(k_img, (B, IMG_C, IMG_H, IMG_W), dtype=jnp.float32)
    node_features = jax.random.normal(k_node, (B, GNN_EMBED), dtype=jnp.float32)
    # bidirectional ring graph over the B nodes: edge_index[0]=src, [1]=dst
    src = jnp.array([0, 1, 2, 3, 1, 2, 3, 0], dtype=jnp.int32)
    dst = jnp.array([1, 2, 3, 0, 0, 1, 2, 3], dtype=jnp.int32)
    edge_index = jnp.stack([src, dst], axis=0)

    params = init_params(k_param, NUM_FEATS, IMAGE_EMBED, GNN_EMBED,
                         HIDDEN, NUM_CLASSES, IMG_C * IMG_H * IMG_W)

    fwd = jax.jit(functools.partial(accident_prediction_forward,
                                    hidden_dim=HIDDEN, num_classes=NUM_CLASSES))
    out = jax.block_until_ready(fwd(params, num_input, image_input,
                                    edge_index, node_features))

    assert out.shape == (B, NUM_CLASSES)
    assert bool(jnp.all(jnp.isfinite(out)))
    # class probabilities sum to ~1 per row (exact-divide softmax)
    assert bool(jnp.allclose(jnp.sum(out, axis=1), 1.0, atol=1e-4))
    print("KERNEL_OK")
</pallas_src>

<mosaic_0001>
module attributes {stable_mosaic.version = 11 : i64} {
  func.func @_fused_forward_kernel(%arg0: i32, %arg1: memref<64x8xf32, #tpu.memory_space<vmem>>, %arg2: memref<8x768xbf16, #tpu.memory_space<vmem>>, %arg3: memref<8x16xbf16, #tpu.memory_space<vmem>>, %arg4: memref<32x8xf32, #tpu.memory_space<vmem>>, %arg5: memref<32x128xf32, #tpu.memory_space<vmem>>, %arg6: memref<16x64xf32, #tpu.memory_space<vmem>>, %arg7: memref<8x32xf32, #tpu.memory_space<vmem>>, %arg8: memref<1x32xf32, #tpu.memory_space<vmem>>, %arg9: memref<32x32xf32, #tpu.memory_space<vmem>>, %arg10: memref<1x32xf32, #tpu.memory_space<vmem>>, %arg11: memref<768x1024xbf16, #tpu.memory_space<vmem>>, %arg12: memref<1x1024xf32, #tpu.memory_space<vmem>>, %arg13: memref<1024x32xbf16, #tpu.memory_space<vmem>>, %arg14: memref<1x32xf32, #tpu.memory_space<vmem>>, %arg15: memref<16x128xbf16, #tpu.memory_space<vmem>>, %arg16: memref<8x128xf32, #tpu.memory_space<vmem>>, %arg17: memref<128x8xf32, #tpu.memory_space<vmem>>, %arg18: memref<1x128xf32, #tpu.memory_space<vmem>>, %arg19: memref<128x64xbf16, #tpu.memory_space<vmem>>, %arg20: memref<8x64xf32, #tpu.memory_space<vmem>>, %arg21: memref<64x8xf32, #tpu.memory_space<vmem>>, %arg22: memref<1x32xf32, #tpu.memory_space<vmem>>, %arg23: memref<96x32xbf16, #tpu.memory_space<vmem>>, %arg24: memref<1x32xf32, #tpu.memory_space<vmem>>, %arg25: memref<32x128xbf16, #tpu.memory_space<vmem>>, %arg26: memref<1x128xf32, #tpu.memory_space<vmem>>, %arg27: memref<32x256xbf16, #tpu.memory_space<vmem>>, %arg28: memref<1x256xf32, #tpu.memory_space<vmem>>, %arg29: memref<256x128xbf16, #tpu.memory_space<vmem>>, %arg30: memref<1x128xf32, #tpu.memory_space<vmem>>, %arg31: memref<128x128xbf16, #tpu.memory_space<vmem>>, %arg32: memref<1x128xf32, #tpu.memory_space<vmem>>, %arg33: memref<8x128xf32, #tpu.memory_space<vmem>>) attributes {dimension_semantics = [#tpu.dimension_semantics<arbitrary>], iteration_bounds = array<i64: 1>, scalar_prefetch = 0 : i64, scratch_operands = 0 : i64, tpu.core_type = #tpu.core_type<tc>, window_params = [{pipeline_mode = #tpu.pipeline_mode<synchronous>, transform_indices = @transform_0, window_bounds = array<i64: 64, 8>}, {pipeline_mode = #tpu.pipeline_mode<synchronous>, transform_indices = @transform_1, window_bounds = array<i64: 8, 768>}, {pipeline_mode = #tpu.pipeline_mode<synchronous>, transform_indices = @transform_2, window_bounds = array<i64: 8, 16>}, {pipeline_mode = #tpu.pipeline_mode<synchronous>, transform_indices = @transform_3, window_bounds = array<i64: 32, 8>}, {pipeline_mode = #tpu.pipeline_mode<synchronous>, transform_indices = @transform_4, window_bounds = array<i64: 32, 128>}, {pipeline_mode = #tpu.pipeline_mode<synchronous>, transform_indices = @transform_5, window_bounds = array<i64: 16, 64>}, {pipeline_mode = #tpu.pipeline_mode<synchronous>, transform_indices = @transform_6, window_bounds = array<i64: 8, 32>}, {pipeline_mode = #tpu.pipeline_mode<synchronous>, transform_indices = @transform_7, window_bounds = array<i64: 1, 32>}, {pipeline_mode = #tpu.pipeline_mode<synchronous>, transform_indices = @transform_8, window_bounds = array<i64: 32, 32>}, {pipeline_mode = #tpu.pipeline_mode<synchronous>, transform_indices = @transform_9, window_bounds = array<i64: 1, 32>}, {pipeline_mode = #tpu.pipeline_mode<synchronous>, transform_indices = @transform_10, window_bounds = array<i64: 768, 1024>}, {pipeline_mode = #tpu.pipeline_mode<synchronous>, transform_indices = @transform_11, window_bounds = array<i64: 1, 1024>}, {pipeline_mode = #tpu.pipeline_mode<synchronous>, transform_indices = @transform_12, window_bounds = array<i64: 1024, 32>}, {pipeline_mode = #tpu.pipeline_mode<synchronous>, transform_indices = @transform_13, window_bounds = array<i64: 1, 32>}, {pipeline_mode = #tpu.pipeline_mode<synchronous>, transform_indices = @transform_14, window_bounds = array<i64: 16, 128>}, {pipeline_mode = #tpu.pipeline_mode<synchronous>, transform_indices = @transform_15, window_bounds = array<i64: 8, 128>}, {pipeline_mode = #tpu.pipeline_mode<synchronous>, transform_indices = @transform_16, window_bounds = array<i64: 128, 8>}, {pipeline_mode = #tpu.pipeline_mode<synchronous>, transform_indices = @transform_17, window_bounds = array<i64: 1, 128>}, {pipeline_mode = #tpu.pipeline_mode<synchronous>, transform_indices = @transform_18, window_bounds = array<i64: 128, 64>}, {pipeline_mode = #tpu.pipeline_mode<synchronous>, transform_indices = @transform_19, window_bounds = array<i64: 8, 64>}, {pipeline_mode = #tpu.pipeline_mode<synchronous>, transform_indices = @transform_20, window_bounds = array<i64: 64, 8>}, {pipeline_mode = #tpu.pipeline_mode<synchronous>, transform_indices = @transform_21, window_bounds = array<i64: 1, 32>}, {pipeline_mode = #tpu.pipeline_mode<synchronous>, transform_indices = @transform_22, window_bounds = array<i64: 96, 32>}, {pipeline_mode = #tpu.pipeline_mode<synchronous>, transform_indices = @transform_23, window_bounds = array<i64: 1, 32>}, {pipeline_mode = #tpu.pipeline_mode<synchronous>, transform_indices = @transform_24, window_bounds = array<i64: 32, 128>}, {pipeline_mode = #tpu.pipeline_mode<synchronous>, transform_indices = @transform_25, window_bounds = array<i64: 1, 128>}, {pipeline_mode = #tpu.pipeline_mode<synchronous>, transform_indices = @transform_26, window_bounds = array<i64: 32, 256>}, {pipeline_mode = #tpu.pipeline_mode<synchronous>, transform_indices = @transform_27, window_bounds = array<i64: 1, 256>}, {pipeline_mode = #tpu.pipeline_mode<synchronous>, transform_indices = @transform_28, window_bounds = array<i64: 256, 128>}, {pipeline_mode = #tpu.pipeline_mode<synchronous>, transform_indices = @transform_29, window_bounds = array<i64: 1, 128>}, {pipeline_mode = #tpu.pipeline_mode<synchronous>, transform_indices = @transform_30, window_bounds = array<i64: 128, 128>}, {pipeline_mode = #tpu.pipeline_mode<synchronous>, transform_indices = @transform_31, window_bounds = array<i64: 1, 128>}, {pipeline_mode = #tpu.pipeline_mode<synchronous>, transform_indices = @transform_32, window_bounds = array<i64: 8, 128>}]} {
    %c0 = arith.constant 0 : index
    %c0_0 = arith.constant 0 : index
    %0 = vector.load %arg1[%c0, %c0_0] : memref<64x8xf32, #tpu.memory_space<vmem>>, vector<64x8xf32>
    %c0_1 = arith.constant 0 : index
    %c0_2 = arith.constant 0 : index
    %1 = vector.load %arg7[%c0_1, %c0_2] : memref<8x32xf32, #tpu.memory_space<vmem>>, vector<8x32xf32>
    %cst = arith.constant dense<0.000000e+00> : vector<64x32xf32>
    %2 = tpu.matmul %0, %1, %cst {dimension_numbers = #tpu.dot_dimension_numbers<[1], [0], [0], [1], [0, 0, 1, 1], [], []>} : vector<64x8xf32>, vector<8x32xf32>, vector<64x32xf32> -> vector<64x32xf32>
    %c0_3 = arith.constant 0 : index
    %c0_4 = arith.constant 0 : index
    %3 = vector.load %arg8[%c0_3, %c0_4] : memref<1x32xf32, #tpu.memory_space<vmem>>, vector<1x32xf32>
    %4 = vector.broadcast %3 : vector<1x32xf32> to vector<64x32xf32>
    %5 = arith.addf %2, %4 : vector<64x32xf32>
    %6 = math.tanh %5 : vector<64x32xf32>
    %7 = vector.shape_cast %6 : vector<64x32xf32> to vector<8x8x32xf32>
    %cst_5 = arith.constant dense<0.000000e+00> : vector<8x32xf32>
    %8 = vector.multi_reduction <add>, %7, %cst_5 [0] : vector<8x8x32xf32> to vector<8x32xf32>
    %c0_6 = arith.constant 0 : index
    %c0_7 = arith.constant 0 : index
    %9 = vector.load %arg9[%c0_6, %c0_7] : memref<32x32xf32, #tpu.memory_space<vmem>>, vector<32x32xf32>
    %cst_8 = arith.constant dense<0.000000e+00> : vector<8x32xf32>
    %10 = tpu.matmul %8, %9, %cst_8 {dimension_numbers = #tpu.dot_dimension_numbers<[1], [0], [0], [1], [0, 0, 1, 1], [], []>} : vector<8x32xf32>, vector<32x32xf32>, vector<8x32xf32> -> vector<8x32xf32>
    %c0_9 = arith.constant 0 : index
    %c0_10 = arith.constant 0 : index
    %11 = vector.load %arg10[%c0_9, %c0_10] : memref<1x32xf32, #tpu.memory_space<vmem>>, vector<1x32xf32>
    %12 = vector.broadcast %11 : vector<1x32xf32> to vector<8x32xf32>
    %13 = arith.addf %10, %12 : vector<8x32xf32>
    %c0_11 = arith.constant 0 : index
    %c0_12 = arith.constant 0 : index
    %14 = vector.load %arg2[%c0_11, %c0_12] : memref<8x768xbf16, #tpu.memory_space<vmem>>, vector<8x768xbf16>
    %c0_13 = arith.constant 0 : index
    %c0_14 = arith.constant 0 : index
    %15 = vector.load %arg11[%c0_13, %c0_14] : memref<768x1024xbf16, #tpu.memory_space<vmem>>, vector<768x1024xbf16>
    %cst_15 = arith.constant dense<0.000000e+00> : vector<8x1024xf32>
    %16 = tpu.matmul %14, %15, %cst_15 {dimension_numbers = #tpu.dot_dimension_numbers<[1], [0], [0], [1], [0, 0, 1, 1], [], []>} : vector<8x768xbf16>, vector<768x1024xbf16>, vector<8x1024xf32> -> vector<8x1024xf32>
    %c0_16 = arith.constant 0 : index
    %c0_17 = arith.constant 0 : index
    %17 = vector.load %arg12[%c0_16, %c0_17] : memref<1x1024xf32, #tpu.memory_space<vmem>>, vector<1x1024xf32>
    %18 = vector.broadcast %17 : vector<1x1024xf32> to vector<8x1024xf32>
    %19 = arith.addf %16, %18 : vector<8x1024xf32>
    %20 = arith.truncf %19 : vector<8x1024xf32> to vector<8x1024xbf16>
    %c0_18 = arith.constant 0 : index
    %c0_19 = arith.constant 0 : index
    %21 = vector.load %arg13[%c0_18, %c0_19] : memref<1024x32xbf16, #tpu.memory_space<vmem>>, vector<1024x32xbf16>
    %cst_20 = arith.constant dense<0.000000e+00> : vector<8x32xf32>
    %22 = tpu.matmul %20, %21, %cst_20 {dimension_numbers = #tpu.dot_dimension_numbers<[1], [0], [0], [1], [0, 0, 1, 1], [], []>} : vector<8x1024xbf16>, vector<1024x32xbf16>, vector<8x32xf32> -> vector<8x32xf32>
    %c0_21 = arith.constant 0 : index
    %c0_22 = arith.constant 0 : index
    %23 = vector.load %arg14[%c0_21, %c0_22] : memref<1x32xf32, #tpu.memory_space<vmem>>, vector<1x32xf32>
    %24 = vector.broadcast %23 : vector<1x32xf32> to vector<8x32xf32>
    %25 = arith.addf %22, %24 : vector<8x32xf32>
    %c0_23 = arith.constant 0 : index
    %c0_24 = arith.constant 0 : index
    %26 = vector.load %arg3[%c0_23, %c0_24] : memref<8x16xbf16, #tpu.memory_space<vmem>>, vector<8x16xbf16>
    %c0_25 = arith.constant 0 : index
    %c0_26 = arith.constant 0 : index
    %27 = vector.load %arg15[%c0_25, %c0_26] : memref<16x128xbf16, #tpu.memory_space<vmem>>, vector<16x128xbf16>
    %cst_27 = arith.constant dense<0.000000e+00> : vector<8x128xf32>
    %28 = tpu.matmul %26, %27, %cst_27 {dimension_numbers = #tpu.dot_dimension_numbers<[1], [0], [0], [1], [0, 0, 1, 1], [], []>} : vector<8x16xbf16>, vector<16x128xbf16>, vector<8x128xf32> -> vector<8x128xf32>
    %c0_28 = arith.constant 0 : index
    %c0_29 = arith.constant 0 : index
    %29 = vector.load %arg17[%c0_28, %c0_29] : memref<128x8xf32, #tpu.memory_space<vmem>>, vector<128x8xf32>
    %cst_30 = arith.constant dense<0.000000e+00> : vector<8x8xf32>
    %30 = tpu.matmul %28, %29, %cst_30 {dimension_numbers = #tpu.dot_dimension_numbers<[1], [0], [0], [1], [0, 0, 1, 1], [], []>} : vector<8x128xf32>, vector<128x8xf32>, vector<8x8xf32> -> vector<8x8xf32>
    %c0_31 = arith.constant 0 : index
    %c0_32 = arith.constant 0 : index
    %31 = vector.load %arg16[%c0_31, %c0_32] : memref<8x128xf32, #tpu.memory_space<vmem>>, vector<8x128xf32>
    "tpu.trace_start"() <{level = 10 : i32, message = "hk,nk->hn"}> : () -> ()
    %cst_33 = arith.constant dense<0.000000e+00> : vector<8x8xf32>
    %32 = tpu.matmul %31, %28, %cst_33 {dimension_numbers = #tpu.dot_dimension_numbers<[1], [1], [0], [0], [0, 0, 1, 0], [], []>} : vector<8x128xf32>, vector<8x128xf32>, vector<8x8xf32> -> vector<8x8xf32>
    "tpu.trace_stop"() : () -> ()
    %33 = vector.extract_strided_slice %30 {offsets = [0, 0], sizes = [8, 1], strides = [1, 1]} : vector<8x8xf32> to vector<8x1xf32>
    %34 = vector.extract_strided_slice %32 {offsets = [0, 0], sizes = [1, 8], strides = [1, 1]} : vector<8x8xf32> to vector<1x8xf32>
    %35 = vector.broadcast %33 : vector<8x1xf32> to vector<8x8xf32>
    %36 = vector.broadcast %34 : vector<1x8xf32> to vector<8x8xf32>
    %37 = arith.addf %35, %36 : vector<8x8xf32>
    %38 = vector.extract_strided_slice %30 {offsets = [0, 1], sizes = [8, 1], strides = [1, 1]} : vector<8x8xf32> to vector<8x1xf32>
    %39 = vector.extract_strided_slice %32 {offsets = [1, 0], sizes = [1, 8], strides = [1, 1]} : vector<8x8xf32> to vector<1x8xf32>
    %40 = vector.broadcast %38 : vector<8x1xf32> to vector<8x8xf32>
    %41 = vector.broadcast %39 : vector<1x8xf32> to vector<8x8xf32>
    %42 = arith.addf %40, %41 : vector<8x8xf32>
    %43 = vector.extract_strided_slice %30 {offsets = [0, 2], sizes = [8, 1], strides = [1, 1]} : vector<8x8xf32> to vector<8x1xf32>
    %44 = vector.extract_strided_slice %32 {offsets = [2, 0], sizes = [1, 8], strides = [1, 1]} : vector<8x8xf32> to vector<1x8xf32>
    %45 = vector.broadcast %43 : vector<8x1xf32> to vector<8x8xf32>
    %46 = vector.broadcast %44 : vector<1x8xf32> to vector<8x8xf32>
    %47 = arith.addf %45, %46 : vector<8x8xf32>
    %48 = vector.extract_strided_slice %30 {offsets = [0, 3], sizes = [8, 1], strides = [1, 1]} : vector<8x8xf32> to vector<8x1xf32>
    %49 = vector.extract_strided_slice %32 {offsets = [3, 0], sizes = [1, 8], strides = [1, 1]} : vector<8x8xf32> to vector<1x8xf32>
    %50 = vector.broadcast %48 : vector<8x1xf32> to vector<8x8xf32>
    %51 = vector.broadcast %49 : vector<1x8xf32> to vector<8x8xf32>
    %52 = arith.addf %50, %51 : vector<8x8xf32>
    %53 = tpu.concatenate %37, %42, %47, %52 in 0 : vector<8x8xf32>, vector<8x8xf32>, vector<8x8xf32>, vector<8x8xf32> -> vector<32x8xf32>
    %cst_34 = arith.constant 0.000000e+00 : f32
    %54 = vector.broadcast %cst_34 : f32 to vector<32x8xf32>
    %55 = arith.cmpf ogt, %53, %54 : vector<32x8xf32>
    %cst_35 = arith.constant 2.000000e-01 : f32
    %56 = vector.broadcast %cst_35 : f32 to vector<32x8xf32>
    %57 = arith.mulf %56, %53 : vector<32x8xf32>
    %58 = arith.select %55, %53, %57 : vector<32x8xi1>, vector<32x8xf32>
    %c0_36 = arith.constant 0 : index
    %c0_37 = arith.constant 0 : index
    %59 = vector.load %arg4[%c0_36, %c0_37] : memref<32x8xf32, #tpu.memory_space<vmem>>, vector<32x8xf32>
    %60 = arith.addf %58, %59 : vector<32x8xf32>
    %cst_38 = arith.constant dense<0xFF800000> : vector<32xf32>
    %61 = vector.multi_reduction <maximumf>, %60, %cst_38 [1] : vector<32x8xf32> to vector<32xf32>
    %62 = vector.shape_cast %61 : vector<32xf32> to vector<32x1xf32>
    %63 = vector.broadcast %62 : vector<32x1xf32> to vector<32x8xf32>
    %64 = arith.subf %60, %63 : vector<32x8xf32>
    %65 = math.exp %64 : vector<32x8xf32>
    %cst_39 = arith.constant dense<0.000000e+00> : vector<32xf32>
    %66 = vector.multi_reduction <add>, %65, %cst_39 [1] : vector<32x8xf32> to vector<32xf32>
    %67 = vector.shape_cast %66 : vector<32xf32> to vector<32x1xf32>
    %68 = vector.broadcast %67 : vector<32x1xf32> to vector<32x8xf32>
    %69 = arith.divf %65, %68 : vector<32x8xf32>
    %cst_40 = arith.constant dense<0.000000e+00> : vector<32x128xf32>
    %70 = tpu.matmul %69, %28, %cst_40 {dimension_numbers = #tpu.dot_dimension_numbers<[1], [0], [0], [1], [0, 0, 1, 1], [], []>} : vector<32x8xf32>, vector<8x128xf32>, vector<32x128xf32> -> vector<32x128xf32>
    %c0_41 = arith.constant 0 : index
    %c0_42 = arith.constant 0 : index
    %71 = vector.load %arg5[%c0_41, %c0_42] : memref<32x128xf32, #tpu.memory_space<vmem>>, vector<32x128xf32>
    %72 = arith.mulf %70, %71 : vector<32x128xf32>
    %73 = vector.extract_strided_slice %72 {offsets = [0, 0], sizes = [8, 128], strides = [1, 1]} : vector<32x128xf32> to vector<8x128xf32>
    %74 = vector.extract_strided_slice %72 {offsets = [8, 0], sizes = [8, 128], strides = [1, 1]} : vector<32x128xf32> to vector<8x128xf32>
    %75 = arith.addf %73, %74 : vector<8x128xf32>
    %76 = vector.extract_strided_slice %72 {offsets = [16, 0], sizes = [8, 128], strides = [1, 1]} : vector<32x128xf32> to vector<8x128xf32>
    %77 = arith.addf %75, %76 : vector<8x128xf32>
    %78 = vector.extract_strided_slice %72 {offsets = [24, 0], sizes = [8, 128], strides = [1, 1]} : vector<32x128xf32> to vector<8x128xf32>
    %79 = arith.addf %77, %78 : vector<8x128xf32>
    %c0_43 = arith.constant 0 : index
    %c0_44 = arith.constant 0 : index
    %80 = vector.load %arg18[%c0_43, %c0_44] : memref<1x128xf32, #tpu.memory_space<vmem>>, vector<1x128xf32>
    %81 = vector.broadcast %80 : vector<1x128xf32> to vector<8x128xf32>
    %82 = arith.addf %79, %81 : vector<8x128xf32>
    %83 = arith.truncf %82 : vector<8x128xf32> to vector<8x128xbf16>
    %c0_45 = arith.constant 0 : index
    %c0_46 = arith.constant 0 : index
    %84 = vector.load %arg19[%c0_45, %c0_46] : memref<128x64xbf16, #tpu.memory_space<vmem>>, vector<128x64xbf16>
    %cst_47 = arith.constant dense<0.000000e+00> : vector<8x64xf32>
    %85 = tpu.matmul %83, %84, %cst_47 {dimension_numbers = #tpu.dot_dimension_numbers<[1], [0], [0], [1], [0, 0, 1, 1], [], []>} : vector<8x128xbf16>, vector<128x64xbf16>, vector<8x64xf32> -> vector<8x64xf32>
    %c0_48 = arith.constant 0 : index
    %c0_49 = arith.constant 0 : index
    %86 = vector.load %arg21[%c0_48, %c0_49] : memref<64x8xf32, #tpu.memory_space<vmem>>, vector<64x8xf32>
    %cst_50 = arith.constant dense<0.000000e+00> : vector<8x8xf32>
    %87 = tpu.matmul %85, %86, %cst_50 {dimension_numbers = #tpu.dot_dimension_numbers<[1], [0], [0], [1], [0, 0, 1, 1], [], []>} : vector<8x64xf32>, vector<64x8xf32>, vector<8x8xf32> -> vector<8x8xf32>
    %c0_51 = arith.constant 0 : index
    %c0_52 = arith.constant 0 : index
    %88 = vector.load %arg20[%c0_51, %c0_52] : memref<8x64xf32, #tpu.memory_space<vmem>>, vector<8x64xf32>
    "tpu.trace_start"() <{level = 10 : i32, message = "hk,nk->hn"}> : () -> ()
    %cst_53 = arith.constant dense<0.000000e+00> : vector<8x8xf32>
    %89 = tpu.matmul %88, %85, %cst_53 {dimension_numbers = #tpu.dot_dimension_numbers<[1], [1], [0], [0], [0, 0, 1, 0], [], []>} : vector<8x64xf32>, vector<8x64xf32>, vector<8x8xf32> -> vector<8x8xf32>
    "tpu.trace_stop"() : () -> ()
    %90 = vector.extract_strided_slice %87 {offsets = [0, 0], sizes = [8, 1], strides = [1, 1]} : vector<8x8xf32> to vector<8x1xf32>
    %91 = vector.extract_strided_slice %89 {offsets = [0, 0], sizes = [1, 8], strides = [1, 1]} : vector<8x8xf32> to vector<1x8xf32>
    %92 = vector.broadcast %90 : vector<8x1xf32> to vector<8x8xf32>
    %93 = vector.broadcast %91 : vector<1x8xf32> to vector<8x8xf32>
    %94 = arith.addf %92, %93 : vector<8x8xf32>
    %95 = vector.extract_strided_slice %87 {offsets = [0, 1], sizes = [8, 1], strides = [1, 1]} : vector<8x8xf32> to vector<8x1xf32>
    %96 = vector.extract_strided_slice %89 {offsets = [1, 0], sizes = [1, 8], strides = [1, 1]} : vector<8x8xf32> to vector<1x8xf32>
    %97 = vector.broadcast %95 : vector<8x1xf32> to vector<8x8xf32>
    %98 = vector.broadcast %96 : vector<1x8xf32> to vector<8x8xf32>
    %99 = arith.addf %97, %98 : vector<8x8xf32>
    %100 = tpu.concatenate %94, %99 in 0 : vector<8x8xf32>, vector<8x8xf32> -> vector<16x8xf32>
    %cst_54 = arith.constant 0.000000e+00 : f32
    %101 = vector.broadcast %cst_54 : f32 to vector<16x8xf32>
    %102 = arith.cmpf ogt, %100, %101 : vector<16x8xf32>
    %cst_55 = arith.constant 2.000000e-01 : f32
    %103 = vector.broadcast %cst_55 : f32 to vector<16x8xf32>
    %104 = arith.mulf %103, %100 : vector<16x8xf32>
    %105 = arith.select %102, %100, %104 : vector<16x8xi1>, vector<16x8xf32>
    %c0_56 = arith.constant 0 : index
    %c0_57 = arith.constant 0 : index
    %106 = vector.load %arg4[%c0_56, %c0_57] : memref<32x8xf32, #tpu.memory_space<vmem>>, vector<16x8xf32>
    %107 = arith.addf %105, %106 : vector<16x8xf32>
    %cst_58 = arith.constant dense<0xFF800000> : vector<16xf32>
    %108 = vector.multi_reduction <maximumf>, %107, %cst_58 [1] : vector<16x8xf32> to vector<16xf32>
    %109 = vector.shape_cast %108 : vector<16xf32> to vector<16x1xf32>
    %110 = vector.broadcast %109 : vector<16x1xf32> to vector<16x8xf32>
    %111 = arith.subf %107, %110 : vector<16x8xf32>
    %112 = math.exp %111 : vector<16x8xf32>
    %cst_59 = arith.constant dense<0.000000e+00> : vector<16xf32>
    %113 = vector.multi_reduction <add>, %112, %cst_59 [1] : vector<16x8xf32> to vector<16xf32>
    %114 = vector.shape_cast %113 : vector<16xf32> to vector<16x1xf32>
    %115 = vector.broadcast %114 : vector<16x1xf32> to vector<16x8xf32>
    %116 = arith.divf %112, %115 : vector<16x8xf32>
    %cst_60 = arith.constant dense<0.000000e+00> : vector<16x64xf32>
    %117 = tpu.matmul %116, %85, %cst_60 {dimension_numbers = #tpu.dot_dimension_numbers<[1], [0], [0], [1], [0, 0, 1, 1], [], []>} : vector<16x8xf32>, vector<8x64xf32>, vector<16x64xf32> -> vector<16x64xf32>
    %c0_61 = arith.constant 0 : index
    %c0_62 = arith.constant 0 : index
    %118 = vector.load %arg6[%c0_61, %c0_62] : memref<16x64xf32, #tpu.memory_space<vmem>>, vector<16x64xf32>
    %119 = arith.mulf %117, %118 : vector<16x64xf32>
    %120 = vector.extract_strided_slice %119 {offsets = [0, 0], sizes = [8, 64], strides = [1, 1]} : vector<16x64xf32> to vector<8x64xf32>
    %121 = vector.extract_strided_slice %119 {offsets = [8, 0], sizes = [8, 64], strides = [1, 1]} : vector<16x64xf32> to vector<8x64xf32>
    %122 = arith.addf %120, %121 : vector<8x64xf32>
    %123 = vector.extract_strided_slice %122 {offsets = [0, 0], sizes = [8, 32], strides = [1, 1]} : vector<8x64xf32> to vector<8x32xf32>
    %124 = vector.extract_strided_slice %122 {offsets = [0, 32], sizes = [8, 32], strides = [1, 1]} : vector<8x64xf32> to vector<8x32xf32>
    %125 = arith.addf %123, %124 : vector<8x32xf32>
    %cst_63 = arith.constant 5.000000e-01 : f32
    %126 = vector.broadcast %cst_63 : f32 to vector<8x32xf32>
    %127 = arith.mulf %125, %126 : vector<8x32xf32>
    %c0_64 = arith.constant 0 : index
    %c0_65 = arith.constant 0 : index
    %128 = vector.load %arg22[%c0_64, %c0_65] : memref<1x32xf32, #tpu.memory_space<vmem>>, vector<1x32xf32>
    %129 = vector.broadcast %128 : vector<1x32xf32> to vector<8x32xf32>
    %130 = arith.addf %127, %129 : vector<8x32xf32>
    %131 = tpu.concatenate %13, %25, %130 in 1 : vector<8x32xf32>, vector<8x32xf32>, vector<8x32xf32> -> vector<8x96xf32>
    %132 = arith.truncf %131 : vector<8x96xf32> to vector<8x96xbf16>
    %c0_66 = arith.constant 0 : index
    %c0_67 = arith.constant 0 : index
    %133 = vector.load %arg23[%c0_66, %c0_67] : memref<96x32xbf16, #tpu.memory_space<vmem>>, vector<96x32xbf16>
    %cst_68 = arith.constant dense<0.000000e+00> : vector<8x32xf32>
    %134 = tpu.matmul %132, %133, %cst_68 {dimension_numbers = #tpu.dot_dimension_numbers<[1], [0], [0], [1], [0, 0, 1, 1], [], []>} : vector<8x96xbf16>, vector<96x32xbf16>, vector<8x32xf32> -> vector<8x32xf32>
    %c0_69 = arith.constant 0 : index
    %c0_70 = arith.constant 0 : index
    %135 = vector.load %arg24[%c0_69, %c0_70] : memref<1x32xf32, #tpu.memory_space<vmem>>, vector<1x32xf32>
    %136 = vector.broadcast %135 : vector<1x32xf32> to vector<8x32xf32>
    %137 = arith.addf %134, %136 : vector<8x32xf32>
    %cst_71 = arith.constant 0.000000e+00 : f32
    %138 = vector.broadcast %cst_71 : f32 to vector<8x32xf32>
    %139 = arith.maximumf %137, %138 : vector<8x32xf32>
    %140 = arith.truncf %139 : vector<8x32xf32> to vector<8x32xbf16>
    %c0_72 = arith.constant 0 : index
    %c0_73 = arith.constant 0 : index
    %141 = vector.load %arg25[%c0_72, %c0_73] : memref<32x128xbf16, #tpu.memory_space<vmem>>, vector<32x128xbf16>
    %cst_74 = arith.constant dense<0.000000e+00> : vector<8x128xf32>
    %142 = tpu.matmul %140, %141, %cst_74 {dimension_numbers = #tpu.dot_dimension_numbers<[1], [0], [0], [1], [0, 0, 1, 1], [], []>} : vector<8x32xbf16>, vector<32x128xbf16>, vector<8x128xf32> -> vector<8x128xf32>
    %c0_75 = arith.constant 0 : index
    %c0_76 = arith.constant 0 : index
    %143 = vector.load %arg26[%c0_75, %c0_76] : memref<1x128xf32, #tpu.memory_space<vmem>>, vector<1x128xf32>
    %144 = vector.broadcast %143 : vector<1x128xf32> to vector<8x128xf32>
    %145 = arith.addf %142, %144 : vector<8x128xf32>
    %cst_77 = arith.constant dense<0xFF800000> : vector<8xf32>
    %146 = vector.multi_reduction <maximumf>, %145, %cst_77 [1] : vector<8x128xf32> to vector<8xf32>
    %147 = vector.shape_cast %146 : vector<8xf32> to vector<8x1xf32>
    %148 = vector.broadcast %147 : vector<8x1xf32> to vector<8x128xf32>
    %149 = arith.subf %145, %148 : vector<8x128xf32>
    %150 = math.exp %149 : vector<8x128xf32>
    %cst_78 = arith.constant dense<0.000000e+00> : vector<8xf32>
    %151 = vector.multi_reduction <add>, %150, %cst_78 [1] : vector<8x128xf32> to vector<8xf32>
    %152 = vector.shape_cast %151 : vector<8xf32> to vector<8x1xf32>
    %153 = vector.broadcast %152 : vector<8x1xf32> to vector<8x128xf32>
    %154 = arith.divf %150, %153 : vector<8x128xf32>
    %155 = vector.extract_strided_slice %154 {offsets = [0, 0], sizes = [8, 1], strides = [1, 1]} : vector<8x128xf32> to vector<8x1xf32>
    %156 = vector.broadcast %155 : vector<8x1xf32> to vector<8x32xf32>
    %157 = arith.mulf %156, %13 : vector<8x32xf32>
    %158 = vector.extract_strided_slice %154 {offsets = [0, 1], sizes = [8, 1], strides = [1, 1]} : vector<8x128xf32> to vector<8x1xf32>
    %159 = vector.broadcast %158 : vector<8x1xf32> to vector<8x32xf32>
    %160 = arith.mulf %159, %25 : vector<8x32xf32>
    %161 = arith.addf %157, %160 : vector<8x32xf32>
    %162 = vector.extract_strided_slice %154 {offsets = [0, 2], sizes = [8, 1], strides = [1, 1]} : vector<8x128xf32> to vector<8x1xf32>
    %163 = vector.broadcast %162 : vector<8x1xf32> to vector<8x32xf32>
    %164 = arith.mulf %163, %130 : vector<8x32xf32>
    %165 = arith.addf %161, %164 : vector<8x32xf32>
    %166 = arith.truncf %165 : vector<8x32xf32> to vector<8x32xbf16>
    %c0_79 = arith.constant 0 : index
    %c0_80 = arith.constant 0 : index
    %167 = vector.load %arg27[%c0_79, %c0_80] : memref<32x256xbf16, #tpu.memory_space<vmem>>, vector<32x256xbf16>
    %cst_81 = arith.constant dense<0.000000e+00> : vector<8x256xf32>
    %168 = tpu.matmul %166, %167, %cst_81 {dimension_numbers = #tpu.dot_dimension_numbers<[1], [0], [0], [1], [0, 0, 1, 1], [], []>} : vector<8x32xbf16>, vector<32x256xbf16>, vector<8x256xf32> -> vector<8x256xf32>
    %c0_82 = arith.constant 0 : index
    %c0_83 = arith.constant 0 : index
    %169 = vector.load %arg28[%c0_82, %c0_83] : memref<1x256xf32, #tpu.memory_space<vmem>>, vector<1x256xf32>
    %170 = vector.broadcast %169 : vector<1x256xf32> to vector<8x256xf32>
    %171 = arith.addf %168, %170 : vector<8x256xf32>
    %cst_84 = arith.constant 0.000000e+00 : f32
    %172 = vector.broadcast %cst_84 : f32 to vector<8x256xf32>
    %173 = arith.maximumf %171, %172 : vector<8x256xf32>
    %174 = arith.truncf %173 : vector<8x256xf32> to vector<8x256xbf16>
    %c0_85 = arith.constant 0 : index
    %c0_86 = arith.constant 0 : index
    %175 = vector.load %arg29[%c0_85, %c0_86] : memref<256x128xbf16, #tpu.memory_space<vmem>>, vector<256x128xbf16>
    %cst_87 = arith.constant dense<0.000000e+00> : vector<8x128xf32>
    %176 = tpu.matmul %174, %175, %cst_87 {dimension_numbers = #tpu.dot_dimension_numbers<[1], [0], [0], [1], [0, 0, 1, 1], [], []>} : vector<8x256xbf16>, vector<256x128xbf16>, vector<8x128xf32> -> vector<8x128xf32>
    %c0_88 = arith.constant 0 : index
    %c0_89 = arith.constant 0 : index
    %177 = vector.load %arg30[%c0_88, %c0_89] : memref<1x128xf32, #tpu.memory_space<vmem>>, vector<1x128xf32>
    %178 = vector.broadcast %177 : vector<1x128xf32> to vector<8x128xf32>
    %179 = arith.addf %176, %178 : vector<8x128xf32>
    %cst_90 = arith.constant 0.000000e+00 : f32
    %180 = vector.broadcast %cst_90 : f32 to vector<8x128xf32>
    %181 = arith.maximumf %179, %180 : vector<8x128xf32>
    %182 = arith.truncf %181 : vector<8x128xf32> to vector<8x128xbf16>
    %c0_91 = arith.constant 0 : index
    %c0_92 = arith.constant 0 : index
    %183 = vector.load %arg31[%c0_91, %c0_92] : memref<128x128xbf16, #tpu.memory_space<vmem>>, vector<128x128xbf16>
    %cst_93 = arith.constant dense<0.000000e+00> : vector<8x128xf32>
    %184 = tpu.matmul %182, %183, %cst_93 {dimension_numbers = #tpu.dot_dimension_numbers<[1], [0], [0], [1], [0, 0, 1, 1], [], []>} : vector<8x128xbf16>, vector<128x128xbf16>, vector<8x128xf32> -> vector<8x128xf32>
    %c0_94 = arith.constant 0 : index
    %c0_95 = arith.constant 0 : index
    %185 = vector.load %arg32[%c0_94, %c0_95] : memref<1x128xf32, #tpu.memory_space<vmem>>, vector<1x128xf32>
    %186 = vector.broadcast %185 : vector<1x128xf32> to vector<8x128xf32>
    %187 = arith.addf %184, %186 : vector<8x128xf32>
    %cst_96 = arith.constant dense<0xFF800000> : vector<8xf32>
    %188 = vector.multi_reduction <maximumf>, %187, %cst_96 [1] : vector<8x128xf32> to vector<8xf32>
    %189 = vector.shape_cast %188 : vector<8xf32> to vector<8x1xf32>
    %190 = vector.broadcast %189 : vector<8x1xf32> to vector<8x128xf32>
    %191 = arith.subf %187, %190 : vector<8x128xf32>
    %192 = math.exp %191 : vector<8x128xf32>
    %cst_97 = arith.constant dense<0.000000e+00> : vector<8xf32>
    %193 = vector.multi_reduction <add>, %192, %cst_97 [1] : vector<8x128xf32> to vector<8xf32>
    %194 = vector.shape_cast %193 : vector<8xf32> to vector<8x1xf32>
    %195 = vector.broadcast %194 : vector<8x1xf32> to vector<8x128xf32>
    %196 = arith.divf %192, %195 : vector<8x128xf32>
    %c0_98 = arith.constant 0 : index
    %c0_99 = arith.constant 0 : index
    %197 = vector.load %arg33[%c0_98, %c0_99] : memref<8x128xf32, #tpu.memory_space<vmem>>, vector<8x128xf32>
    tpu.vector_store %arg33[%c0_98, %c0_99], %196 {strides = array<i32>} : memref<8x128xf32, #tpu.memory_space<vmem>>, vector<8x128xf32>,
    return
  }
  func.func @transform_0(%arg0: i32) -> (i32, i32) {
    %c0_i32 = arith.constant 0 : i32
    %c0_i32_0 = arith.constant 0 : i32
    %c0_i32_1 = arith.constant 0 : i32
    return %c0_i32, %c0_i32_0 : i32, i32
  }
  func.func @transform_1(%arg0: i32) -> (i32, i32) {
    %c0_i32 = arith.constant 0 : i32
    %c0_i32_0 = arith.constant 0 : i32
    %c0_i32_1 = arith.constant 0 : i32
    return %c0_i32, %c0_i32_0 : i32, i32
  }
  func.func @transform_2(%arg0: i32) -> (i32, i32) {
    %c0_i32 = arith.constant 0 : i32
    %c0_i32_0 = arith.constant 0 : i32
    %c0_i32_1 = arith.constant 0 : i32
    return %c0_i32, %c0_i32_0 : i32, i32
  }
  func.func @transform_3(%arg0: i32) -> (i32, i32) {
    %c0_i32 = arith.constant 0 : i32
    %c0_i32_0 = arith.constant 0 : i32
    %c0_i32_1 = arith.constant 0 : i32
    return %c0_i32, %c0_i32_0 : i32, i32
  }
  func.func @transform_4(%arg0: i32) -> (i32, i32) {
    %c0_i32 = arith.constant 0 : i32
    %c0_i32_0 = arith.constant 0 : i32
    %c0_i32_1 = arith.constant 0 : i32
    return %c0_i32, %c0_i32_0 : i32, i32
  }
  func.func @transform_5(%arg0: i32) -> (i32, i32) {
    %c0_i32 = arith.constant 0 : i32
    %c0_i32_0 = arith.constant 0 : i32
    %c0_i32_1 = arith.constant 0 : i32
    return %c0_i32, %c0_i32_0 : i32, i32
  }
  func.func @transform_6(%arg0: i32) -> (i32, i32) {
    %c0_i32 = arith.constant 0 : i32
    %c0_i32_0 = arith.constant 0 : i32
    %c0_i32_1 = arith.constant 0 : i32
    return %c0_i32, %c0_i32_0 : i32, i32
  }
  func.func @transform_7(%arg0: i32) -> (i32, i32) {
    %c0_i32 = arith.constant 0 : i32
    %c0_i32_0 = arith.constant 0 : i32
    %c0_i32_1 = arith.constant 0 : i32
    return %c0_i32, %c0_i32_0 : i32, i32
  }
  func.func @transform_8(%arg0: i32) -> (i32, i32) {
    %c0_i32 = arith.constant 0 : i32
    %c0_i32_0 = arith.constant 0 : i32
    %c0_i32_1 = arith.constant 0 : i32
    return %c0_i32, %c0_i32_0 : i32, i32
  }
  func.func @transform_9(%arg0: i32) -> (i32, i32) {
    %c0_i32 = arith.constant 0 : i32
    %c0_i32_0 = arith.constant 0 : i32
    %c0_i32_1 = arith.constant 0 : i32
    return %c0_i32, %c0_i32_0 : i32, i32
  }
  func.func @transform_10(%arg0: i32) -> (i32, i32) {
    %c0_i32 = arith.constant 0 : i32
    %c0_i32_0 = arith.constant 0 : i32
    %c0_i32_1 = arith.constant 0 : i32
    return %c0_i32, %c0_i32_0 : i32, i32
  }
  func.func @transform_11(%arg0: i32) -> (i32, i32) {
    %c0_i32 = arith.constant 0 : i32
    %c0_i32_0 = arith.constant 0 : i32
    %c0_i32_1 = arith.constant 0 : i32
    return %c0_i32, %c0_i32_0 : i32, i32
  }
  func.func @transform_12(%arg0: i32) -> (i32, i32) {
    %c0_i32 = arith.constant 0 : i32
    %c0_i32_0 = arith.constant 0 : i32
    %c0_i32_1 = arith.constant 0 : i32
    return %c0_i32, %c0_i32_0 : i32, i32
  }
  func.func @transform_13(%arg0: i32) -> (i32, i32) {
    %c0_i32 = arith.constant 0 : i32
    %c0_i32_0 = arith.constant 0 : i32
    %c0_i32_1 = arith.constant 0 : i32
    return %c0_i32, %c0_i32_0 : i32, i32
  }
  func.func @transform_14(%arg0: i32) -> (i32, i32) {
    %c0_i32 = arith.constant 0 : i32
    %c0_i32_0 = arith.constant 0 : i32
    %c0_i32_1 = arith.constant 0 : i32
    return %c0_i32, %c0_i32_0 : i32, i32
  }
  func.func @transform_15(%arg0: i32) -> (i32, i32) {
    %c0_i32 = arith.constant 0 : i32
    %c0_i32_0 = arith.constant 0 : i32
    %c0_i32_1 = arith.constant 0 : i32
    return %c0_i32, %c0_i32_0 : i32, i32
  }
  func.func @transform_16(%arg0: i32) -> (i32, i32) {
    %c0_i32 = arith.constant 0 : i32
    %c0_i32_0 = arith.constant 0 : i32
    %c0_i32_1 = arith.constant 0 : i32
    return %c0_i32, %c0_i32_0 : i32, i32
  }
  func.func @transform_17(%arg0: i32) -> (i32, i32) {
    %c0_i32 = arith.constant 0 : i32
    %c0_i32_0 = arith.constant 0 : i32
    %c0_i32_1 = arith.constant 0 : i32
    return %c0_i32, %c0_i32_0 : i32, i32
  }
  func.func @transform_18(%arg0: i32) -> (i32, i32) {
    %c0_i32 = arith.constant 0 : i32
    %c0_i32_0 = arith.constant 0 : i32
    %c0_i32_1 = arith.constant 0 : i32
    return %c0_i32, %c0_i32_0 : i32, i32
  }
  func.func @transform_19(%arg0: i32) -> (i32, i32) {
    %c0_i32 = arith.constant 0 : i32
    %c0_i32_0 = arith.constant 0 : i32
    %c0_i32_1 = arith.constant 0 : i32
    return %c0_i32, %c0_i32_0 : i32, i32
  }
  func.func @transform_20(%arg0: i32) -> (i32, i32) {
    %c0_i32 = arith.constant 0 : i32
    %c0_i32_0 = arith.constant 0 : i32
    %c0_i32_1 = arith.constant 0 : i32
    return %c0_i32, %c0_i32_0 : i32, i32
  }
  func.func @transform_21(%arg0: i32) -> (i32, i32) {
    %c0_i32 = arith.constant 0 : i32
    %c0_i32_0 = arith.constant 0 : i32
    %c0_i32_1 = arith.constant 0 : i32
    return %c0_i32, %c0_i32_0 : i32, i32
  }
  func.func @transform_22(%arg0: i32) -> (i32, i32) {
    %c0_i32 = arith.constant 0 : i32
    %c0_i32_0 = arith.constant 0 : i32
    %c0_i32_1 = arith.constant 0 : i32
    return %c0_i32, %c0_i32_0 : i32, i32
  }
  func.func @transform_23(%arg0: i32) -> (i32, i32) {
    %c0_i32 = arith.constant 0 : i32
    %c0_i32_0 = arith.constant 0 : i32
    %c0_i32_1 = arith.constant 0 : i32
    return %c0_i32, %c0_i32_0 : i32, i32
  }
  func.func @transform_24(%arg0: i32) -> (i32, i32) {
    %c0_i32 = arith.constant 0 : i32
    %c0_i32_0 = arith.constant 0 : i32
    %c0_i32_1 = arith.constant 0 : i32
    return %c0_i32, %c0_i32_0 : i32, i32
  }
  func.func @transform_25(%arg0: i32) -> (i32, i32) {
    %c0_i32 = arith.constant 0 : i32
    %c0_i32_0 = arith.constant 0 : i32
    %c0_i32_1 = arith.constant 0 : i32
    return %c0_i32, %c0_i32_0 : i32, i32
  }
  func.func @transform_26(%arg0: i32) -> (i32, i32) {
    %c0_i32 = arith.constant 0 : i32
    %c0_i32_0 = arith.constant 0 : i32
    %c0_i32_1 = arith.constant 0 : i32
    return %c0_i32, %c0_i32_0 : i32, i32
  }
  func.func @transform_27(%arg0: i32) -> (i32, i32) {
    %c0_i32 = arith.constant 0 : i32
    %c0_i32_0 = arith.constant 0 : i32
    %c0_i32_1 = arith.constant 0 : i32
    return %c0_i32, %c0_i32_0 : i32, i32
  }
  func.func @transform_28(%arg0: i32) -> (i32, i32) {
    %c0_i32 = arith.constant 0 : i32
    %c0_i32_0 = arith.constant 0 : i32
    %c0_i32_1 = arith.constant 0 : i32
    return %c0_i32, %c0_i32_0 : i32, i32
  }
  func.func @transform_29(%arg0: i32) -> (i32, i32) {
    %c0_i32 = arith.constant 0 : i32
    %c0_i32_0 = arith.constant 0 : i32
    %c0_i32_1 = arith.constant 0 : i32
    return %c0_i32, %c0_i32_0 : i32, i32
  }
  func.func @transform_30(%arg0: i32) -> (i32, i32) {
    %c0_i32 = arith.constant 0 : i32
    %c0_i32_0 = arith.constant 0 : i32
    %c0_i32_1 = arith.constant 0 : i32
    return %c0_i32, %c0_i32_0 : i32, i32
  }
  func.func @transform_31(%arg0: i32) -> (i32, i32) {
    %c0_i32 = arith.constant 0 : i32
    %c0_i32_0 = arith.constant 0 : i32
    %c0_i32_1 = arith.constant 0 : i32
    return %c0_i32, %c0_i32_0 : i32, i32
  }
  func.func @transform_32(%arg0: i32) -> (i32, i32) {
    %c0_i32 = arith.constant 0 : i32
    %c0_i32_0 = arith.constant 0 : i32
    %c0_i32_1 = arith.constant 0 : i32
    return %c0_i32, %c0_i32_0 : i32, i32
  }
}

</mosaic_0001>

<llo_original>
// kernel: accident_prediction_forward.1
$region0: #{accident_prediction_forward.1}
  #allocation0 [shape = 'u32[]', space=smem, size = 0x4, offset = 0x4, fixed_abs, tag = 'smem constant byte address 0x4 - core index']
  #allocation1 [shape = 'u32[144,128]{1,0:T(1,128)}', space=vmem, size = 0x12000, scoped, tag = 'internal scratch']
  %s0 = inlined_call_operand.smem [shape: u32[33], index: -1, kind: input, shape index: {}]
  %s1 = sld [smem:[%s0]]
  %s2 = scalar_lea.smem %s0, 1
  %s3 = sld [smem:[%s2]]
  %s4 = scalar_lea.smem %s0, 2
  %s5 = sld [smem:[%s4]]
  %s6 = scalar_lea.smem %s0, 3
  %s7 = sld [smem:[%s6]]
  %s8 = scalar_lea.smem %s0, 4
  %s9 = sld [smem:[%s8]]
  %s10 = scalar_lea.smem %s0, 5
  %s11 = sld [smem:[%s10]]
  %s12 = scalar_lea.smem %s0, 6
  %s13 = sld [smem:[%s12]]
  %s14 = scalar_lea.smem %s0, 7
  %s15 = sld [smem:[%s14]]
  %s16 = scalar_lea.smem %s0, 8
  %s17 = sld [smem:[%s16]]
  %s18 = scalar_lea.smem %s0, 9
  %s19 = sld [smem:[%s18]]
  %s20 = scalar_lea.smem %s0, 10
  %s21 = sld [smem:[%s20]]
  %s22 = scalar_lea.smem %s0, 11
  %s23 = sld [smem:[%s22]]
  %s24 = scalar_lea.smem %s0, 12
  %s25 = sld [smem:[%s24]]
  %s26 = scalar_lea.smem %s0, 13
  %s27 = sld [smem:[%s26]]
  %s28 = scalar_lea.smem %s0, 14
  %s29 = sld [smem:[%s28]]
  %s30 = scalar_lea.smem %s0, 15
  %s31 = sld [smem:[%s30]]
  %s32 = scalar_lea.smem %s0, 16
  %s33 = sld [smem:[%s32]]
  %s34 = scalar_lea.smem %s0, 17
  %s35 = sld [smem:[%s34]]
  %s36 = scalar_lea.smem %s0, 18
  %s37 = sld [smem:[%s36]]
  %s38 = scalar_lea.smem %s0, 19
  %s39 = sld [smem:[%s38]]
  %s40 = scalar_lea.smem %s0, 20
  %s41 = sld [smem:[%s40]]
  %s42 = scalar_lea.smem %s0, 21
  %s43 = sld [smem:[%s42]]
  %s44 = scalar_lea.smem %s0, 22
  %s45 = sld [smem:[%s44]]
  %s46 = scalar_lea.smem %s0, 23
  %s47 = sld [smem:[%s46]]
  %s48 = scalar_lea.smem %s0, 24
  %s49 = sld [smem:[%s48]]
  %s50 = scalar_lea.smem %s0, 25
  %s51 = sld [smem:[%s50]]
  %s52 = scalar_lea.smem %s0, 26
  %s53 = sld [smem:[%s52]]
  %s54 = scalar_lea.smem %s0, 27
  %s55 = sld [smem:[%s54]]
  %s56 = scalar_lea.smem %s0, 28
  %s57 = sld [smem:[%s56]]
  %s58 = scalar_lea.smem %s0, 29
  %s59 = sld [smem:[%s58]]
  %s60 = scalar_lea.smem %s0, 30
  %s61 = sld [smem:[%s60]]
  %s62 = scalar_lea.smem %s0, 31
  %s63 = sld [smem:[%s62]]
  %s64 = scalar_lea.smem %s0, 32
  %s65 = sld [smem:[%s64]]
  %s66 = sld [smem:[#allocation0]]
  $region138: #{accident_prediction_forward.1} parent=0
    _
  %s68 = ssub.s32 1, %s66
  %s69 = scalar_select 0, %s68, %s66
  // Predicated region
  $region2: #{accident_prediction_forward.1} parent=0 // pred_check
    _
  $region3: #{accident_prediction_forward.1} parent=0 // pred_check_branch
    %71 = sbr.rel (0) target = $region5
  $region4: #{accident_prediction_forward.1} parent=0 // pred_region
    _
  $region5: #{accident_prediction_forward.1} parent=0 // pred_fallthru
    _
  // Predicated region
  $region6: #{accident_prediction_forward.1} parent=0 // pred_check
    _
  $region7: #{accident_prediction_forward.1} parent=0 // pred_check_branch
    %73 = sbr.rel (0) target = $region9
  $region8: #{accident_prediction_forward.1} parent=0 // pred_region
    _
  $region9: #{accident_prediction_forward.1} parent=0 // pred_fallthru
    _
  // Predicated region
  $region10: #{accident_prediction_forward.1} parent=0 // pred_check
    _
  $region11: #{accident_prediction_forward.1} parent=0 // pred_check_branch
    %75 = sbr.rel (0) target = $region13
  $region12: #{accident_prediction_forward.1} parent=0 // pred_region
    _
  $region13: #{accident_prediction_forward.1} parent=0 // pred_fallthru
    _
  // Predicated region
  $region14: #{accident_prediction_forward.1} parent=0 // pred_check
    _
  $region15: #{accident_prediction_forward.1} parent=0 // pred_check_branch
    %77 = sbr.rel (0) target = $region17
  $region16: #{accident_prediction_forward.1} parent=0 // pred_region
    _
  $region17: #{accident_prediction_forward.1} parent=0 // pred_fallthru
    _
  // Predicated region
  $region18: #{accident_prediction_forward.1} parent=0 // pred_check
    _
  $region19: #{accident_prediction_forward.1} parent=0 // pred_check_branch
    %79 = sbr.rel (0) target = $region21
  $region20: #{accident_prediction_forward.1} parent=0 // pred_region
    _
  $region21: #{accident_prediction_forward.1} parent=0 // pred_fallthru
    _
  // Predicated region
  $region22: #{accident_prediction_forward.1} parent=0 // pred_check
    _
  $region23: #{accident_prediction_forward.1} parent=0 // pred_check_branch
    %81 = sbr.rel (0) target = $region25
  $region24: #{accident_prediction_forward.1} parent=0 // pred_region
    _
  $region25: #{accident_prediction_forward.1} parent=0 // pred_fallthru
    _
  // Predicated region
  $region26: #{accident_prediction_forward.1} parent=0 // pred_check
    _
  $region27: #{accident_prediction_forward.1} parent=0 // pred_check_branch
    %83 = sbr.rel (0) target = $region29
  $region28: #{accident_prediction_forward.1} parent=0 // pred_region
    _
  $region29: #{accident_prediction_forward.1} parent=0 // pred_fallthru
    _
  // Predicated region
  $region30: #{accident_prediction_forward.1} parent=0 // pred_check
    _
  $region31: #{accident_prediction_forward.1} parent=0 // pred_check_branch
    %85 = sbr.rel (0) target = $region33
  $region32: #{accident_prediction_forward.1} parent=0 // pred_region
    _
  $region33: #{accident_prediction_forward.1} parent=0 // pred_fallthru
    _
  // Predicated region
  $region34: #{accident_prediction_forward.1} parent=0 // pred_check
    _
  $region35: #{accident_prediction_forward.1} parent=0 // pred_check_branch
    %87 = sbr.rel (0) target = $region37
  $region36: #{accident_prediction_forward.1} parent=0 // pred_region
    _
  $region37: #{accident_prediction_forward.1} parent=0 // pred_fallthru
    _
  // Predicated region
  $region38: #{accident_prediction_forward.1} parent=0 // pred_check
    _
  $region39: #{accident_prediction_forward.1} parent=0 // pred_check_branch
    %89 = sbr.rel (0) target = $region41
  $region40: #{accident_prediction_forward.1} parent=0 // pred_region
    _
  $region41: #{accident_prediction_forward.1} parent=0 // pred_fallthru
    _
  // Predicated region
  $region42: #{accident_prediction_forward.1} parent=0 // pred_check
    _
  $region43: #{accident_prediction_forward.1} parent=0 // pred_check_branch
    %91 = sbr.rel (0) target = $region45
  $region44: #{accident_prediction_forward.1} parent=0 // pred_region
    _
  $region45: #{accident_prediction_forward.1} parent=0 // pred_fallthru
    _
  // Predicated region
  $region46: #{accident_prediction_forward.1} parent=0 // pred_check
    _
  $region47: #{accident_prediction_forward.1} parent=0 // pred_check_branch
    %93 = sbr.rel (0) target = $region49
  $region48: #{accident_prediction_forward.1} parent=0 // pred_region
    _
  $region49: #{accident_prediction_forward.1} parent=0 // pred_fallthru
    _
  // Predicated region
  $region50: #{accident_prediction_forward.1} parent=0 // pred_check
    _
  $region51: #{accident_prediction_forward.1} parent=0 // pred_check_branch
    %95 = sbr.rel (0) target = $region53
  $region52: #{accident_prediction_forward.1} parent=0 // pred_region
    _
  $region53: #{accident_prediction_forward.1} parent=0 // pred_fallthru
    _
  // Predicated region
  $region54: #{accident_prediction_forward.1} parent=0 // pred_check
    _
  $region55: #{accident_prediction_forward.1} parent=0 // pred_check_branch
    %97 = sbr.rel (0) target = $region57
  $region56: #{accident_prediction_forward.1} parent=0 // pred_region
    _
  $region57: #{accident_prediction_forward.1} parent=0 // pred_fallthru
    _
  // Predicated region
  $region58: #{accident_prediction_forward.1} parent=0 // pred_check
    _
  $region59: #{accident_prediction_forward.1} parent=0 // pred_check_branch
    %99 = sbr.rel (0) target = $region61
  $region60: #{accident_prediction_forward.1} parent=0 // pred_region
    _
  $region61: #{accident_prediction_forward.1} parent=0 // pred_fallthru
    _
  // Predicated region
  $region62: #{accident_prediction_forward.1} parent=0 // pred_check
    _
  $region63: #{accident_prediction_forward.1} parent=0 // pred_check_branch
    %101 = sbr.rel (0) target = $region65
  $region64: #{accident_prediction_forward.1} parent=0 // pred_region
    _
  $region65: #{accident_prediction_forward.1} parent=0 // pred_fallthru
    _
  // Predicated region
  $region66: #{accident_prediction_forward.1} parent=0 // pred_check
    _
  $region67: #{accident_prediction_forward.1} parent=0 // pred_check_branch
    %103 = sbr.rel (0) target = $region69
  $region68: #{accident_prediction_forward.1} parent=0 // pred_region
    _
  $region69: #{accident_prediction_forward.1} parent=0 // pred_fallthru
    _
  // Predicated region
  $region70: #{accident_prediction_forward.1} parent=0 // pred_check
    _
  $region71: #{accident_prediction_forward.1} parent=0 // pred_check_branch
    %105 = sbr.rel (0) target = $region73
  $region72: #{accident_prediction_forward.1} parent=0 // pred_region
    _
  $region73: #{accident_prediction_forward.1} parent=0 // pred_fallthru
    _
  // Predicated region
  $region74: #{accident_prediction_forward.1} parent=0 // pred_check
    _
  $region75: #{accident_prediction_forward.1} parent=0 // pred_check_branch
    %107 = sbr.rel (0) target = $region77
  $region76: #{accident_prediction_forward.1} parent=0 // pred_region
    _
  $region77: #{accident_prediction_forward.1} parent=0 // pred_fallthru
    _
  // Predicated region
  $region78: #{accident_prediction_forward.1} parent=0 // pred_check
    _
  $region79: #{accident_prediction_forward.1} parent=0 // pred_check_branch
    %109 = sbr.rel (0) target = $region81
  $region80: #{accident_prediction_forward.1} parent=0 // pred_region
    _
  $region81: #{accident_prediction_forward.1} parent=0 // pred_fallthru
    _
  // Predicated region
  $region82: #{accident_prediction_forward.1} parent=0 // pred_check
    _
  $region83: #{accident_prediction_forward.1} parent=0 // pred_check_branch
    %111 = sbr.rel (0) target = $region85
  $region84: #{accident_prediction_forward.1} parent=0 // pred_region
    _
  $region85: #{accident_prediction_forward.1} parent=0 // pred_fallthru
    _
  // Predicated region
  $region86: #{accident_prediction_forward.1} parent=0 // pred_check
    _
  $region87: #{accident_prediction_forward.1} parent=0 // pred_check_branch
    %113 = sbr.rel (0) target = $region89
  $region88: #{accident_prediction_forward.1} parent=0 // pred_region
    _
  $region89: #{accident_prediction_forward.1} parent=0 // pred_fallthru
    _
  // Predicated region
  $region90: #{accident_prediction_forward.1} parent=0 // pred_check
    _
  $region91: #{accident_prediction_forward.1} parent=0 // pred_check_branch
    %115 = sbr.rel (0) target = $region93
  $region92: #{accident_prediction_forward.1} parent=0 // pred_region
    _
  $region93: #{accident_prediction_forward.1} parent=0 // pred_fallthru
    _
  // Predicated region
  $region94: #{accident_prediction_forward.1} parent=0 // pred_check
    _
  $region95: #{accident_prediction_forward.1} parent=0 // pred_check_branch
    %117 = sbr.rel (0) target = $region97
  $region96: #{accident_prediction_forward.1} parent=0 // pred_region
    _
  $region97: #{accident_prediction_forward.1} parent=0 // pred_fallthru
    _
  // Predicated region
  $region98: #{accident_prediction_forward.1} parent=0 // pred_check
    _
  $region99: #{accident_prediction_forward.1} parent=0 // pred_check_branch
    %119 = sbr.rel (0) target = $region101
  $region100: #{accident_prediction_forward.1} parent=0 // pred_region
    _
  $region101: #{accident_prediction_forward.1} parent=0 // pred_fallthru
    _
  // Predicated region
  $region102: #{accident_prediction_forward.1} parent=0 // pred_check
    _
  $region103: #{accident_prediction_forward.1} parent=0 // pred_check_branch
    %121 = sbr.rel (0) target = $region105
  $region104: #{accident_prediction_forward.1} parent=0 // pred_region
    _
  $region105: #{accident_prediction_forward.1} parent=0 // pred_fallthru
    _
  // Predicated region
  $region106: #{accident_prediction_forward.1} parent=0 // pred_check
    _
  $region107: #{accident_prediction_forward.1} parent=0 // pred_check_branch
    %123 = sbr.rel (0) target = $region109
  $region108: #{accident_prediction_forward.1} parent=0 // pred_region
    _
  $region109: #{accident_prediction_forward.1} parent=0 // pred_fallthru
    _
  // Predicated region
  $region110: #{accident_prediction_forward.1} parent=0 // pred_check
    _
  $region111: #{accident_prediction_forward.1} parent=0 // pred_check_branch
    %125 = sbr.rel (0) target = $region113
  $region112: #{accident_prediction_forward.1} parent=0 // pred_region
    _
  $region113: #{accident_prediction_forward.1} parent=0 // pred_fallthru
    _
  // Predicated region
  $region114: #{accident_prediction_forward.1} parent=0 // pred_check
    _
  $region115: #{accident_prediction_forward.1} parent=0 // pred_check_branch
    %127 = sbr.rel (0) target = $region117
  $region116: #{accident_prediction_forward.1} parent=0 // pred_region
    _
  $region117: #{accident_prediction_forward.1} parent=0 // pred_fallthru
    _
  // Predicated region
  $region118: #{accident_prediction_forward.1} parent=0 // pred_check
    _
  $region119: #{accident_prediction_forward.1} parent=0 // pred_check_branch
    %129 = sbr.rel (0) target = $region121
  $region120: #{accident_prediction_forward.1} parent=0 // pred_region
    _
  $region121: #{accident_prediction_forward.1} parent=0 // pred_fallthru
    _
  // Predicated region
  $region122: #{accident_prediction_forward.1} parent=0 // pred_check
    _
  $region123: #{accident_prediction_forward.1} parent=0 // pred_check_branch
    %131 = sbr.rel (0) target = $region125
  $region124: #{accident_prediction_forward.1} parent=0 // pred_region
    _
  $region125: #{accident_prediction_forward.1} parent=0 // pred_fallthru
    _
  // Predicated region
  $region126: #{accident_prediction_forward.1} parent=0 // pred_check
    _
  $region127: #{accident_prediction_forward.1} parent=0 // pred_check_branch
    %133 = sbr.rel (0) target = $region129
  $region128: #{accident_prediction_forward.1} parent=0 // pred_region
    _
  $region129: #{accident_prediction_forward.1} parent=0 // pred_fallthru
    _
  %v135 = vld [vmem:[%s1] sm:$0xff]
  %v136 = vld [vmem:[%s1 + $0x8] sm:$0xff]
  %v137 = vld [vmem:[%s1 + $0x10] sm:$0xff]
  %v138 = vld [vmem:[%s1 + $0x18] sm:$0xff]
  %v139 = vld [vmem:[%s1 + $0x20] sm:$0xff]
  %v140 = vld [vmem:[%s1 + $0x28] sm:$0xff]
  %v141 = vld [vmem:[%s1 + $0x30] sm:$0xff]
  %v142 = vld [vmem:[%s1 + $0x38] sm:$0xff]
  %v143 = vld [vmem:[%s13] sm:$0xff]
  %v144 = vld [vmem:[%s15] sm:$0x1]
  %v146 = vlaneseq
  %v147 = vshrl.u32 %v146, 7
  %v148 = vsub.s32 0, %v147
  %v149 = vrot.slane %v144, %v148
  %vm151 = vcmask 64512
  %v153 = vsel %vm151, %v135, 0
  %v156 = vsel %vm151, %v136, 0
  %v159 = vsel %vm151, %v137, 0
  %v162 = vsel %vm151, %v138, 0
  %v165 = vsel %vm151, %v139, 0
  %v168 = vsel %vm151, %v140, 0
  %v171 = vsel %vm151, %v141, 0
  %v174 = vsel %vm151, %v142, 0
  %176 = vmatprep.subr.mxu0 0.0
  %177 = vmatpush1.msra.mxu0 %v143
  %178 = vmatprep.subr.mxu0 0.0
  %179 = vmatpush1.msra.mxu0 0.0
  %180 = vmatprep.subr.mxu0 0.0
  %181 = vmatpush1.msra.mxu0 0.0
  %182 = vmatprep.subr.mxu0 0.0
  %183 = vmatpush1.msra.mxu0 0.0
  %184 = vmatprep.subr.mxu0 0.0
  %185 = vmatpush1.msra.mxu0 0.0
  %186 = vmatprep.subr.mxu0 0.0
  %187 = vmatpush1.msra.mxu0 0.0
  %188 = vmatprep.subr.mxu0 0.0
  %189 = vmatpush1.msra.mxu0 0.0
  %190 = vmatprep.subr.mxu0 0.0
  %191 = vmatpush1.msra.mxu0 0.0
  %192 = vmatprep.subr.mxu0 0.0
  %193 = vmatpush1.msra.mxu0 0.0
  %194 = vmatprep.subr.mxu0 0.0
  %195 = vmatpush1.msra.mxu0 0.0
  %196 = vmatprep.subr.mxu0 0.0
  %197 = vmatpush1.msra.mxu0 0.0
  %198 = vmatprep.subr.mxu0 0.0
  %199 = vmatpush1.msra.mxu0 0.0
  %200 = vmatprep.subr.mxu0 0.0
  %201 = vmatpush1.msra.mxu0 0.0
  %202 = vmatprep.subr.mxu0 0.0
  %203 = vmatpush1.msra.mxu0 0.0
  %204 = vmatprep.subr.mxu0 0.0
  %205 = vmatpush1.msra.mxu0 0.0
  %206 = vmatprep.subr.mxu0 0.0
  %207 = vmatpush1.msra.mxu0 0.0
  %208 = vmatprep.subr.mxu0 0.0
  %209 = vmatpush1.msra.mxu0 0.0
  %210 = vmatprep.subr.mxu0 0.0
  %211 = vmatpush1.msra.mxu0 0.0
  %212 = vmatprep.subr.mxu0 0.0
  %213 = vmatpush1.msra.mxu0 0.0
  %214 = vmatprep.subr.mxu0 0.0
  %215 = vmatpush1.msra.mxu0 0.0
  %216 = vmatprep.subr.mxu0 0.0
  %217 = vmatpush1.msra.mxu0 0.0
  %218 = vmatprep.subr.mxu0 0.0
  %219 = vmatpush1.msra.mxu0 0.0
  %220 = vmatprep.subr.mxu0 0.0
  %221 = vmatpush1.msra.mxu0 0.0
  %222 = vmatprep.subr.mxu0 0.0
  %223 = vmatpush1.msra.mxu0 0.0
  %224 = vmatprep.subr.mxu0 0.0
  %225 = vmatpush1.msra.mxu0 0.0
  %226 = vmatprep.subr.mxu0 0.0
  %227 = vmatpush1.msra.mxu0 0.0
  %228 = vmatprep.subr.mxu0 0.0
  %229 = vmatpush1.msra.mxu0 0.0
  %230 = vmatprep.subr.mxu0 0.0
  %231 = vmatpush1.msra.mxu0 0.0
  %232 = vmatprep.subr.mxu0 0.0
  %233 = vmatpush1.msra.mxu0 0.0
  %234 = vmatprep.subr.mxu0 0.0
  %235 = vmatpush1.msra.mxu0 0.0
  %236 = vmatprep.subr.mxu0 0.0
  %237 = vmatpush1.msra.mxu0 0.0
  %238 = vmatprep.subr.mxu0 0.0
  %239 = vmatpush1.msra.mxu0 0.0
  %240 = vmatprep.mubr.f32.mxu0 0.0
  %241 = vmatmul.mubr.f32.gmra.mrb[0].mxu0 %v153
  %v242 = vpop.f32.mrb[0].mxu0
  %v243 = vadd.f32 %v149, %v242
  %v244 = vpop.f32.mrb[0].mxu0
  %245 = vmatprep.mubr.f32.mxu0 0.0
  %246 = vmatmul.mubr.f32.gmra.mrb[0].mxu0 %v156
  %v247 = vpop.f32.mrb[0].mxu0
  %v248 = vadd.f32 %v149, %v247
  %v249 = vpop.f32.mrb[0].mxu0
  %250 = vmatprep.mubr.f32.mxu0 0.0
  %251 = vmatmul.mubr.f32.gmra.mrb[0].mxu0 %v159
  %v252 = vpop.f32.mrb[0].mxu0
  %v253 = vadd.f32 %v149, %v252
  %v254 = vpop.f32.mrb[0].mxu0
  %255 = vmatprep.mubr.f32.mxu0 0.0
  %256 = vmatmul.mubr.f32.gmra.mrb[0].mxu0 %v162
  %v257 = vpop.f32.mrb[0].mxu0
  %v258 = vadd.f32 %v149, %v257
  %v259 = vpop.f32.mrb[0].mxu0
  %260 = vmatprep.mubr.f32.mxu0 0.0
  %261 = vmatmul.mubr.f32.gmra.mrb[0].mxu0 %v165
  %v262 = vpop.f32.mrb[0].mxu0
  %v263 = vadd.f32 %v149, %v262
  %v264 = vpop.f32.mrb[0].mxu0
  %265 = vmatprep.mubr.f32.mxu0 0.0
  %266 = vmatmul.mubr.f32.gmra.mrb[0].mxu0 %v168
  %v267 = vpop.f32.mrb[0].mxu0
  %v268 = vadd.f32 %v149, %v267
  %v269 = vpop.f32.mrb[0].mxu0
  %270 = vmatprep.mubr.f32.mxu0 0.0
  %271 = vmatmul.mubr.f32.gmra.mrb[0].mxu0 %v171
  %v272 = vpop.f32.mrb[0].mxu0
  %v273 = vadd.f32 %v149, %v272
  %v274 = vpop.f32.mrb[0].mxu0
  %275 = vmatprep.mubr.f32.mxu0 0.0
  %276 = vmatmul.mubr.f32.gmra.mrb[0].mxu0 %v174
  %v277 = vpop.f32.mrb[0].mxu0
  %v278 = vadd.f32 %v149, %v277
  %v279 = vpop.f32.mrb[0].mxu0
  %280 = vdwg.mxu0
  %v281 = vtanh.pop %v243
  %v282 = vtanh.pop %v248
  %v283 = vtanh.pop %v253
  %v284 = vtanh.pop %v258
  %v285 = vtanh.pop %v263
  %v286 = vtanh.pop %v268
  %v287 = vtanh.pop %v273
  %v288 = vtanh.pop %v278
  %vm289 = vcmask 261120
  %v290 = vsel %vm289, %v281, 0.0
  %v291 = vsel %vm289, %v282, 0.0
  %v292 = vadd.f32 %v290, %v291
  %v293 = vsel %vm289, %v283, 0.0
  %v294 = vadd.f32 %v292, %v293
  %v295 = vsel %vm289, %v284, 0.0
  %v296 = vadd.f32 %v294, %v295
  %v297 = vsel %vm289, %v285, 0.0
  %v298 = vadd.f32 %v296, %v297
  %v299 = vsel %vm289, %v286, 0.0
  %v300 = vadd.f32 %v298, %v299
  %v301 = vsel %vm289, %v287, 0.0
  %v302 = vadd.f32 %v300, %v301
  %v303 = vsel %vm289, %v288, 0.0
  %v304 = vadd.f32 %v302, %v303
  %v305 = vld [vmem:[%s17] sm:$0xff]
  %v306 = vld [vmem:[%s17 + $0x8] sm:$0xff]
  %v307 = vld [vmem:[%s17 + $0x10] sm:$0xff]
  %v308 = vld [vmem:[%s17 + $0x18] sm:$0xff]
  %v309 = vld [vmem:[%s19] sm:$0x1]
  %v311 = vlaneseq
  %v312 = vshrl.u32 %v311, 7
  %v313 = vsub.s32 0, %v312
  %v314 = vrot.slane %v309, %v313
  %v317 = vsel %vm289, %v304, 0
  %319 = vmatprep.subr.mxu0 0.0
  %320 = vmatpush1.msra.mxu0 %v305
  %321 = vmatprep.subr.mxu0 0.0
  %322 = vmatpush1.msra.mxu0 %v306
  %323 = vmatprep.subr.mxu0 0.0
  %324 = vmatpush1.msra.mxu0 %v307
  %325 = vmatprep.subr.mxu0 0.0
  %326 = vmatpush1.msra.mxu0 %v308
  %327 = vmatprep.subr.mxu0 0.0
  %328 = vmatpush1.msra.mxu0 0.0
  %329 = vmatprep.subr.mxu0 0.0
  %330 = vmatpush1.msra.mxu0 0.0
  %331 = vmatprep.subr.mxu0 0.0
  %332 = vmatpush1.msra.mxu0 0.0
  %333 = vmatprep.subr.mxu0 0.0
  %334 = vmatpush1.msra.mxu0 0.0
  %335 = vmatprep.subr.mxu0 0.0
  %336 = vmatpush1.msra.mxu0 0.0
  %337 = vmatprep.subr.mxu0 0.0
  %338 = vmatpush1.msra.mxu0 0.0
  %339 = vmatprep.subr.mxu0 0.0
  %340 = vmatpush1.msra.mxu0 0.0
  %341 = vmatprep.subr.mxu0 0.0
  %342 = vmatpush1.msra.mxu0 0.0
  %343 = vmatprep.subr.mxu0 0.0
  %344 = vmatpush1.msra.mxu0 0.0
  %345 = vmatprep.subr.mxu0 0.0
  %346 = vmatpush1.msra.mxu0 0.0
  %347 = vmatprep.subr.mxu0 0.0
  %348 = vmatpush1.msra.mxu0 0.0
  %349 = vmatprep.subr.mxu0 0.0
  %350 = vmatpush1.msra.mxu0 0.0
  %351 = vmatprep.subr.mxu0 0.0
  %352 = vmatpush1.msra.mxu0 0.0
  %353 = vmatprep.subr.mxu0 0.0
  %354 = vmatpush1.msra.mxu0 0.0
  %355 = vmatprep.subr.mxu0 0.0
  %356 = vmatpush1.msra.mxu0 0.0
  %357 = vmatprep.subr.mxu0 0.0
  %358 = vmatpush1.msra.mxu0 0.0
  %359 = vmatprep.subr.mxu0 0.0
  %360 = vmatpush1.msra.mxu0 0.0
  %361 = vmatprep.subr.mxu0 0.0
  %362 = vmatpush1.msra.mxu0 0.0
  %363 = vmatprep.subr.mxu0 0.0
  %364 = vmatpush1.msra.mxu0 0.0
  %365 = vmatprep.subr.mxu0 0.0
  %366 = vmatpush1.msra.mxu0 0.0
  %367 = vmatprep.subr.mxu0 0.0
  %368 = vmatpush1.msra.mxu0 0.0
  %369 = vmatprep.subr.mxu0 0.0
  %370 = vmatpush1.msra.mxu0 0.0
  %371 = vmatprep.subr.mxu0 0.0
  %372 = vmatpush1.msra.mxu0 0.0
  %373 = vmatprep.subr.mxu0 0.0
  %374 = vmatpush1.msra.mxu0 0.0
  %375 = vmatprep.subr.mxu0 0.0
  %376 = vmatpush1.msra.mxu0 0.0
  %377 = vmatprep.subr.mxu0 0.0
  %378 = vmatpush1.msra.mxu0 0.0
  %379 = vmatprep.subr.mxu0 0.0
  %380 = vmatpush1.msra.mxu0 0.0
  %381 = vmatprep.subr.mxu0 0.0
  %382 = vmatpush1.msra.mxu0 0.0
  %383 = vmatprep.mubr.f32.mxu0 0.0
  %384 = vmatmul.mubr.f32.gmra.mrb[0].mxu0 %v317
  %v385 = vpop.f32.mrb[0].mxu0
  %v386 = vadd.f32 %v314, %v385
  %v387 = vpop.f32.mrb[0].mxu0
  %388 = vdwg.mxu0
  %v389 = vld [vmem:[%s3] sm:$0xff]
  %v390 = vld [vmem:[%s3 + $0x8] sm:$0xff]
  %v391 = vld [vmem:[%s3 + $0x10] sm:$0xff]
  %v392 = vld [vmem:[%s21] sm:$0xff]
  %v393 = vld [vmem:[%s21 + $0x8] sm:$0xff]
  %v394 = vld [vmem:[%s21 + $0x10] sm:$0xff]
  %v395 = vld [vmem:[%s21 + $0x18] sm:$0xff]
  %v396 = vld [vmem:[%s21 + $0x20] sm:$0xff]
  %v397 = vld [vmem:[%s21 + $0x28] sm:$0xff]
  %v398 = vld [vmem:[%s21 + $0x30] sm:$0xff]
  %v399 = vld [vmem:[%s21 + $0x38] sm:$0xff]
  %v400 = vld [vmem:[%s21 + $0x40] sm:$0xff]
  %v401 = vld [vmem:[%s21 + $0x48] sm:$0xff]
  %v402 = vld [vmem:[%s21 + $0x50] sm:$0xff]
  %v403 = vld [vmem:[%s21 + $0x58] sm:$0xff]
  %v404 = vld [vmem:[%s21 + $0x60] sm:$0xff]
  %v405 = vld [vmem:[%s21 + $0x68] sm:$0xff]
  %v406 = vld [vmem:[%s21 + $0x70] sm:$0xff]
  %v407 = vld [vmem:[%s21 + $0x78] sm:$0xff]
  %v408 = vld [vmem:[%s21 + $0x80] sm:$0xff]
  %v409 = vld [vmem:[%s21 + $0x88] sm:$0xff]
  %v410 = vld [vmem:[%s21 + $0x90] sm:$0xff]
  %v411 = vld [vmem:[%s21 + $0x98] sm:$0xff]
  %v412 = vld [vmem:[%s21 + $0xa0] sm:$0xff]
  %v413 = vld [vmem:[%s21 + $0xa8] sm:$0xff]
  %v414 = vld [vmem:[%s21 + $0xb0] sm:$0xff]
  %v415 = vld [vmem:[%s21 + $0xb8] sm:$0xff]
  %v416 = vld [vmem:[%s21 + $0xc0] sm:$0xff]
  %v417 = vld [vmem:[%s21 + $0xc8] sm:$0xff]
  %v418 = vld [vmem:[%s21 + $0xd0] sm:$0xff]
  %v419 = vld [vmem:[%s21 + $0xd8] sm:$0xff]
  %v420 = vld [vmem:[%s21 + $0xe0] sm:$0xff]
  %v421 = vld [vmem:[%s21 + $0xe8] sm:$0xff]
  %v422 = vld [vmem:[%s21 + $0xf0] sm:$0xff]
  %v423 = vld [vmem:[%s21 + $0xf8] sm:$0xff]
  %v424 = vld [vmem:[%s21 + $0x100] sm:$0xff]
  %v425 = vld [vmem:[%s21 + $0x108] sm:$0xff]
  %v426 = vld [vmem:[%s21 + $0x110] sm:$0xff]
  %v427 = vld [vmem:[%s21 + $0x118] sm:$0xff]
  %v428 = vld [vmem:[%s21 + $0x120] sm:$0xff]
  %v429 = vld [vmem:[%s21 + $0x128] sm:$0xff]
  %v430 = vld [vmem:[%s21 + $0x130] sm:$0xff]
  %v431 = vld [vmem:[%s21 + $0x138] sm:$0xff]
  %v432 = vld [vmem:[%s21 + $0x140] sm:$0xff]
  %v433 = vld [vmem:[%s21 + $0x148] sm:$0xff]
  %v434 = vld [vmem:[%s21 + $0x150] sm:$0xff]
  %v435 = vld [vmem:[%s21 + $0x158] sm:$0xff]
  %v436 = vld [vmem:[%s21 + $0x160] sm:$0xff]
  %v437 = vld [vmem:[%s21 + $0x168] sm:$0xff]
  %v438 = vld [vmem:[%s21 + $0x170] sm:$0xff]
  %v439 = vld [vmem:[%s21 + $0x178] sm:$0xff]
  %v440 = vld [vmem:[%s21 + $0x180] sm:$0xff]
  %v441 = vld [vmem:[%s21 + $0x188] sm:$0xff]
  %v442 = vld [vmem:[%s21 + $0x190] sm:$0xff]
  %v443 = vld [vmem:[%s21 + $0x198] sm:$0xff]
  %v444 = vld [vmem:[%s21 + $0x1a0] sm:$0xff]
  %v445 = vld [vmem:[%s21 + $0x1a8] sm:$0xff]
  %v446 = vld [vmem:[%s21 + $0x1b0] sm:$0xff]
  %v447 = vld [vmem:[%s21 + $0x1b8] sm:$0xff]
  %v448 = vld [vmem:[%s21 + $0x1c0] sm:$0xff]
  %v449 = vld [vmem:[%s21 + $0x1c8] sm:$0xff]
  %v450 = vld [vmem:[%s21 + $0x1d0] sm:$0xff]
  %v451 = vld [vmem:[%s21 + $0x1d8] sm:$0xff]
  %v452 = vld [vmem:[%s21 + $0x1e0] sm:$0xff]
  %v453 = vld [vmem:[%s21 + $0x1e8] sm:$0xff]
  %v454 = vld [vmem:[%s21 + $0x1f0] sm:$0xff]
  %v455 = vld [vmem:[%s21 + $0x1f8] sm:$0xff]
  %v456 = vld [vmem:[%s21 + $0x200] sm:$0xff]
  %v457 = vld [vmem:[%s21 + $0x208] sm:$0xff]
  %v458 = vld [vmem:[%s21 + $0x210] sm:$0xff]
  %v459 = vld [vmem:[%s21 + $0x218] sm:$0xff]
  %v460 = vld [vmem:[%s21 + $0x220] sm:$0xff]
  %v461 = vld [vmem:[%s21 + $0x228] sm:$0xff]
  %v462 = vld [vmem:[%s21 + $0x230] sm:$0xff]
  %v463 = vld [vmem:[%s21 + $0x238] sm:$0xff]
  %v464 = vld [vmem:[%s21 + $0x240] sm:$0xff]
  %v465 = vld [vmem:[%s21 + $0x248] sm:$0xff]
  %v466 = vld [vmem:[%s21 + $0x250] sm:$0xff]
  %v467 = vld [vmem:[%s21 + $0x258] sm:$0xff]
  %v468 = vld [vmem:[%s21 + $0x260] sm:$0xff]
  %v469 = vld [vmem:[%s21 + $0x268] sm:$0xff]
  %v470 = vld [vmem:[%s21 + $0x270] sm:$0xff]
  %v471 = vld [vmem:[%s21 + $0x278] sm:$0xff]
  %v472 = vld [vmem:[%s21 + $0x280] sm:$0xff]
  %v473 = vld [vmem:[%s21 + $0x288] sm:$0xff]
  %v474 = vld [vmem:[%s21 + $0x290] sm:$0xff]
  %v475 = vld [vmem:[%s21 + $0x298] sm:$0xff]
  %v476 = vld [vmem:[%s21 + $0x2a0] sm:$0xff]
  %v477 = vld [vmem:[%s21 + $0x2a8] sm:$0xff]
  %v478 = vld [vmem:[%s21 + $0x2b0] sm:$0xff]
  %v479 = vld [vmem:[%s21 + $0x2b8] sm:$0xff]
  %v480 = vld [vmem:[%s21 + $0x2c0] sm:$0xff]
  %v481 = vld [vmem:[%s21 + $0x2c8] sm:$0xff]
  %v482 = vld [vmem:[%s21 + $0x2d0] sm:$0xff]
  %v483 = vld [vmem:[%s21 + $0x2d8] sm:$0xff]
  %v484 = vld [vmem:[%s21 + $0x2e0] sm:$0xff]
  %v485 = vld [vmem:[%s21 + $0x2e8] sm:$0xff]
  %v486 = vld [vmem:[%s21 + $0x2f0] sm:$0xff]
  %v487 = vld [vmem:[%s21 + $0x2f8] sm:$0xff]
  %v488 = vld [vmem:[%s21 + $0x300] sm:$0xff]
  %v489 = vld [vmem:[%s21 + $0x308] sm:$0xff]
  %v490 = vld [vmem:[%s21 + $0x310] sm:$0xff]
  %v491 = vld [vmem:[%s21 + $0x318] sm:$0xff]
  %v492 = vld [vmem:[%s21 + $0x320] sm:$0xff]
  %v493 = vld [vmem:[%s21 + $0x328] sm:$0xff]
  %v494 = vld [vmem:[%s21 + $0x330] sm:$0xff]
  %v495 = vld [vmem:[%s21 + $0x338] sm:$0xff]
  %v496 = vld [vmem:[%s21 + $0x340] sm:$0xff]
  %v497 = vld [vmem:[%s21 + $0x348] sm:$0xff]
  %v498 = vld [vmem:[%s21 + $0x350] sm:$0xff]
  %v499 = vld [vmem:[%s21 + $0x358] sm:$0xff]
  %v500 = vld [vmem:[%s21 + $0x360] sm:$0xff]
  %v501 = vld [vmem:[%s21 + $0x368] sm:$0xff]
  %v502 = vld [vmem:[%s21 + $0x370] sm:$0xff]
  %v503 = vld [vmem:[%s21 + $0x378] sm:$0xff]
  %v504 = vld [vmem:[%s21 + $0x380] sm:$0xff]
  %v505 = vld [vmem:[%s21 + $0x388] sm:$0xff]
  %v506 = vld [vmem:[%s21 + $0x390] sm:$0xff]
  %v507 = vld [vmem:[%s21 + $0x398] sm:$0xff]
  %v508 = vld [vmem:[%s21 + $0x3a0] sm:$0xff]
  %v509 = vld [vmem:[%s21 + $0x3a8] sm:$0xff]
  %v510 = vld [vmem:[%s21 + $0x3b0] sm:$0xff]
  %v511 = vld [vmem:[%s21 + $0x3b8] sm:$0xff]
  %v512 = vld [vmem:[%s21 + $0x3c0] sm:$0xff]
  %v513 = vld [vmem:[%s21 + $0x3c8] sm:$0xff]
  %v514 = vld [vmem:[%s21 + $0x3d0] sm:$0xff]
  %v515 = vld [vmem:[%s21 + $0x3d8] sm:$0xff]
  %v516 = vld [vmem:[%s21 + $0x3e0] sm:$0xff]
  %v517 = vld [vmem:[%s21 + $0x3e8] sm:$0xff]
  %v518 = vld [vmem:[%s21 + $0x3f0] sm:$0xff]
  %v519 = vld [vmem:[%s21 + $0x3f8] sm:$0xff]
  %v520 = vld [vmem:[%s21 + $0x400] sm:$0xff]
  %v521 = vld [vmem:[%s21 + $0x408] sm:$0xff]
  %v522 = vld [vmem:[%s21 + $0x410] sm:$0xff]
  %v523 = vld [vmem:[%s21 + $0x418] sm:$0xff]
  %v524 = vld [vmem:[%s21 + $0x420] sm:$0xff]
  %v525 = vld [vmem:[%s21 + $0x428] sm:$0xff]
  %v526 = vld [vmem:[%s21 + $0x430] sm:$0xff]
  %v527 = vld [vmem:[%s21 + $0x438] sm:$0xff]
  %v528 = vld [vmem:[%s21 + $0x440] sm:$0xff]
  %v529 = vld [vmem:[%s21 + $0x448] sm:$0xff]
  %v530 = vld [vmem:[%s21 + $0x450] sm:$0xff]
  %v531 = vld [vmem:[%s21 + $0x458] sm:$0xff]
  %v532 = vld [vmem:[%s21 + $0x460] sm:$0xff]
  %v533 = vld [vmem:[%s21 + $0x468] sm:$0xff]
  %v534 = vld [vmem:[%s21 + $0x470] sm:$0xff]
  %v535 = vld [vmem:[%s21 + $0x478] sm:$0xff]
  %v536 = vld [vmem:[%s21 + $0x480] sm:$0xff]
  %v537 = vld [vmem:[%s21 + $0x488] sm:$0xff]
  %v538 = vld [vmem:[%s21 + $0x490] sm:$0xff]
  %v539 = vld [vmem:[%s21 + $0x498] sm:$0xff]
  %v540 = vld [vmem:[%s21 + $0x4a0] sm:$0xff]
  %v541 = vld [vmem:[%s21 + $0x4a8] sm:$0xff]
  %v542 = vld [vmem:[%s21 + $0x4b0] sm:$0xff]
  %v543 = vld [vmem:[%s21 + $0x4b8] sm:$0xff]
  %v544 = vld [vmem:[%s21 + $0x4c0] sm:$0xff]
  %v545 = vld [vmem:[%s21 + $0x4c8] sm:$0xff]
  %v546 = vld [vmem:[%s21 + $0x4d0] sm:$0xff]
  %v547 = vld [vmem:[%s21 + $0x4d8] sm:$0xff]
  %v548 = vld [vmem:[%s21 + $0x4e0] sm:$0xff]
  %v549 = vld [vmem:[%s21 + $0x4e8] sm:$0xff]
  %v550 = vld [vmem:[%s21 + $0x4f0] sm:$0xff]
  %v551 = vld [vmem:[%s21 + $0x4f8] sm:$0xff]
  %v552 = vld [vmem:[%s21 + $0x500] sm:$0xff]
  %v553 = vld [vmem:[%s21 + $0x508] sm:$0xff]
  %v554 = vld [vmem:[%s21 + $0x510] sm:$0xff]
  %v555 = vld [vmem:[%s21 + $0x518] sm:$0xff]
  %v556 = vld [vmem:[%s21 + $0x520] sm:$0xff]
  %v557 = vld [vmem:[%s21 + $0x528] sm:$0xff]
  %v558 = vld [vmem:[%s21 + $0x530] sm:$0xff]
  %v559 = vld [vmem:[%s21 + $0x538] sm:$0xff]
  %v560 = vld [vmem:[%s21 + $0x540] sm:$0xff]
  %v561 = vld [vmem:[%s21 + $0x548] sm:$0xff]
  %v562 = vld [vmem:[%s21 + $0x550] sm:$0xff]
  %v563 = vld [vmem:[%s21 + $0x558] sm:$0xff]
  %v564 = vld [vmem:[%s21 + $0x560] sm:$0xff]
  %v565 = vld [vmem:[%s21 + $0x568] sm:$0xff]
  %v566 = vld [vmem:[%s21 + $0x570] sm:$0xff]
  %v567 = vld [vmem:[%s21 + $0x578] sm:$0xff]
  %v568 = vld [vmem:[%s21 + $0x580] sm:$0xff]
  %v569 = vld [vmem:[%s21 + $0x588] sm:$0xff]
  %v570 = vld [vmem:[%s21 + $0x590] sm:$0xff]
  %v571 = vld [vmem:[%s21 + $0x598] sm:$0xff]
  %v572 = vld [vmem:[%s21 + $0x5a0] sm:$0xff]
  %v573 = vld [vmem:[%s21 + $0x5a8] sm:$0xff]
  %v574 = vld [vmem:[%s21 + $0x5b0] sm:$0xff]
  %v575 = vld [vmem:[%s21 + $0x5b8] sm:$0xff]
  %v576 = vld [vmem:[%s21 + $0x5c0] sm:$0xff]
  %v577 = vld [vmem:[%s21 + $0x5c8] sm:$0xff]
  %v578 = vld [vmem:[%s21 + $0x5d0] sm:$0xff]
  %v579 = vld [vmem:[%s21 + $0x5d8] sm:$0xff]
  %v580 = vld [vmem:[%s21 + $0x5e0] sm:$0xff]
  %v581 = vld [vmem:[%s21 + $0x5e8] sm:$0xff]
  %v582 = vld [vmem:[%s21 + $0x5f0] sm:$0xff]
  %v583 = vld [vmem:[%s21 + $0x5f8] sm:$0xff]
  %v584 = vld [vmem:[%s21 + $0x600] sm:$0xff]
  %v585 = vld [vmem:[%s21 + $0x608] sm:$0xff]
  %v586 = vld [vmem:[%s21 + $0x610] sm:$0xff]
  %v587 = vld [vmem:[%s21 + $0x618] sm:$0xff]
  %v588 = vld [vmem:[%s21 + $0x620] sm:$0xff]
  %v589 = vld [vmem:[%s21 + $0x628] sm:$0xff]
  %v590 = vld [vmem:[%s21 + $0x630] sm:$0xff]
  %v591 = vld [vmem:[%s21 + $0x638] sm:$0xff]
  %v592 = vld [vmem:[%s21 + $0x640] sm:$0xff]
  %v593 = vld [vmem:[%s21 + $0x648] sm:$0xff]
  %v594 = vld [vmem:[%s21 + $0x650] sm:$0xff]
  %v595 = vld [vmem:[%s21 + $0x658] sm:$0xff]
  %v596 = vld [vmem:[%s21 + $0x660] sm:$0xff]
  %v597 = vld [vmem:[%s21 + $0x668] sm:$0xff]
  %v598 = vld [vmem:[%s21 + $0x670] sm:$0xff]
  %v599 = vld [vmem:[%s21 + $0x678] sm:$0xff]
  %v600 = vld [vmem:[%s21 + $0x680] sm:$0xff]
  %v601 = vld [vmem:[%s21 + $0x688] sm:$0xff]
  %v602 = vld [vmem:[%s21 + $0x690] sm:$0xff]
  %v603 = vld [vmem:[%s21 + $0x698] sm:$0xff]
  %v604 = vld [vmem:[%s21 + $0x6a0] sm:$0xff]
  %v605 = vld [vmem:[%s21 + $0x6a8] sm:$0xff]
  %v606 = vld [vmem:[%s21 + $0x6b0] sm:$0xff]
  %v607 = vld [vmem:[%s21 + $0x6b8] sm:$0xff]
  %v608 = vld [vmem:[%s21 + $0x6c0] sm:$0xff]
  %v609 = vld [vmem:[%s21 + $0x6c8] sm:$0xff]
  %v610 = vld [vmem:[%s21 + $0x6d0] sm:$0xff]
  %v611 = vld [vmem:[%s21 + $0x6d8] sm:$0xff]
  %v612 = vld [vmem:[%s21 + $0x6e0] sm:$0xff]
  %v613 = vld [vmem:[%s21 + $0x6e8] sm:$0xff]
  %v614 = vld [vmem:[%s21 + $0x6f0] sm:$0xff]
  %v615 = vld [vmem:[%s21 + $0x6f8] sm:$0xff]
  %v616 = vld [vmem:[%s21 + $0x700] sm:$0xff]
  %v617 = vld [vmem:[%s21 + $0x708] sm:$0xff]
  %v618 = vld [vmem:[%s21 + $0x710] sm:$0xff]
  %v619 = vld [vmem:[%s21 + $0x718] sm:$0xff]
  %v620 = vld [vmem:[%s21 + $0x720] sm:$0xff]
  %v621 = vld [vmem:[%s21 + $0x728] sm:$0xff]
  %v622 = vld [vmem:[%s21 + $0x730] sm:$0xff]
  %v623 = vld [vmem:[%s21 + $0x738] sm:$0xff]
  %v624 = vld [vmem:[%s21 + $0x740] sm:$0xff]
  %v625 = vld [vmem:[%s21 + $0x748] sm:$0xff]
  %v626 = vld [vmem:[%s21 + $0x750] sm:$0xff]
  %v627 = vld [vmem:[%s21 + $0x758] sm:$0xff]
  %v628 = vld [vmem:[%s21 + $0x760] sm:$0xff]
  %v629 = vld [vmem:[%s21 + $0x768] sm:$0xff]
  %v630 = vld [vmem:[%s21 + $0x770] sm:$0xff]
  %v631 = vld [vmem:[%s21 + $0x778] sm:$0xff]
  %v632 = vld [vmem:[%s21 + $0x780] sm:$0xff]
  %v633 = vld [vmem:[%s21 + $0x788] sm:$0xff]
  %v634 = vld [vmem:[%s21 + $0x790] sm:$0xff]
  %v635 = vld [vmem:[%s21 + $0x798] sm:$0xff]
  %v636 = vld [vmem:[%s21 + $0x7a0] sm:$0xff]
  %v637 = vld [vmem:[%s21 + $0x7a8] sm:$0xff]
  %v638 = vld [vmem:[%s21 + $0x7b0] sm:$0xff]
  %v639 = vld [vmem:[%s21 + $0x7b8] sm:$0xff]
  %v640 = vld [vmem:[%s21 + $0x7c0] sm:$0xff]
  %v641 = vld [vmem:[%s21 + $0x7c8] sm:$0xff]
  %v642 = vld [vmem:[%s21 + $0x7d0] sm:$0xff]
  %v643 = vld [vmem:[%s21 + $0x7d8] sm:$0xff]
  %v644 = vld [vmem:[%s21 + $0x7e0] sm:$0xff]
  %v645 = vld [vmem:[%s21 + $0x7e8] sm:$0xff]
  %v646 = vld [vmem:[%s21 + $0x7f0] sm:$0xff]
  %v647 = vld [vmem:[%s21 + $0x7f8] sm:$0xff]
  %v648 = vld [vmem:[%s21 + $0x800] sm:$0xff]
  %v649 = vld [vmem:[%s21 + $0x808] sm:$0xff]
  %v650 = vld [vmem:[%s21 + $0x810] sm:$0xff]
  %v651 = vld [vmem:[%s21 + $0x818] sm:$0xff]
  %v652 = vld [vmem:[%s21 + $0x820] sm:$0xff]
  %v653 = vld [vmem:[%s21 + $0x828] sm:$0xff]
  %v654 = vld [vmem:[%s21 + $0x830] sm:$0xff]
  %v655 = vld [vmem:[%s21 + $0x838] sm:$0xff]
  %v656 = vld [vmem:[%s21 + $0x840] sm:$0xff]
  %v657 = vld [vmem:[%s21 + $0x848] sm:$0xff]
  %v658 = vld [vmem:[%s21 + $0x850] sm:$0xff]
  %v659 = vld [vmem:[%s21 + $0x858] sm:$0xff]
  %v660 = vld [vmem:[%s21 + $0x860] sm:$0xff]
  %v661 = vld [vmem:[%s21 + $0x868] sm:$0xff]
  %v662 = vld [vmem:[%s21 + $0x870] sm:$0xff]
  %v663 = vld [vmem:[%s21 + $0x878] sm:$0xff]
  %v664 = vld [vmem:[%s21 + $0x880] sm:$0xff]
  %v665 = vld [vmem:[%s21 + $0x888] sm:$0xff]
  %v666 = vld [vmem:[%s21 + $0x890] sm:$0xff]
  %v667 = vld [vmem:[%s21 + $0x898] sm:$0xff]
  %v668 = vld [vmem:[%s21 + $0x8a0] sm:$0xff]
  %v669 = vld [vmem:[%s21 + $0x8a8] sm:$0xff]
  %v670 = vld [vmem:[%s21 + $0x8b0] sm:$0xff]
  %v671 = vld [vmem:[%s21 + $0x8b8] sm:$0xff]
  %v672 = vld [vmem:[%s21 + $0x8c0] sm:$0xff]
  %v673 = vld [vmem:[%s21 + $0x8c8] sm:$0xff]
  %v674 = vld [vmem:[%s21 + $0x8d0] sm:$0xff]
  %v675 = vld [vmem:[%s21 + $0x8d8] sm:$0xff]
  %v676 = vld [vmem:[%s21 + $0x8e0] sm:$0xff]
  %v677 = vld [vmem:[%s21 + $0x8e8] sm:$0xff]
  %v678 = vld [vmem:[%s21 + $0x8f0] sm:$0xff]
  %v679 = vld [vmem:[%s21 + $0x8f8] sm:$0xff]
  %v680 = vld [vmem:[%s21 + $0x900] sm:$0xff]
  %v681 = vld [vmem:[%s21 + $0x908] sm:$0xff]
  %v682 = vld [vmem:[%s21 + $0x910] sm:$0xff]
  %v683 = vld [vmem:[%s21 + $0x918] sm:$0xff]
  %v684 = vld [vmem:[%s21 + $0x920] sm:$0xff]
  %v685 = vld [vmem:[%s21 + $0x928] sm:$0xff]
  %v686 = vld [vmem:[%s21 + $0x930] sm:$0xff]
  %v687 = vld [vmem:[%s21 + $0x938] sm:$0xff]
  %v688 = vld [vmem:[%s21 + $0x940] sm:$0xff]
  %v689 = vld [vmem:[%s21 + $0x948] sm:$0xff]
  %v690 = vld [vmem:[%s21 + $0x950] sm:$0xff]
  %v691 = vld [vmem:[%s21 + $0x958] sm:$0xff]
  %v692 = vld [vmem:[%s21 + $0x960] sm:$0xff]
  %v693 = vld [vmem:[%s21 + $0x968] sm:$0xff]
  %v694 = vld [vmem:[%s21 + $0x970] sm:$0xff]
  %v695 = vld [vmem:[%s21 + $0x978] sm:$0xff]
  %v696 = vld [vmem:[%s21 + $0x980] sm:$0xff]
  %v697 = vld [vmem:[%s21 + $0x988] sm:$0xff]
  %v698 = vld [vmem:[%s21 + $0x990] sm:$0xff]
  %v699 = vld [vmem:[%s21 + $0x998] sm:$0xff]
  %v700 = vld [vmem:[%s21 + $0x9a0] sm:$0xff]
  %v701 = vld [vmem:[%s21 + $0x9a8] sm:$0xff]
  %v702 = vld [vmem:[%s21 + $0x9b0] sm:$0xff]
  %v703 = vld [vmem:[%s21 + $0x9b8] sm:$0xff]
  %v704 = vld [vmem:[%s21 + $0x9c0] sm:$0xff]
  %v705 = vld [vmem:[%s21 + $0x9c8] sm:$0xff]
  %v706 = vld [vmem:[%s21 + $0x9d0] sm:$0xff]
  %v707 = vld [vmem:[%s21 + $0x9d8] sm:$0xff]
  %v708 = vld [vmem:[%s21 + $0x9e0] sm:$0xff]
  %v709 = vld [vmem:[%s21 + $0x9e8] sm:$0xff]
  %v710 = vld [vmem:[%s21 + $0x9f0] sm:$0xff]
  %v711 = vld [vmem:[%s21 + $0x9f8] sm:$0xff]
  %v712 = vld [vmem:[%s21 + $0xa00] sm:$0xff]
  %v713 = vld [vmem:[%s21 + $0xa08] sm:$0xff]
  %v714 = vld [vmem:[%s21 + $0xa10] sm:$0xff]
  %v715 = vld [vmem:[%s21 + $0xa18] sm:$0xff]
  %v716 = vld [vmem:[%s21 + $0xa20] sm:$0xff]
  %v717 = vld [vmem:[%s21 + $0xa28] sm:$0xff]
  %v718 = vld [vmem:[%s21 + $0xa30] sm:$0xff]
  %v719 = vld [vmem:[%s21 + $0xa38] sm:$0xff]
  %v720 = vld [vmem:[%s21 + $0xa40] sm:$0xff]
  %v721 = vld [vmem:[%s21 + $0xa48] sm:$0xff]
  %v722 = vld [vmem:[%s21 + $0xa50] sm:$0xff]
  %v723 = vld [vmem:[%s21 + $0xa58] sm:$0xff]
  %v724 = vld [vmem:[%s21 + $0xa60] sm:$0xff]
  %v725 = vld [vmem:[%s21 + $0xa68] sm:$0xff]
  %v726 = vld [vmem:[%s21 + $0xa70] sm:$0xff]
  %v727 = vld [vmem:[%s21 + $0xa78] sm:$0xff]
  %v728 = vld [vmem:[%s21 + $0xa80] sm:$0xff]
  %v729 = vld [vmem:[%s21 + $0xa88] sm:$0xff]
  %v730 = vld [vmem:[%s21 + $0xa90] sm:$0xff]
  %v731 = vld [vmem:[%s21 + $0xa98] sm:$0xff]
  %v732 = vld [vmem:[%s21 + $0xaa0] sm:$0xff]
  %v733 = vld [vmem:[%s21 + $0xaa8] sm:$0xff]
  %v734 = vld [vmem:[%s21 + $0xab0] sm:$0xff]
  %v735 = vld [vmem:[%s21 + $0xab8] sm:$0xff]
  %v736 = vld [vmem:[%s21 + $0xac0] sm:$0xff]
  %v737 = vld [vmem:[%s21 + $0xac8] sm:$0xff]
  %v738 = vld [vmem:[%s21 + $0xad0] sm:$0xff]
  %v739 = vld [vmem:[%s21 + $0xad8] sm:$0xff]
  %v740 = vld [vmem:[%s21 + $0xae0] sm:$0xff]
  %v741 = vld [vmem:[%s21 + $0xae8] sm:$0xff]
  %v742 = vld [vmem:[%s21 + $0xaf0] sm:$0xff]
  %v743 = vld [vmem:[%s21 + $0xaf8] sm:$0xff]
  %v744 = vld [vmem:[%s21 + $0xb00] sm:$0xff]
  %v745 = vld [vmem:[%s21 + $0xb08] sm:$0xff]
  %v746 = vld [vmem:[%s21 + $0xb10] sm:$0xff]
  %v747 = vld [vmem:[%s21 + $0xb18] sm:$0xff]
  %v748 = vld [vmem:[%s21 + $0xb20] sm:$0xff]
  %v749 = vld [vmem:[%s21 + $0xb28] sm:$0xff]
  %v750 = vld [vmem:[%s21 + $0xb30] sm:$0xff]
  %v751 = vld [vmem:[%s21 + $0xb38] sm:$0xff]
  %v752 = vld [vmem:[%s21 + $0xb40] sm:$0xff]
  %v753 = vld [vmem:[%s21 + $0xb48] sm:$0xff]
  %v754 = vld [vmem:[%s21 + $0xb50] sm:$0xff]
  %v755 = vld [vmem:[%s21 + $0xb58] sm:$0xff]
  %v756 = vld [vmem:[%s21 + $0xb60] sm:$0xff]
  %v757 = vld [vmem:[%s21 + $0xb68] sm:$0xff]
  %v758 = vld [vmem:[%s21 + $0xb70] sm:$0xff]
  %v759 = vld [vmem:[%s21 + $0xb78] sm:$0xff]
  %v760 = vld [vmem:[%s21 + $0xb80] sm:$0xff]
  %v761 = vld [vmem:[%s21 + $0xb88] sm:$0xff]
  %v762 = vld [vmem:[%s21 + $0xb90] sm:$0xff]
  %v763 = vld [vmem:[%s21 + $0xb98] sm:$0xff]
  %v764 = vld [vmem:[%s21 + $0xba0] sm:$0xff]
  %v765 = vld [vmem:[%s21 + $0xba8] sm:$0xff]
  %v766 = vld [vmem:[%s21 + $0xbb0] sm:$0xff]
  %v767 = vld [vmem:[%s21 + $0xbb8] sm:$0xff]
  %v768 = vld [vmem:[%s21 + $0xbc0] sm:$0xff]
  %v769 = vld [vmem:[%s21 + $0xbc8] sm:$0xff]
  %v770 = vld [vmem:[%s21 + $0xbd0] sm:$0xff]
  %v771 = vld [vmem:[%s21 + $0xbd8] sm:$0xff]
  %v772 = vld [vmem:[%s21 + $0xbe0] sm:$0xff]
  %v773 = vld [vmem:[%s21 + $0xbe8] sm:$0xff]
  %v774 = vld [vmem:[%s21 + $0xbf0] sm:$0xff]
  %v775 = vld [vmem:[%s21 + $0xbf8] sm:$0xff]
  %v776 = vld [vmem:[%s23] sm:$0xff]
  %v778 = vlaneseq
  %v779 = vshrl.u32 %v778, 7
  %v780 = vsub.s32 0, %v779
  %v781 = vrot.slane %v776, %v780
  %v782 = vlaneseq
  %v783 = vshrl.u32 %v782, 7
  %v784 = vsub.s32 1, %v783
  %v785 = vrot.slane %v776, %v784
  %v786 = vlaneseq
  %v787 = vshrl.u32 %v786, 7
  %v788 = vsub.s32 2, %v787
  %v789 = vrot.slane %v776, %v788
  %v790 = vlaneseq
  %v791 = vshrl.u32 %v790, 7
  %v792 = vsub.s32 3, %v791
  %v793 = vrot.slane %v776, %v792
  %v794 = vlaneseq
  %v795 = vshrl.u32 %v794, 7
  %v796 = vsub.s32 4, %v795
  %v797 = vrot.slane %v776, %v796
  %v798 = vlaneseq
  %v799 = vshrl.u32 %v798, 7
  %v800 = vsub.s32 5, %v799
  %v801 = vrot.slane %v776, %v800
  %v802 = vlaneseq
  %v803 = vshrl.u32 %v802, 7
  %v804 = vsub.s32 6, %v803
  %v805 = vrot.slane %v776, %v804
  %v806 = vlaneseq
  %v807 = vshrl.u32 %v806, 7
  %v808 = vsub.s32 7, %v807
  %v809 = vrot.slane %v776, %v808
  %v821 = vunpack.c.l.b16 %v389
  %v822 = vunpack.c.h.b16 %v389
  %v823 = vunpack.c.l.b16 %v390
  %v824 = vunpack.c.h.b16 %v390
  %v825 = vunpack.c.l.b16 %v391
  %v826 = vunpack.c.h.b16 %v391
  %v827 = vpack.c.b16 %v821, %v821
  %v828 = vpack.c.b16 %v822, %v822
  %v829 = vpack.c.b16 %v823, %v823
  %v830 = vpack.c.b16 %v824, %v824
  %v831 = vpack.c.b16 %v825, %v825
  %v832 = vpack.c.b16 %v826, %v826
  %v1223 = vunpack.c.l.b16 %v392
  %v1224 = vunpack.c.h.b16 %v392
  %v1225 = vunpack.c.l.b16 %v393
  %v1226 = vunpack.c.h.b16 %v393
  %v1227 = vunpack.c.l.b16 %v394
  %v1228 = vunpack.c.h.b16 %v394
  %v1229 = vunpack.c.l.b16 %v395
  %v1230 = vunpack.c.h.b16 %v395
  %v1231 = vunpack.c.l.b16 %v396
  %v1232 = vunpack.c.h.b16 %v396
  %v1233 = vunpack.c.l.b16 %v397
  %v1234 = vunpack.c.h.b16 %v397
  %v1235 = vunpack.c.l.b16 %v398
  %v1236 = vunpack.c.h.b16 %v398
  %v1237 = vunpack.c.l.b16 %v399
  %v1238 = vunpack.c.h.b16 %v399
  %v1239 = vunpack.c.l.b16 %v400
  %v1240 = vunpack.c.h.b16 %v400
  %v1241 = vunpack.c.l.b16 %v401
  %v1242 = vunpack.c.h.b16 %v401
  %v1243 = vunpack.c.l.b16 %v402
  %v1244 = vunpack.c.h.b16 %v402
  %v1245 = vunpack.c.l.b16 %v403
  %v1246 = vunpack.c.h.b16 %v403
  %v1247 = vunpack.c.l.b16 %v404
  %v1248 = vunpack.c.h.b16 %v404
  %v1249 = vunpack.c.l.b16 %v405
  %v1250 = vunpack.c.h.b16 %v405
  %v1251 = vunpack.c.l.b16 %v406
  %v1252 = vunpack.c.h.b16 %v406
  %v1253 = vunpack.c.l.b16 %v407
  %v1254 = vunpack.c.h.b16 %v407
  %v1255 = vunpack.c.l.b16 %v408
  %v1256 = vunpack.c.h.b16 %v408
  %v1257 = vunpack.c.l.b16 %v409
  %v1258 = vunpack.c.h.b16 %v409
  %v1259 = vunpack.c.l.b16 %v410
  %v1260 = vunpack.c.h.b16 %v410
  %v1261 = vunpack.c.l.b16 %v411
  %v1262 = vunpack.c.h.b16 %v411
  %v1263 = vunpack.c.l.b16 %v412
  %v1264 = vunpack.c.h.b16 %v412
  %v1265 = vunpack.c.l.b16 %v413
  %v1266 = vunpack.c.h.b16 %v413
  %v1267 = vunpack.c.l.b16 %v414
  %v1268 = vunpack.c.h.b16 %v414
  %v1269 = vunpack.c.l.b16 %v415
  %v1270 = vunpack.c.h.b16 %v415
  %v1271 = vunpack.c.l.b16 %v416
  %v1272 = vunpack.c.h.b16 %v416
  %v1273 = vunpack.c.l.b16 %v417
  %v1274 = vunpack.c.h.b16 %v417
  %v1275 = vunpack.c.l.b16 %v418
  %v1276 = vunpack.c.h.b16 %v418
  %v1277 = vunpack.c.l.b16 %v419
  %v1278 = vunpack.c.h.b16 %v419
  %v1279 = vunpack.c.l.b16 %v420
  %v1280 = vunpack.c.h.b16 %v420
  %v1281 = vunpack.c.l.b16 %v421
  %v1282 = vunpack.c.h.b16 %v421
  %v1283 = vunpack.c.l.b16 %v422
  %v1284 = vunpack.c.h.b16 %v422
  %v1285 = vunpack.c.l.b16 %v423
  %v1286 = vunpack.c.h.b16 %v423
  %v1287 = vunpack.c.l.b16 %v424
  %v1288 = vunpack.c.h.b16 %v424
  %v1289 = vunpack.c.l.b16 %v425
  %v1290 = vunpack.c.h.b16 %v425
  %v1291 = vunpack.c.l.b16 %v426
  %v1292 = vunpack.c.h.b16 %v426
  %v1293 = vunpack.c.l.b16 %v427
  %v1294 = vunpack.c.h.b16 %v427
  %v1295 = vunpack.c.l.b16 %v428
  %v1296 = vunpack.c.h.b16 %v428
  %v1297 = vunpack.c.l.b16 %v429
  %v1298 = vunpack.c.h.b16 %v429
  %v1299 = vunpack.c.l.b16 %v430
  %v1300 = vunpack.c.h.b16 %v430
  %v1301 = vunpack.c.l.b16 %v431
  %v1302 = vunpack.c.h.b16 %v431
  %v1303 = vunpack.c.l.b16 %v432
  %v1304 = vunpack.c.h.b16 %v432
  %v1305 = vunpack.c.l.b16 %v433
  %v1306 = vunpack.c.h.b16 %v433
  %v1307 = vunpack.c.l.b16 %v434
  %v1308 = vunpack.c.h.b16 %v434
  %v1309 = vunpack.c.l.b16 %v435
  %v1310 = vunpack.c.h.b16 %v435
  %v1311 = vunpack.c.l.b16 %v436
  %v1312 = vunpack.c.h.b16 %v436
  %v1313 = vunpack.c.l.b16 %v437
  %v1314 = vunpack.c.h.b16 %v437
  %v1315 = vunpack.c.l.b16 %v438
  %v1316 = vunpack.c.h.b16 %v438
  %v1317 = vunpack.c.l.b16 %v439
  %v1318 = vunpack.c.h.b16 %v439
  %v1319 = vunpack.c.l.b16 %v440
  %v1320 = vunpack.c.h.b16 %v440
  %v1321 = vunpack.c.l.b16 %v441
  %v1322 = vunpack.c.h.b16 %v441
  %v1323 = vunpack.c.l.b16 %v442
  %v1324 = vunpack.c.h.b16 %v442
  %v1325 = vunpack.c.l.b16 %v443
  %v1326 = vunpack.c.h.b16 %v443
  %v1327 = vunpack.c.l.b16 %v444
  %v1328 = vunpack.c.h.b16 %v444
  %v1329 = vunpack.c.l.b16 %v445
  %v1330 = vunpack.c.h.b16 %v445
  %v1331 = vunpack.c.l.b16 %v446
  %v1332 = vunpack.c.h.b16 %v446
  %v1333 = vunpack.c.l.b16 %v447
  %v1334 = vunpack.c.h.b16 %v447
  %v1335 = vunpack.c.l.b16 %v448
  %v1336 = vunpack.c.h.b16 %v448
  %v1337 = vunpack.c.l.b16 %v449
  %v1338 = vunpack.c.h.b16 %v449
  %v1339 = vunpack.c.l.b16 %v450
  %v1340 = vunpack.c.h.b16 %v450
  %v1341 = vunpack.c.l.b16 %v451
  %v1342 = vunpack.c.h.b16 %v451
  %v1343 = vunpack.c.l.b16 %v452
  %v1344 = vunpack.c.h.b16 %v452
  %v1345 = vunpack.c.l.b16 %v453
  %v1346 = vunpack.c.h.b16 %v453
  %v1347 = vunpack.c.l.b16 %v454
  %v1348 = vunpack.c.h.b16 %v454
  %v1349 = vunpack.c.l.b16 %v455
  %v1350 = vunpack.c.h.b16 %v455
  %v1351 = vunpack.c.l.b16 %v456
  %v1352 = vunpack.c.h.b16 %v456
  %v1353 = vunpack.c.l.b16 %v457
  %v1354 = vunpack.c.h.b16 %v457
  %v1355 = vunpack.c.l.b16 %v458
  %v1356 = vunpack.c.h.b16 %v458
  %v1357 = vunpack.c.l.b16 %v459
  %v1358 = vunpack.c.h.b16 %v459
  %v1359 = vunpack.c.l.b16 %v460
  %v1360 = vunpack.c.h.b16 %v460
  %v1361 = vunpack.c.l.b16 %v461
  %v1362 = vunpack.c.h.b16 %v461
  %v1363 = vunpack.c.l.b16 %v462
  %v1364 = vunpack.c.h.b16 %v462
  %v1365 = vunpack.c.l.b16 %v463
  %v1366 = vunpack.c.h.b16 %v463
  %v1367 = vunpack.c.l.b16 %v464
  %v1368 = vunpack.c.h.b16 %v464
  %v1369 = vunpack.c.l.b16 %v465
  %v1370 = vunpack.c.h.b16 %v465
  %v1371 = vunpack.c.l.b16 %v466
  %v1372 = vunpack.c.h.b16 %v466
  %v1373 = vunpack.c.l.b16 %v467
  %v1374 = vunpack.c.h.b16 %v467
  %v1375 = vunpack.c.l.b16 %v468
  %v1376 = vunpack.c.h.b16 %v468
  %v1377 = vunpack.c.l.b16 %v469
  %v1378 = vunpack.c.h.b16 %v469
  %v1379 = vunpack.c.l.b16 %v470
  %v1380 = vunpack.c.h.b16 %v470
  %v1381 = vunpack.c.l.b16 %v471
  %v1382 = vunpack.c.h.b16 %v471
  %v1383 = vunpack.c.l.b16 %v472
  %v1384 = vunpack.c.h.b16 %v472
  %v1385 = vunpack.c.l.b16 %v473
  %v1386 = vunpack.c.h.b16 %v473
  %v1387 = vunpack.c.l.b16 %v474
  %v1388 = vunpack.c.h.b16 %v474
  %v1389 = vunpack.c.l.b16 %v475
  %v1390 = vunpack.c.h.b16 %v475
  %v1391 = vunpack.c.l.b16 %v476
  %v1392 = vunpack.c.h.b16 %v476
  %v1393 = vunpack.c.l.b16 %v477
  %v1394 = vunpack.c.h.b16 %v477
  %v1395 = vunpack.c.l.b16 %v478
  %v1396 = vunpack.c.h.b16 %v478
  %v1397 = vunpack.c.l.b16 %v479
  %v1398 = vunpack.c.h.b16 %v479
  %v1399 = vunpack.c.l.b16 %v480
  %v1400 = vunpack.c.h.b16 %v480
  %v1401 = vunpack.c.l.b16 %v481
  %v1402 = vunpack.c.h.b16 %v481
  %v1403 = vunpack.c.l.b16 %v482
  %v1404 = vunpack.c.h.b16 %v482
  %v1405 = vunpack.c.l.b16 %v483
  %v1406 = vunpack.c.h.b16 %v483
  %v1407 = vunpack.c.l.b16 %v484
  %v1408 = vunpack.c.h.b16 %v484
  %v1409 = vunpack.c.l.b16 %v485
  %v1410 = vunpack.c.h.b16 %v485
  %v1411 = vunpack.c.l.b16 %v486
  %v1412 = vunpack.c.h.b16 %v486
  %v1413 = vunpack.c.l.b16 %v487
  %v1414 = vunpack.c.h.b16 %v487
  %v1415 = vunpack.c.l.b16 %v488
  %v1416 = vunpack.c.h.b16 %v488
  %v1417 = vunpack.c.l.b16 %v489
  %v1418 = vunpack.c.h.b16 %v489
  %v1419 = vunpack.c.l.b16 %v490
  %v1420 = vunpack.c.h.b16 %v490
  %v1421 = vunpack.c.l.b16 %v491
  %v1422 = vunpack.c.h.b16 %v491
  %v1423 = vunpack.c.l.b16 %v492
  %v1424 = vunpack.c.h.b16 %v492
  %v1425 = vunpack.c.l.b16 %v493
  %v1426 = vunpack.c.h.b16 %v493
  %v1427 = vunpack.c.l.b16 %v494
  %v1428 = vunpack.c.h.b16 %v494
  %v1429 = vunpack.c.l.b16 %v495
  %v1430 = vunpack.c.h.b16 %v495
  %v1431 = vunpack.c.l.b16 %v496
  %v1432 = vunpack.c.h.b16 %v496
  %v1433 = vunpack.c.l.b16 %v497
  %v1434 = vunpack.c.h.b16 %v497
  %v1435 = vunpack.c.l.b16 %v498
  %v1436 = vunpack.c.h.b16 %v498
  %v1437 = vunpack.c.l.b16 %v499
  %v1438 = vunpack.c.h.b16 %v499
  %v1439 = vunpack.c.l.b16 %v500
  %v1440 = vunpack.c.h.b16 %v500
  %v1441 = vunpack.c.l.b16 %v501
  %v1442 = vunpack.c.h.b16 %v501
  %v1443 = vunpack.c.l.b16 %v502
  %v1444 = vunpack.c.h.b16 %v502
  %v1445 = vunpack.c.l.b16 %v503
  %v1446 = vunpack.c.h.b16 %v503
  %v1447 = vunpack.c.l.b16 %v504
  %v1448 = vunpack.c.h.b16 %v504
  %v1449 = vunpack.c.l.b16 %v505
  %v1450 = vunpack.c.h.b16 %v505
  %v1451 = vunpack.c.l.b16 %v506
  %v1452 = vunpack.c.h.b16 %v506
  %v1453 = vunpack.c.l.b16 %v507
  %v1454 = vunpack.c.h.b16 %v507
  %v1455 = vunpack.c.l.b16 %v508
  %v1456 = vunpack.c.h.b16 %v508
  %v1457 = vunpack.c.l.b16 %v509
  %v1458 = vunpack.c.h.b16 %v509
  %v1459 = vunpack.c.l.b16 %v510
  %v1460 = vunpack.c.h.b16 %v510
  %v1461 = vunpack.c.l.b16 %v511
  %v1462 = vunpack.c.h.b16 %v511
  %v1463 = vunpack.c.l.b16 %v512
  %v1464 = vunpack.c.h.b16 %v512
  %v1465 = vunpack.c.l.b16 %v513
  %v1466 = vunpack.c.h.b16 %v513
  %v1467 = vunpack.c.l.b16 %v514
  %v1468 = vunpack.c.h.b16 %v514
  %v1469 = vunpack.c.l.b16 %v515
  %v1470 = vunpack.c.h.b16 %v515
  %v1471 = vunpack.c.l.b16 %v516
  %v1472 = vunpack.c.h.b16 %v516
  %v1473 = vunpack.c.l.b16 %v517
  %v1474 = vunpack.c.h.b16 %v517
  %v1475 = vunpack.c.l.b16 %v518
  %v1476 = vunpack.c.h.b16 %v518
  %v1477 = vunpack.c.l.b16 %v519
  %v1478 = vunpack.c.h.b16 %v519
  %v1479 = vunpack.c.l.b16 %v520
  %v1480 = vunpack.c.h.b16 %v520
  %v1481 = vunpack.c.l.b16 %v521
  %v1482 = vunpack.c.h.b16 %v521
  %v1483 = vunpack.c.l.b16 %v522
  %v1484 = vunpack.c.h.b16 %v522
  %v1485 = vunpack.c.l.b16 %v523
  %v1486 = vunpack.c.h.b16 %v523
  %v1487 = vunpack.c.l.b16 %v524
  %v1488 = vunpack.c.h.b16 %v524
  %v1489 = vunpack.c.l.b16 %v525
  %v1490 = vunpack.c.h.b16 %v525
  %v1491 = vunpack.c.l.b16 %v526
  %v1492 = vunpack.c.h.b16 %v526
  %v1493 = vunpack.c.l.b16 %v527
  %v1494 = vunpack.c.h.b16 %v527
  %v1495 = vunpack.c.l.b16 %v528
  %v1496 = vunpack.c.h.b16 %v528
  %v1497 = vunpack.c.l.b16 %v529
  %v1498 = vunpack.c.h.b16 %v529
  %v1499 = vunpack.c.l.b16 %v530
  %v1500 = vunpack.c.h.b16 %v530
  %v1501 = vunpack.c.l.b16 %v531
  %v1502 = vunpack.c.h.b16 %v531
  %v1503 = vunpack.c.l.b16 %v532
  %v1504 = vunpack.c.h.b16 %v532
  %v1505 = vunpack.c.l.b16 %v533
  %v1506 = vunpack.c.h.b16 %v533
  %v1507 = vunpack.c.l.b16 %v534
  %v1508 = vunpack.c.h.b16 %v534
  %v1509 = vunpack.c.l.b16 %v535
  %v1510 = vunpack.c.h.b16 %v535
  %v1511 = vunpack.c.l.b16 %v536
  %v1512 = vunpack.c.h.b16 %v536
  %v1513 = vunpack.c.l.b16 %v537
  %v1514 = vunpack.c.h.b16 %v537
  %v1515 = vunpack.c.l.b16 %v538
  %v1516 = vunpack.c.h.b16 %v538
  %v1517 = vunpack.c.l.b16 %v539
  %v1518 = vunpack.c.h.b16 %v539
  %v1519 = vunpack.c.l.b16 %v540
  %v1520 = vunpack.c.h.b16 %v540
  %v1521 = vunpack.c.l.b16 %v541
  %v1522 = vunpack.c.h.b16 %v541
  %v1523 = vunpack.c.l.b16 %v542
  %v1524 = vunpack.c.h.b16 %v542
  %v1525 = vunpack.c.l.b16 %v543
  %v1526 = vunpack.c.h.b16 %v543
  %v1527 = vunpack.c.l.b16 %v544
  %v1528 = vunpack.c.h.b16 %v544
  %v1529 = vunpack.c.l.b16 %v545
  %v1530 = vunpack.c.h.b16 %v545
  %v1531 = vunpack.c.l.b16 %v546
  %v1532 = vunpack.c.h.b16 %v546
  %v1533 = vunpack.c.l.b16 %v547
  %v1534 = vunpack.c.h.b16 %v547
  %v1535 = vunpack.c.l.b16 %v548
  %v1536 = vunpack.c.h.b16 %v548
  %v1537 = vunpack.c.l.b16 %v549
  %v1538 = vunpack.c.h.b16 %v549
  %v1539 = vunpack.c.l.b16 %v550
  %v1540 = vunpack.c.h.b16 %v550
  %v1541 = vunpack.c.l.b16 %v551
  %v1542 = vunpack.c.h.b16 %v551
  %v1543 = vunpack.c.l.b16 %v552
  %v1544 = vunpack.c.h.b16 %v552
  %v1545 = vunpack.c.l.b16 %v553
  %v1546 = vunpack.c.h.b16 %v553
  %v1547 = vunpack.c.l.b16 %v554
  %v1548 = vunpack.c.h.b16 %v554
  %v1549 = vunpack.c.l.b16 %v555
  %v1550 = vunpack.c.h.b16 %v555
  %v1551 = vunpack.c.l.b16 %v556
  %v1552 = vunpack.c.h.b16 %v556
  %v1553 = vunpack.c.l.b16 %v557
  %v1554 = vunpack.c.h.b16 %v557
  %v1555 = vunpack.c.l.b16 %v558
  %v1556 = vunpack.c.h.b16 %v558
  %v1557 = vunpack.c.l.b16 %v559
  %v1558 = vunpack.c.h.b16 %v559
  %v1559 = vunpack.c.l.b16 %v560
  %v1560 = vunpack.c.h.b16 %v560
  %v1561 = vunpack.c.l.b16 %v561
  %v1562 = vunpack.c.h.b16 %v561
  %v1563 = vunpack.c.l.b16 %v562
  %v1564 = vunpack.c.h.b16 %v562
  %v1565 = vunpack.c.l.b16 %v563
  %v1566 = vunpack.c.h.b16 %v563
  %v1567 = vunpack.c.l.b16 %v564
  %v1568 = vunpack.c.h.b16 %v564
  %v1569 = vunpack.c.l.b16 %v565
  %v1570 = vunpack.c.h.b16 %v565
  %v1571 = vunpack.c.l.b16 %v566
  %v1572 = vunpack.c.h.b16 %v566
  %v1573 = vunpack.c.l.b16 %v567
  %v1574 = vunpack.c.h.b16 %v567
  %v1575 = vunpack.c.l.b16 %v568
  %v1576 = vunpack.c.h.b16 %v568
  %v1577 = vunpack.c.l.b16 %v569
  %v1578 = vunpack.c.h.b16 %v569
  %v1579 = vunpack.c.l.b16 %v570
  %v1580 = vunpack.c.h.b16 %v570
  %v1581 = vunpack.c.l.b16 %v571
  %v1582 = vunpack.c.h.b16 %v571
  %v1583 = vunpack.c.l.b16 %v572
  %v1584 = vunpack.c.h.b16 %v572
  %v1585 = vunpack.c.l.b16 %v573
  %v1586 = vunpack.c.h.b16 %v573
  %v1587 = vunpack.c.l.b16 %v574
  %v1588 = vunpack.c.h.b16 %v574
  %v1589 = vunpack.c.l.b16 %v575
  %v1590 = vunpack.c.h.b16 %v575
  %v1591 = vunpack.c.l.b16 %v576
  %v1592 = vunpack.c.h.b16 %v576
  %v1593 = vunpack.c.l.b16 %v577
  %v1594 = vunpack.c.h.b16 %v577
  %v1595 = vunpack.c.l.b16 %v578
  %v1596 = vunpack.c.h.b16 %v578
  %v1597 = vunpack.c.l.b16 %v579
  %v1598 = vunpack.c.h.b16 %v579
  %v1599 = vunpack.c.l.b16 %v580
  %v1600 = vunpack.c.h.b16 %v580
  %v1601 = vunpack.c.l.b16 %v581
  %v1602 = vunpack.c.h.b16 %v581
  %v1603 = vunpack.c.l.b16 %v582
  %v1604 = vunpack.c.h.b16 %v582
  %v1605 = vunpack.c.l.b16 %v583
  %v1606 = vunpack.c.h.b16 %v583
  %v1607 = vunpack.c.l.b16 %v584
  %v1608 = vunpack.c.h.b16 %v584
  %v1609 = vunpack.c.l.b16 %v585
  %v1610 = vunpack.c.h.b16 %v585
  %v1611 = vunpack.c.l.b16 %v586
  %v1612 = vunpack.c.h.b16 %v586
  %v1613 = vunpack.c.l.b16 %v587
  %v1614 = vunpack.c.h.b16 %v587
  %v1615 = vunpack.c.l.b16 %v588
  %v1616 = vunpack.c.h.b16 %v588
  %v1617 = vunpack.c.l.b16 %v589
  %v1618 = vunpack.c.h.b16 %v589
  %v1619 = vunpack.c.l.b16 %v590
  %v1620 = vunpack.c.h.b16 %v590
  %v1621 = vunpack.c.l.b16 %v591
  %v1622 = vunpack.c.h.b16 %v591
  %v1623 = vunpack.c.l.b16 %v592
  %v1624 = vunpack.c.h.b16 %v592
  %v1625 = vunpack.c.l.b16 %v593
  %v1626 = vunpack.c.h.b16 %v593
  %v1627 = vunpack.c.l.b16 %v594
  %v1628 = vunpack.c.h.b16 %v594
  %v1629 = vunpack.c.l.b16 %v595
  %v1630 = vunpack.c.h.b16 %v595
  %v1631 = vunpack.c.l.b16 %v596
  %v1632 = vunpack.c.h.b16 %v596
  %v1633 = vunpack.c.l.b16 %v597
  %v1634 = vunpack.c.h.b16 %v597
  %v1635 = vunpack.c.l.b16 %v598
  %v1636 = vunpack.c.h.b16 %v598
  %v1637 = vunpack.c.l.b16 %v599
  %v1638 = vunpack.c.h.b16 %v599
  %v1639 = vunpack.c.l.b16 %v600
  %v1640 = vunpack.c.h.b16 %v600
  %v1641 = vunpack.c.l.b16 %v601
  %v1642 = vunpack.c.h.b16 %v601
  %v1643 = vunpack.c.l.b16 %v602
  %v1644 = vunpack.c.h.b16 %v602
  %v1645 = vunpack.c.l.b16 %v603
  %v1646 = vunpack.c.h.b16 %v603
  %v1647 = vunpack.c.l.b16 %v604
  %v1648 = vunpack.c.h.b16 %v604
  %v1649 = vunpack.c.l.b16 %v605
  %v1650 = vunpack.c.h.b16 %v605
  %v1651 = vunpack.c.l.b16 %v606
  %v1652 = vunpack.c.h.b16 %v606
  %v1653 = vunpack.c.l.b16 %v607
  %v1654 = vunpack.c.h.b16 %v607
  %v1655 = vunpack.c.l.b16 %v608
  %v1656 = vunpack.c.h.b16 %v608
  %v1657 = vunpack.c.l.b16 %v609
  %v1658 = vunpack.c.h.b16 %v609
  %v1659 = vunpack.c.l.b16 %v610
  %v1660 = vunpack.c.h.b16 %v610
  %v1661 = vunpack.c.l.b16 %v611
  %v1662 = vunpack.c.h.b16 %v611
  %v1663 = vunpack.c.l.b16 %v612
  %v1664 = vunpack.c.h.b16 %v612
  %v1665 = vunpack.c.l.b16 %v613
  %v1666 = vunpack.c.h.b16 %v613
  %v1667 = vunpack.c.l.b16 %v614
  %v1668 = vunpack.c.h.b16 %v614
  %v1669 = vunpack.c.l.b16 %v615
  %v1670 = vunpack.c.h.b16 %v615
  %v1671 = vunpack.c.l.b16 %v616
  %v1672 = vunpack.c.h.b16 %v616
  %v1673 = vunpack.c.l.b16 %v617
  %v1674 = vunpack.c.h.b16 %v617
  %v1675 = vunpack.c.l.b16 %v618
  %v1676 = vunpack.c.h.b16 %v618
  %v1677 = vunpack.c.l.b16 %v619
  %v1678 = vunpack.c.h.b16 %v619
  %v1679 = vunpack.c.l.b16 %v620
  %v1680 = vunpack.c.h.b16 %v620
  %v1681 = vunpack.c.l.b16 %v621
  %v1682 = vunpack.c.h.b16 %v621
  %v1683 = vunpack.c.l.b16 %v622
  %v1684 = vunpack.c.h.b16 %v622
  %v1685 = vunpack.c.l.b16 %v623
  %v1686 = vunpack.c.h.b16 %v623
  %v1687 = vunpack.c.l.b16 %v624
  %v1688 = vunpack.c.h.b16 %v624
  %v1689 = vunpack.c.l.b16 %v625
  %v1690 = vunpack.c.h.b16 %v625
  %v1691 = vunpack.c.l.b16 %v626
  %v1692 = vunpack.c.h.b16 %v626
  %v1693 = vunpack.c.l.b16 %v627
  %v1694 = vunpack.c.h.b16 %v627
  %v1695 = vunpack.c.l.b16 %v628
  %v1696 = vunpack.c.h.b16 %v628
  %v1697 = vunpack.c.l.b16 %v629
  %v1698 = vunpack.c.h.b16 %v629
  %v1699 = vunpack.c.l.b16 %v630
  %v1700 = vunpack.c.h.b16 %v630
  %v1701 = vunpack.c.l.b16 %v631
  %v1702 = vunpack.c.h.b16 %v631
  %v1703 = vunpack.c.l.b16 %v632
  %v1704 = vunpack.c.h.b16 %v632
  %v1705 = vunpack.c.l.b16 %v633
  %v1706 = vunpack.c.h.b16 %v633
  %v1707 = vunpack.c.l.b16 %v634
  %v1708 = vunpack.c.h.b16 %v634
  %v1709 = vunpack.c.l.b16 %v635
  %v1710 = vunpack.c.h.b16 %v635
  %v1711 = vunpack.c.l.b16 %v636
  %v1712 = vunpack.c.h.b16 %v636
  %v1713 = vunpack.c.l.b16 %v637
  %v1714 = vunpack.c.h.b16 %v637
  %v1715 = vunpack.c.l.b16 %v638
  %v1716 = vunpack.c.h.b16 %v638
  %v1717 = vunpack.c.l.b16 %v639
  %v1718 = vunpack.c.h.b16 %v639
  %v1719 = vunpack.c.l.b16 %v640
  %v1720 = vunpack.c.h.b16 %v640
  %v1721 = vunpack.c.l.b16 %v641
  %v1722 = vunpack.c.h.b16 %v641
  %v1723 = vunpack.c.l.b16 %v642
  %v1724 = vunpack.c.h.b16 %v642
  %v1725 = vunpack.c.l.b16 %v643
  %v1726 = vunpack.c.h.b16 %v643
  %v1727 = vunpack.c.l.b16 %v644
  %v1728 = vunpack.c.h.b16 %v644
  %v1729 = vunpack.c.l.b16 %v645
  %v1730 = vunpack.c.h.b16 %v645
  %v1731 = vunpack.c.l.b16 %v646
  %v1732 = vunpack.c.h.b16 %v646
  %v1733 = vunpack.c.l.b16 %v647
  %v1734 = vunpack.c.h.b16 %v647
  %v1735 = vunpack.c.l.b16 %v648
  %v1736 = vunpack.c.h.b16 %v648
  %v1737 = vunpack.c.l.b16 %v649
  %v1738 = vunpack.c.h.b16 %v649
  %v1739 = vunpack.c.l.b16 %v650
  %v1740 = vunpack.c.h.b16 %v650
  %v1741 = vunpack.c.l.b16 %v651
  %v1742 = vunpack.c.h.b16 %v651
  %v1743 = vunpack.c.l.b16 %v652
  %v1744 = vunpack.c.h.b16 %v652
  %v1745 = vunpack.c.l.b16 %v653
  %v1746 = vunpack.c.h.b16 %v653
  %v1747 = vunpack.c.l.b16 %v654
  %v1748 = vunpack.c.h.b16 %v654
  %v1749 = vunpack.c.l.b16 %v655
  %v1750 = vunpack.c.h.b16 %v655
  %v1751 = vunpack.c.l.b16 %v656
  %v1752 = vunpack.c.h.b16 %v656
  %v1753 = vunpack.c.l.b16 %v657
  %v1754 = vunpack.c.h.b16 %v657
  %v1755 = vunpack.c.l.b16 %v658
  %v1756 = vunpack.c.h.b16 %v658
  %v1757 = vunpack.c.l.b16 %v659
  %v1758 = vunpack.c.h.b16 %v659
  %v1759 = vunpack.c.l.b16 %v660
  %v1760 = vunpack.c.h.b16 %v660
  %v1761 = vunpack.c.l.b16 %v661
  %v1762 = vunpack.c.h.b16 %v661
  %v1763 = vunpack.c.l.b16 %v662
  %v1764 = vunpack.c.h.b16 %v662
  %v1765 = vunpack.c.l.b16 %v663
  %v1766 = vunpack.c.h.b16 %v663
  %v1767 = vunpack.c.l.b16 %v664
  %v1768 = vunpack.c.h.b16 %v664
  %v1769 = vunpack.c.l.b16 %v665
  %v1770 = vunpack.c.h.b16 %v665
  %v1771 = vunpack.c.l.b16 %v666
  %v1772 = vunpack.c.h.b16 %v666
  %v1773 = vunpack.c.l.b16 %v667
  %v1774 = vunpack.c.h.b16 %v667
  %v1775 = vunpack.c.l.b16 %v668
  %v1776 = vunpack.c.h.b16 %v668
  %v1777 = vunpack.c.l.b16 %v669
  %v1778 = vunpack.c.h.b16 %v669
  %v1779 = vunpack.c.l.b16 %v670
  %v1780 = vunpack.c.h.b16 %v670
  %v1781 = vunpack.c.l.b16 %v671
  %v1782 = vunpack.c.h.b16 %v671
  %v1783 = vunpack.c.l.b16 %v672
  %v1784 = vunpack.c.h.b16 %v672
  %v1785 = vunpack.c.l.b16 %v673
  %v1786 = vunpack.c.h.b16 %v673
  %v1787 = vunpack.c.l.b16 %v674
  %v1788 = vunpack.c.h.b16 %v674
  %v1789 = vunpack.c.l.b16 %v675
  %v1790 = vunpack.c.h.b16 %v675
  %v1791 = vunpack.c.l.b16 %v676
  %v1792 = vunpack.c.h.b16 %v676
  %v1793 = vunpack.c.l.b16 %v677
  %v1794 = vunpack.c.h.b16 %v677
  %v1795 = vunpack.c.l.b16 %v678
  %v1796 = vunpack.c.h.b16 %v678
  %v1797 = vunpack.c.l.b16 %v679
  %v1798 = vunpack.c.h.b16 %v679
  %v1799 = vunpack.c.l.b16 %v680
  %v1800 = vunpack.c.h.b16 %v680
  %v1801 = vunpack.c.l.b16 %v681
  %v1802 = vunpack.c.h.b16 %v681
  %v1803 = vunpack.c.l.b16 %v682
  %v1804 = vunpack.c.h.b16 %v682
  %v1805 = vunpack.c.l.b16 %v683
  %v1806 = vunpack.c.h.b16 %v683
  %v1807 = vunpack.c.l.b16 %v684
  %v1808 = vunpack.c.h.b16 %v684
  %v1809 = vunpack.c.l.b16 %v685
  %v1810 = vunpack.c.h.b16 %v685
  %v1811 = vunpack.c.l.b16 %v686
  %v1812 = vunpack.c.h.b16 %v686
  %v1813 = vunpack.c.l.b16 %v687
  %v1814 = vunpack.c.h.b16 %v687
  %v1815 = vunpack.c.l.b16 %v688
  %v1816 = vunpack.c.h.b16 %v688
  %v1817 = vunpack.c.l.b16 %v689
  %v1818 = vunpack.c.h.b16 %v689
  %v1819 = vunpack.c.l.b16 %v690
  %v1820 = vunpack.c.h.b16 %v690
  %v1821 = vunpack.c.l.b16 %v691
  %v1822 = vunpack.c.h.b16 %v691
  %v1823 = vunpack.c.l.b16 %v692
  %v1824 = vunpack.c.h.b16 %v692
  %v1825 = vunpack.c.l.b16 %v693
  %v1826 = vunpack.c.h.b16 %v693
  %v1827 = vunpack.c.l.b16 %v694
  %v1828 = vunpack.c.h.b16 %v694
  %v1829 = vunpack.c.l.b16 %v695
  %v1830 = vunpack.c.h.b16 %v695
  %v1831 = vunpack.c.l.b16 %v696
  %v1832 = vunpack.c.h.b16 %v696
  %v1833 = vunpack.c.l.b16 %v697
  %v1834 = vunpack.c.h.b16 %v697
  %v1835 = vunpack.c.l.b16 %v698
  %v1836 = vunpack.c.h.b16 %v698
  %v1837 = vunpack.c.l.b16 %v699
  %v1838 = vunpack.c.h.b16 %v699
  %v1839 = vunpack.c.l.b16 %v700
  %v1840 = vunpack.c.h.b16 %v700
  %v1841 = vunpack.c.l.b16 %v701
  %v1842 = vunpack.c.h.b16 %v701
  %v1843 = vunpack.c.l.b16 %v702
  %v1844 = vunpack.c.h.b16 %v702
  %v1845 = vunpack.c.l.b16 %v703
  %v1846 = vunpack.c.h.b16 %v703
  %v1847 = vunpack.c.l.b16 %v704
  %v1848 = vunpack.c.h.b16 %v704
  %v1849 = vunpack.c.l.b16 %v705
  %v1850 = vunpack.c.h.b16 %v705
  %v1851 = vunpack.c.l.b16 %v706
  %v1852 = vunpack.c.h.b16 %v706
  %v1853 = vunpack.c.l.b16 %v707
  %v1854 = vunpack.c.h.b16 %v707
  %v1855 = vunpack.c.l.b16 %v708
  %v1856 = vunpack.c.h.b16 %v708
  %v1857 = vunpack.c.l.b16 %v709
  %v1858 = vunpack.c.h.b16 %v709
  %v1859 = vunpack.c.l.b16 %v710
  %v1860 = vunpack.c.h.b16 %v710
  %v1861 = vunpack.c.l.b16 %v711
  %v1862 = vunpack.c.h.b16 %v711
  %v1863 = vunpack.c.l.b16 %v712
  %v1864 = vunpack.c.h.b16 %v712
  %v1865 = vunpack.c.l.b16 %v713
  %v1866 = vunpack.c.h.b16 %v713
  %v1867 = vunpack.c.l.b16 %v714
  %v1868 = vunpack.c.h.b16 %v714
  %v1869 = vunpack.c.l.b16 %v715
  %v1870 = vunpack.c.h.b16 %v715
  %v1871 = vunpack.c.l.b16 %v716
  %v1872 = vunpack.c.h.b16 %v716
  %v1873 = vunpack.c.l.b16 %v717
  %v1874 = vunpack.c.h.b16 %v717
  %v1875 = vunpack.c.l.b16 %v718
  %v1876 = vunpack.c.h.b16 %v718
  %v1877 = vunpack.c.l.b16 %v719
  %v1878 = vunpack.c.h.b16 %v719
  %v1879 = vunpack.c.l.b16 %v720
  %v1880 = vunpack.c.h.b16 %v720
  %v1881 = vunpack.c.l.b16 %v721
  %v1882 = vunpack.c.h.b16 %v721
  %v1883 = vunpack.c.l.b16 %v722
  %v1884 = vunpack.c.h.b16 %v722
  %v1885 = vunpack.c.l.b16 %v723
  %v1886 = vunpack.c.h.b16 %v723
  %v1887 = vunpack.c.l.b16 %v724
  %v1888 = vunpack.c.h.b16 %v724
  %v1889 = vunpack.c.l.b16 %v725
  %v1890 = vunpack.c.h.b16 %v725
  %v1891 = vunpack.c.l.b16 %v726
  %v1892 = vunpack.c.h.b16 %v726
  %v1893 = vunpack.c.l.b16 %v727
  %v1894 = vunpack.c.h.b16 %v727
  %v1895 = vunpack.c.l.b16 %v728
  %v1896 = vunpack.c.h.b16 %v728
  %v1897 = vunpack.c.l.b16 %v729
  %v1898 = vunpack.c.h.b16 %v729
  %v1899 = vunpack.c.l.b16 %v730
  %v1900 = vunpack.c.h.b16 %v730
  %v1901 = vunpack.c.l.b16 %v731
  %v1902 = vunpack.c.h.b16 %v731
  %v1903 = vunpack.c.l.b16 %v732
  %v1904 = vunpack.c.h.b16 %v732
  %v1905 = vunpack.c.l.b16 %v733
  %v1906 = vunpack.c.h.b16 %v733
  %v1907 = vunpack.c.l.b16 %v734
  %v1908 = vunpack.c.h.b16 %v734
  %v1909 = vunpack.c.l.b16 %v735
  %v1910 = vunpack.c.h.b16 %v735
  %v1911 = vunpack.c.l.b16 %v736
  %v1912 = vunpack.c.h.b16 %v736
  %v1913 = vunpack.c.l.b16 %v737
  %v1914 = vunpack.c.h.b16 %v737
  %v1915 = vunpack.c.l.b16 %v738
  %v1916 = vunpack.c.h.b16 %v738
  %v1917 = vunpack.c.l.b16 %v739
  %v1918 = vunpack.c.h.b16 %v739
  %v1919 = vunpack.c.l.b16 %v740
  %v1920 = vunpack.c.h.b16 %v740
  %v1921 = vunpack.c.l.b16 %v741
  %v1922 = vunpack.c.h.b16 %v741
  %v1923 = vunpack.c.l.b16 %v742
  %v1924 = vunpack.c.h.b16 %v742
  %v1925 = vunpack.c.l.b16 %v743
  %v1926 = vunpack.c.h.b16 %v743
  %v1927 = vunpack.c.l.b16 %v744
  %v1928 = vunpack.c.h.b16 %v744
  %v1929 = vunpack.c.l.b16 %v745
  %v1930 = vunpack.c.h.b16 %v745
  %v1931 = vunpack.c.l.b16 %v746
  %v1932 = vunpack.c.h.b16 %v746
  %v1933 = vunpack.c.l.b16 %v747
  %v1934 = vunpack.c.h.b16 %v747
  %v1935 = vunpack.c.l.b16 %v748
  %v1936 = vunpack.c.h.b16 %v748
  %v1937 = vunpack.c.l.b16 %v749
  %v1938 = vunpack.c.h.b16 %v749
  %v1939 = vunpack.c.l.b16 %v750
  %v1940 = vunpack.c.h.b16 %v750
  %v1941 = vunpack.c.l.b16 %v751
  %v1942 = vunpack.c.h.b16 %v751
  %v1943 = vunpack.c.l.b16 %v752
  %v1944 = vunpack.c.h.b16 %v752
  %v1945 = vunpack.c.l.b16 %v753
  %v1946 = vunpack.c.h.b16 %v753
  %v1947 = vunpack.c.l.b16 %v754
  %v1948 = vunpack.c.h.b16 %v754
  %v1949 = vunpack.c.l.b16 %v755
  %v1950 = vunpack.c.h.b16 %v755
  %v1951 = vunpack.c.l.b16 %v756
  %v1952 = vunpack.c.h.b16 %v756
  %v1953 = vunpack.c.l.b16 %v757
  %v1954 = vunpack.c.h.b16 %v757
  %v1955 = vunpack.c.l.b16 %v758
  %v1956 = vunpack.c.h.b16 %v758
  %v1957 = vunpack.c.l.b16 %v759
  %v1958 = vunpack.c.h.b16 %v759
  %v1959 = vunpack.c.l.b16 %v760
  %v1960 = vunpack.c.h.b16 %v760
  %v1961 = vunpack.c.l.b16 %v761
  %v1962 = vunpack.c.h.b16 %v761
  %v1963 = vunpack.c.l.b16 %v762
  %v1964 = vunpack.c.h.b16 %v762
  %v1965 = vunpack.c.l.b16 %v763
  %v1966 = vunpack.c.h.b16 %v763
  %v1967 = vunpack.c.l.b16 %v764
  %v1968 = vunpack.c.h.b16 %v764
  %v1969 = vunpack.c.l.b16 %v765
  %v1970 = vunpack.c.h.b16 %v765
  %v1971 = vunpack.c.l.b16 %v766
  %v1972 = vunpack.c.h.b16 %v766
  %v1973 = vunpack.c.l.b16 %v767
  %v1974 = vunpack.c.h.b16 %v767
  %v1975 = vunpack.c.l.b16 %v768
  %v1976 = vunpack.c.h.b16 %v768
  %v1977 = vunpack.c.l.b16 %v769
  %v1978 = vunpack.c.h.b16 %v769
  %v1979 = vunpack.c.l.b16 %v770
  %v1980 = vunpack.c.h.b16 %v770
  %v1981 = vunpack.c.l.b16 %v771
  %v1982 = vunpack.c.h.b16 %v771
  %v1983 = vunpack.c.l.b16 %v772
  %v1984 = vunpack.c.h.b16 %v772
  %v1985 = vunpack.c.l.b16 %v773
  %v1986 = vunpack.c.h.b16 %v773
  %v1987 = vunpack.c.l.b16 %v774
  %v1988 = vunpack.c.h.b16 %v774
  %v1989 = vunpack.c.l.b16 %v775
  %v1990 = vunpack.c.h.b16 %v775
  %v1991 = vpack.c.b16 %v1231, %v1223
  %v1992 = vpack.c.b16 %v1232, %v1224
  %v1993 = vpack.c.b16 %v1233, %v1225
  %v1994 = vpack.c.b16 %v1234, %v1226
  %v1995 = vpack.c.b16 %v1235, %v1227
  %v1996 = vpack.c.b16 %v1236, %v1228
  %v1997 = vpack.c.b16 %v1237, %v1229
  %v1998 = vpack.c.b16 %v1238, %v1230
  %v1999 = vpack.c.b16 %v1247, %v1239
  %v2000 = vpack.c.b16 %v1248, %v1240
  %v2001 = vpack.c.b16 %v1249, %v1241
  %v2002 = vpack.c.b16 %v1250, %v1242
  %v2003 = vpack.c.b16 %v1251, %v1243
  %v2004 = vpack.c.b16 %v1252, %v1244
  %v2005 = vpack.c.b16 %v1253, %v1245
  %v2006 = vpack.c.b16 %v1254, %v1246
  %v2007 = vpack.c.b16 %v1263, %v1255
  %v2008 = vpack.c.b16 %v1264, %v1256
  %v2009 = vpack.c.b16 %v1265, %v1257
  %v2010 = vpack.c.b16 %v1266, %v1258
  %v2011 = vpack.c.b16 %v1267, %v1259
  %v2012 = vpack.c.b16 %v1268, %v1260
  %v2013 = vpack.c.b16 %v1269, %v1261
  %v2014 = vpack.c.b16 %v1270, %v1262
  %v2015 = vpack.c.b16 %v1279, %v1271
  %v2016 = vpack.c.b16 %v1280, %v1272
  %v2017 = vpack.c.b16 %v1281, %v1273
  %v2018 = vpack.c.b16 %v1282, %v1274
  %v2019 = vpack.c.b16 %v1283, %v1275
  %v2020 = vpack.c.b16 %v1284, %v1276
  %v2021 = vpack.c.b16 %v1285, %v1277
  %v2022 = vpack.c.b16 %v1286, %v1278
  %v2023 = vpack.c.b16 %v1295, %v1287
  %v2024 = vpack.c.b16 %v1296, %v1288
  %v2025 = vpack.c.b16 %v1297, %v1289
  %v2026 = vpack.c.b16 %v1298, %v1290
  %v2027 = vpack.c.b16 %v1299, %v1291
  %v2028 = vpack.c.b16 %v1300, %v1292
  %v2029 = vpack.c.b16 %v1301, %v1293
  %v2030 = vpack.c.b16 %v1302, %v1294
  %v2031 = vpack.c.b16 %v1311, %v1303
  %v2032 = vpack.c.b16 %v1312, %v1304
  %v2033 = vpack.c.b16 %v1313, %v1305
  %v2034 = vpack.c.b16 %v1314, %v1306
  %v2035 = vpack.c.b16 %v1315, %v1307
  %v2036 = vpack.c.b16 %v1316, %v1308
  %v2037 = vpack.c.b16 %v1317, %v1309
  %v2038 = vpack.c.b16 %v1318, %v1310
  %v2039 = vpack.c.b16 %v1327, %v1319
  %v2040 = vpack.c.b16 %v1328, %v1320
  %v2041 = vpack.c.b16 %v1329, %v1321
  %v2042 = vpack.c.b16 %v1330, %v1322
  %v2043 = vpack.c.b16 %v1331, %v1323
  %v2044 = vpack.c.b16 %v1332, %v1324
  %v2045 = vpack.c.b16 %v1333, %v1325
  %v2046 = vpack.c.b16 %v1334, %v1326
  %v2047 = vpack.c.b16 %v1343, %v1335
  %v2048 = vpack.c.b16 %v1344, %v1336
  %v2049 = vpack.c.b16 %v1345, %v1337
  %v2050 = vpack.c.b16 %v1346, %v1338
  %v2051 = vpack.c.b16 %v1347, %v1339
  %v2052 = vpack.c.b16 %v1348, %v1340
  %v2053 = vpack.c.b16 %v1349, %v1341
  %v2054 = vpack.c.b16 %v1350, %v1342
  %v2055 = vpack.c.b16 %v1359, %v1351
  %v2056 = vpack.c.b16 %v1360, %v1352
  %v2057 = vpack.c.b16 %v1361, %v1353
  %v2058 = vpack.c.b16 %v1362, %v1354
  %v2059 = vpack.c.b16 %v1363, %v1355
  %v2060 = vpack.c.b16 %v1364, %v1356
  %v2061 = vpack.c.b16 %v1365, %v1357
  %v2062 = vpack.c.b16 %v1366, %v1358
  %v2063 = vpack.c.b16 %v1375, %v1367
  %v2064 = vpack.c.b16 %v1376, %v1368
  %v2065 = vpack.c.b16 %v1377, %v1369
  %v2066 = vpack.c.b16 %v1378, %v1370
  %v2067 = vpack.c.b16 %v1379, %v1371
  %v2068 = vpack.c.b16 %v1380, %v1372
  %v2069 = vpack.c.b16 %v1381, %v1373
  %v2070 = vpack.c.b16 %v1382, %v1374
  %v2071 = vpack.c.b16 %v1391, %v1383
  %v2072 = vpack.c.b16 %v1392, %v1384
  %v2073 = vpack.c.b16 %v1393, %v1385
  %v2074 = vpack.c.b16 %v1394, %v1386
  %v2075 = vpack.c.b16 %v1395, %v1387
  %v2076 = vpack.c.b16 %v1396, %v1388
  %v2077 = vpack.c.b16 %v1397, %v1389
  %v2078 = vpack.c.b16 %v1398, %v1390
  %v2079 = vpack.c.b16 %v1407, %v1399
  %v2080 = vpack.c.b16 %v1408, %v1400
  %v2081 = vpack.c.b16 %v1409, %v1401
  %v2082 = vpack.c.b16 %v1410, %v1402
  %v2083 = vpack.c.b16 %v1411, %v1403
  %v2084 = vpack.c.b16 %v1412, %v1404
  %v2085 = vpack.c.b16 %v1413, %v1405
  %v2086 = vpack.c.b16 %v1414, %v1406
  %v2087 = vpack.c.b16 %v1423, %v1415
  %v2088 = vpack.c.b16 %v1424, %v1416
  %v2089 = vpack.c.b16 %v1425, %v1417
  %v2090 = vpack.c.b16 %v1426, %v1418
  %v2091 = vpack.c.b16 %v1427, %v1419
  %v2092 = vpack.c.b16 %v1428, %v1420
  %v2093 = vpack.c.b16 %v1429, %v1421
  %v2094 = vpack.c.b16 %v1430, %v1422
  %v2095 = vpack.c.b16 %v1439, %v1431
  %v2096 = vpack.c.b16 %v1440, %v1432
  %v2097 = vpack.c.b16 %v1441, %v1433
  %v2098 = vpack.c.b16 %v1442, %v1434
  %v2099 = vpack.c.b16 %v1443, %v1435
  %v2100 = vpack.c.b16 %v1444, %v1436
  %v2101 = vpack.c.b16 %v1445, %v1437
  %v2102 = vpack.c.b16 %v1446, %v1438
  %v2103 = vpack.c.b16 %v1455, %v1447
  %v2104 = vpack.c.b16 %v1456, %v1448
  %v2105 = vpack.c.b16 %v1457, %v1449
  %v2106 = vpack.c.b16 %v1458, %v1450
  %v2107 = vpack.c.b16 %v1459, %v1451
  %v2108 = vpack.c.b16 %v1460, %v1452
  %v2109 = vpack.c.b16 %v1461, %v1453
  %v2110 = vpack.c.b16 %v1462, %v1454
  %v2111 = vpack.c.b16 %v1471, %v1463
  %v2112 = vpack.c.b16 %v1472, %v1464
  %v2113 = vpack.c.b16 %v1473, %v1465
  %v2114 = vpack.c.b16 %v1474, %v1466
  %v2115 = vpack.c.b16 %v1475, %v1467
  %v2116 = vpack.c.b16 %v1476, %v1468
  %v2117 = vpack.c.b16 %v1477, %v1469
  %v2118 = vpack.c.b16 %v1478, %v1470
  %v2119 = vpack.c.b16 %v1487, %v1479
  %v2120 = vpack.c.b16 %v1488, %v1480
  %v2121 = vpack.c.b16 %v1489, %v1481
  %v2122 = vpack.c.b16 %v1490, %v1482
  %v2123 = vpack.c.b16 %v1491, %v1483
  %v2124 = vpack.c.b16 %v1492, %v1484
  %v2125 = vpack.c.b16 %v1493, %v1485
  %v2126 = vpack.c.b16 %v1494, %v1486
  %v2127 = vpack.c.b16 %v1503, %v1495
  %v2128 = vpack.c.b16 %v1504, %v1496
  %v2129 = vpack.c.b16 %v1505, %v1497
  %v2130 = vpack.c.b16 %v1506, %v1498
  %v2131 = vpack.c.b16 %v1507, %v1499
  %v2132 = vpack.c.b16 %v1508, %v1500
  %v2133 = vpack.c.b16 %v1509, %v1501
  %v2134 = vpack.c.b16 %v1510, %v1502
  %v2135 = vpack.c.b16 %v1519, %v1511
  %v2136 = vpack.c.b16 %v1520, %v1512
  %v2137 = vpack.c.b16 %v1521, %v1513
  %v2138 = vpack.c.b16 %v1522, %v1514
  %v2139 = vpack.c.b16 %v1523, %v1515
  %v2140 = vpack.c.b16 %v1524, %v1516
  %v2141 = vpack.c.b16 %v1525, %v1517
  %v2142 = vpack.c.b16 %v1526, %v1518
  %v2143 = vpack.c.b16 %v1535, %v1527
  %v2144 = vpack.c.b16 %v1536, %v1528
  %v2145 = vpack.c.b16 %v1537, %v1529
  %v2146 = vpack.c.b16 %v1538, %v1530
  %v2147 = vpack.c.b16 %v1539, %v1531
  %v2148 = vpack.c.b16 %v1540, %v1532
  %v2149 = vpack.c.b16 %v1541, %v1533
  %v2150 = vpack.c.b16 %v1542, %v1534
  %v2151 = vpack.c.b16 %v1551, %v1543
  %v2152 = vpack.c.b16 %v1552, %v1544
  %v2153 = vpack.c.b16 %v1553, %v1545
  %v2154 = vpack.c.b16 %v1554, %v1546
  %v2155 = vpack.c.b16 %v1555, %v1547
  %v2156 = vpack.c.b16 %v1556, %v1548
  %v2157 = vpack.c.b16 %v1557, %v1549
  %v2158 = vpack.c.b16 %v1558, %v1550
  %v2159 = vpack.c.b16 %v1567, %v1559
  %v2160 = vpack.c.b16 %v1568, %v1560
  %v2161 = vpack.c.b16 %v1569, %v1561
  %v2162 = vpack.c.b16 %v1570, %v1562
  %v2163 = vpack.c.b16 %v1571, %v1563
  %v2164 = vpack.c.b16 %v1572, %v1564
  %v2165 = vpack.c.b16 %v1573, %v1565
  %v2166 = vpack.c.b16 %v1574, %v1566
  %v2167 = vpack.c.b16 %v1583, %v1575
  %v2168 = vpack.c.b16 %v1584, %v1576
  %v2169 = vpack.c.b16 %v1585, %v1577
  %v2170 = vpack.c.b16 %v1586, %v1578
  %v2171 = vpack.c.b16 %v1587, %v1579
  %v2172 = vpack.c.b16 %v1588, %v1580
  %v2173 = vpack.c.b16 %v1589, %v1581
  %v2174 = vpack.c.b16 %v1590, %v1582
  %v2175 = vpack.c.b16 %v1599, %v1591
  %v2176 = vpack.c.b16 %v1600, %v1592
  %v2177 = vpack.c.b16 %v1601, %v1593
  %v2178 = vpack.c.b16 %v1602, %v1594
  %v2179 = vpack.c.b16 %v1603, %v1595
  %v2180 = vpack.c.b16 %v1604, %v1596
  %v2181 = vpack.c.b16 %v1605, %v1597
  %v2182 = vpack.c.b16 %v1606, %v1598
  %v2183 = vpack.c.b16 %v1615, %v1607
  %v2184 = vpack.c.b16 %v1616, %v1608
  %v2185 = vpack.c.b16 %v1617, %v1609
  %v2186 = vpack.c.b16 %v1618, %v1610
  %v2187 = vpack.c.b16 %v1619, %v1611
  %v2188 = vpack.c.b16 %v1620, %v1612
  %v2189 = vpack.c.b16 %v1621, %v1613
  %v2190 = vpack.c.b16 %v1622, %v1614
  %v2191 = vpack.c.b16 %v1631, %v1623
  %v2192 = vpack.c.b16 %v1632, %v1624
  %v2193 = vpack.c.b16 %v1633, %v1625
  %v2194 = vpack.c.b16 %v1634, %v1626
  %v2195 = vpack.c.b16 %v1635, %v1627
  %v2196 = vpack.c.b16 %v1636, %v1628
  %v2197 = vpack.c.b16 %v1637, %v1629
  %v2198 = vpack.c.b16 %v1638, %v1630
  %v2199 = vpack.c.b16 %v1647, %v1639
  %v2200 = vpack.c.b16 %v1648, %v1640
  %v2201 = vpack.c.b16 %v1649, %v1641
  %v2202 = vpack.c.b16 %v1650, %v1642
  %v2203 = vpack.c.b16 %v1651, %v1643
  %v2204 = vpack.c.b16 %v1652, %v1644
  %v2205 = vpack.c.b16 %v1653, %v1645
  %v2206 = vpack.c.b16 %v1654, %v1646
  %v2207 = vpack.c.b16 %v1663, %v1655
  %v2208 = vpack.c.b16 %v1664, %v1656
  %v2209 = vpack.c.b16 %v1665, %v1657
  %v2210 = vpack.c.b16 %v1666, %v1658
  %v2211 = vpack.c.b16 %v1667, %v1659
  %v2212 = vpack.c.b16 %v1668, %v1660
  %v2213 = vpack.c.b16 %v1669, %v1661
  %v2214 = vpack.c.b16 %v1670, %v1662
  %v2215 = vpack.c.b16 %v1679, %v1671
  %v2216 = vpack.c.b16 %v1680, %v1672
  %v2217 = vpack.c.b16 %v1681, %v1673
  %v2218 = vpack.c.b16 %v1682, %v1674
  %v2219 = vpack.c.b16 %v1683, %v1675
  %v2220 = vpack.c.b16 %v1684, %v1676
  %v2221 = vpack.c.b16 %v1685, %v1677
  %v2222 = vpack.c.b16 %v1686, %v1678
  %v2223 = vpack.c.b16 %v1695, %v1687
  %v2224 = vpack.c.b16 %v1696, %v1688
  %v2225 = vpack.c.b16 %v1697, %v1689
  %v2226 = vpack.c.b16 %v1698, %v1690
  %v2227 = vpack.c.b16 %v1699, %v1691
  %v2228 = vpack.c.b16 %v1700, %v1692
  %v2229 = vpack.c.b16 %v1701, %v1693
  %v2230 = vpack.c.b16 %v1702, %v1694
  %v2231 = vpack.c.b16 %v1711, %v1703
  %v2232 = vpack.c.b16 %v1712, %v1704
  %v2233 = vpack.c.b16 %v1713, %v1705
  %v2234 = vpack.c.b16 %v1714, %v1706
  %v2235 = vpack.c.b16 %v1715, %v1707
  %v2236 = vpack.c.b16 %v1716, %v1708
  %v2237 = vpack.c.b16 %v1717, %v1709
  %v2238 = vpack.c.b16 %v1718, %v1710
  %v2239 = vpack.c.b16 %v1727, %v1719
  %v2240 = vpack.c.b16 %v1728, %v1720
  %v2241 = vpack.c.b16 %v1729, %v1721
  %v2242 = vpack.c.b16 %v1730, %v1722
  %v2243 = vpack.c.b16 %v1731, %v1723
  %v2244 = vpack.c.b16 %v1732, %v1724
  %v2245 = vpack.c.b16 %v1733, %v1725
  %v2246 = vpack.c.b16 %v1734, %v1726
  %v2247 = vpack.c.b16 %v1743, %v1735
  %v2248 = vpack.c.b16 %v1744, %v1736
  %v2249 = vpack.c.b16 %v1745, %v1737
  %v2250 = vpack.c.b16 %v1746, %v1738
  %v2251 = vpack.c.b16 %v1747, %v1739
  %v2252 = vpack.c.b16 %v1748, %v1740
  %v2253 = vpack.c.b16 %v1749, %v1741
  %v2254 = vpack.c.b16 %v1750, %v1742
  %v2255 = vpack.c.b16 %v1759, %v1751
  %v2256 = vpack.c.b16 %v1760, %v1752
  %v2257 = vpack.c.b16 %v1761, %v1753
  %v2258 = vpack.c.b16 %v1762, %v1754
  %v2259 = vpack.c.b16 %v1763, %v1755
  %v2260 = vpack.c.b16 %v1764, %v1756
  %v2261 = vpack.c.b16 %v1765, %v1757
  %v2262 = vpack.c.b16 %v1766, %v1758
  %v2263 = vpack.c.b16 %v1775, %v1767
  %v2264 = vpack.c.b16 %v1776, %v1768
  %v2265 = vpack.c.b16 %v1777, %v1769
  %v2266 = vpack.c.b16 %v1778, %v1770
  %v2267 = vpack.c.b16 %v1779, %v1771
  %v2268 = vpack.c.b16 %v1780, %v1772
  %v2269 = vpack.c.b16 %v1781, %v1773
  %v2270 = vpack.c.b16 %v1782, %v1774
  %v2271 = vpack.c.b16 %v1791, %v1783
  %v2272 = vpack.c.b16 %v1792, %v1784
  %v2273 = vpack.c.b16 %v1793, %v1785
  %v2274 = vpack.c.b16 %v1794, %v1786
  %v2275 = vpack.c.b16 %v1795, %v1787
  %v2276 = vpack.c.b16 %v1796, %v1788
  %v2277 = vpack.c.b16 %v1797, %v1789
  %v2278 = vpack.c.b16 %v1798, %v1790
  %v2279 = vpack.c.b16 %v1807, %v1799
  %v2280 = vpack.c.b16 %v1808, %v1800
  %v2281 = vpack.c.b16 %v1809, %v1801
  %v2282 = vpack.c.b16 %v1810, %v1802
  %v2283 = vpack.c.b16 %v1811, %v1803
  %v2284 = vpack.c.b16 %v1812, %v1804
  %v2285 = vpack.c.b16 %v1813, %v1805
  %v2286 = vpack.c.b16 %v1814, %v1806
  %v2287 = vpack.c.b16 %v1823, %v1815
  %v2288 = vpack.c.b16 %v1824, %v1816
  %v2289 = vpack.c.b16 %v1825, %v1817
  %v2290 = vpack.c.b16 %v1826, %v1818
  %v2291 = vpack.c.b16 %v1827, %v1819
  %v2292 = vpack.c.b16 %v1828, %v1820
  %v2293 = vpack.c.b16 %v1829, %v1821
  %v2294 = vpack.c.b16 %v1830, %v1822
  %v2295 = vpack.c.b16 %v1839, %v1831
  %v2296 = vpack.c.b16 %v1840, %v1832
  %v2297 = vpack.c.b16 %v1841, %v1833
  %v2298 = vpack.c.b16 %v1842, %v1834
  %v2299 = vpack.c.b16 %v1843, %v1835
  %v2300 = vpack.c.b16 %v1844, %v1836
  %v2301 = vpack.c.b16 %v1845, %v1837
  %v2302 = vpack.c.b16 %v1846, %v1838
  %v2303 = vpack.c.b16 %v1855, %v1847
  %v2304 = vpack.c.b16 %v1856, %v1848
  %v2305 = vpack.c.b16 %v1857, %v1849
  %v2306 = vpack.c.b16 %v1858, %v1850
  %v2307 = vpack.c.b16 %v1859, %v1851
  %v2308 = vpack.c.b16 %v1860, %v1852
  %v2309 = vpack.c.b16 %v1861, %v1853
  %v2310 = vpack.c.b16 %v1862, %v1854
  %v2311 = vpack.c.b16 %v1871, %v1863
  %v2312 = vpack.c.b16 %v1872, %v1864
  %v2313 = vpack.c.b16 %v1873, %v1865
  %v2314 = vpack.c.b16 %v1874, %v1866
  %v2315 = vpack.c.b16 %v1875, %v1867
  %v2316 = vpack.c.b16 %v1876, %v1868
  %v2317 = vpack.c.b16 %v1877, %v1869
  %v2318 = vpack.c.b16 %v1878, %v1870
  %v2319 = vpack.c.b16 %v1887, %v1879
  %v2320 = vpack.c.b16 %v1888, %v1880
  %v2321 = vpack.c.b16 %v1889, %v1881
  %v2322 = vpack.c.b16 %v1890, %v1882
  %v2323 = vpack.c.b16 %v1891, %v1883
  %v2324 = vpack.c.b16 %v1892, %v1884
  %v2325 = vpack.c.b16 %v1893, %v1885
  %v2326 = vpack.c.b16 %v1894, %v1886
  %v2327 = vpack.c.b16 %v1903, %v1895
  %v2328 = vpack.c.b16 %v1904, %v1896
  %v2329 = vpack.c.b16 %v1905, %v1897
  %v2330 = vpack.c.b16 %v1906, %v1898
  %v2331 = vpack.c.b16 %v1907, %v1899
  %v2332 = vpack.c.b16 %v1908, %v1900
  %v2333 = vpack.c.b16 %v1909, %v1901
  %v2334 = vpack.c.b16 %v1910, %v1902
  %v2335 = vpack.c.b16 %v1919, %v1911
  %v2336 = vpack.c.b16 %v1920, %v1912
  %v2337 = vpack.c.b16 %v1921, %v1913
  %v2338 = vpack.c.b16 %v1922, %v1914
  %v2339 = vpack.c.b16 %v1923, %v1915
  %v2340 = vpack.c.b16 %v1924, %v1916
  %v2341 = vpack.c.b16 %v1925, %v1917
  %v2342 = vpack.c.b16 %v1926, %v1918
  %v2343 = vpack.c.b16 %v1935, %v1927
  %v2344 = vpack.c.b16 %v1936, %v1928
  %v2345 = vpack.c.b16 %v1937, %v1929
  %v2346 = vpack.c.b16 %v1938, %v1930
  %v2347 = vpack.c.b16 %v1939, %v1931
  %v2348 = vpack.c.b16 %v1940, %v1932
  %v2349 = vpack.c.b16 %v1941, %v1933
  %v2350 = vpack.c.b16 %v1942, %v1934
  %v2351 = vpack.c.b16 %v1951, %v1943
  %v2352 = vpack.c.b16 %v1952, %v1944
  %v2353 = vpack.c.b16 %v1953, %v1945
  %v2354 = vpack.c.b16 %v1954, %v1946
  %v2355 = vpack.c.b16 %v1955, %v1947
  %v2356 = vpack.c.b16 %v1956, %v1948
  %v2357 = vpack.c.b16 %v1957, %v1949
  %v2358 = vpack.c.b16 %v1958, %v1950
  %v2359 = vpack.c.b16 %v1967, %v1959
  %v2360 = vpack.c.b16 %v1968, %v1960
  %v2361 = vpack.c.b16 %v1969, %v1961
  %v2362 = vpack.c.b16 %v1970, %v1962
  %v2363 = vpack.c.b16 %v1971, %v1963
  %v2364 = vpack.c.b16 %v1972, %v1964
  %v2365 = vpack.c.b16 %v1973, %v1965
  %v2366 = vpack.c.b16 %v1974, %v1966
  %v2367 = vpack.c.b16 %v1983, %v1975
  %v2368 = vpack.c.b16 %v1984, %v1976
  %v2369 = vpack.c.b16 %v1985, %v1977
  %v2370 = vpack.c.b16 %v1986, %v1978
  %v2371 = vpack.c.b16 %v1987, %v1979
  %v2372 = vpack.c.b16 %v1988, %v1980
  %v2373 = vpack.c.b16 %v1989, %v1981
  %v2374 = vpack.c.b16 %v1990, %v1982
  %2759 = vmatprep.subr.bf16.mxu0 %v1992
  %2760 = vmatpush1.bf16.msra.mxu0 %v1991
  %2761 = vmatprep.subr.bf16.mxu0 %v2000
  %2762 = vmatpush1.bf16.msra.mxu0 %v1999
  %2763 = vmatprep.subr.bf16.mxu0 %v2008
  %2764 = vmatpush1.bf16.msra.mxu0 %v2007
  %2765 = vmatprep.subr.bf16.mxu0 %v2016
  %2766 = vmatpush1.bf16.msra.mxu0 %v2015
  %2767 = vmatprep.subr.bf16.mxu0 %v2024
  %2768 = vmatpush1.bf16.msra.mxu0 %v2023
  %2769 = vmatprep.subr.bf16.mxu0 %v2032
  %2770 = vmatpush1.bf16.msra.mxu0 %v2031
  %2771 = vmatprep.subr.bf16.mxu0 %v2040
  %2772 = vmatpush1.bf16.msra.mxu0 %v2039
  %2773 = vmatprep.subr.bf16.mxu0 %v2048
  %2774 = vmatpush1.bf16.msra.mxu0 %v2047
  %2775 = vmatprep.subr.bf16.mxu0 %v2056
  %2776 = vmatpush1.bf16.msra.mxu0 %v2055
  %2777 = vmatprep.subr.bf16.mxu0 %v2064
  %2778 = vmatpush1.bf16.msra.mxu0 %v2063
  %2779 = vmatprep.subr.bf16.mxu0 %v2072
  %2780 = vmatpush1.bf16.msra.mxu0 %v2071
  %2781 = vmatprep.subr.bf16.mxu0 %v2080
  %2782 = vmatpush1.bf16.msra.mxu0 %v2079
  %2783 = vmatprep.subr.bf16.mxu0 %v2088
  %2784 = vmatpush1.bf16.msra.mxu0 %v2087
  %2785 = vmatprep.subr.bf16.mxu0 %v2096
  %2786 = vmatpush1.bf16.msra.mxu0 %v2095
  %2787 = vmatprep.subr.bf16.mxu0 %v2104
  %2788 = vmatpush1.bf16.msra.mxu0 %v2103
  %2789 = vmatprep.subr.bf16.mxu0 %v2112
  %2790 = vmatpush1.bf16.msra.mxu0 %v2111
  %2791 = vmatprep.mubr.bf16.mxu0 %v828
  %2792 = vmatmul.mubr.bf16.gmra.mrb[0].mxu0 %v827
  %v2793 = vpop.f32.mrb[0].mxu0
  %v2794 = vadd.f32 %v781, %v2793
  %v2795 = vpop.f32.mrb[0].mxu0
  %v2796 = vadd.f32 %v785, %v2795
  %v2797 = vpop.f32.mrb[0].mxu0
  %v2798 = vpop.f32.mrb[0].mxu0
  %2799 = vdwg.mxu0
  %2800 = vmatprep.subr.bf16.mxu0 %v2120
  %2801 = vmatpush1.bf16.msra.mxu0 %v2119
  %2802 = vmatprep.subr.bf16.mxu0 %v2128
  %2803 = vmatpush1.bf16.msra.mxu0 %v2127
  %2804 = vmatprep.subr.bf16.mxu0 %v2136
  %2805 = vmatpush1.bf16.msra.mxu0 %v2135
  %2806 = vmatprep.subr.bf16.mxu0 %v2144
  %2807 = vmatpush1.bf16.msra.mxu0 %v2143
  %2808 = vmatprep.subr.bf16.mxu0 %v2152
  %2809 = vmatpush1.bf16.msra.mxu0 %v2151
  %2810 = vmatprep.subr.bf16.mxu0 %v2160
  %2811 = vmatpush1.bf16.msra.mxu0 %v2159
  %2812 = vmatprep.subr.bf16.mxu0 %v2168
  %2813 = vmatpush1.bf16.msra.mxu0 %v2167
  %2814 = vmatprep.subr.bf16.mxu0 %v2176
  %2815 = vmatpush1.bf16.msra.mxu0 %v2175
  %2816 = vmatprep.subr.bf16.mxu0 %v2184
  %2817 = vmatpush1.bf16.msra.mxu0 %v2183
  %2818 = vmatprep.subr.bf16.mxu0 %v2192
  %2819 = vmatpush1.bf16.msra.mxu0 %v2191
  %2820 = vmatprep.subr.bf16.mxu0 %v2200
  %2821 = vmatpush1.bf16.msra.mxu0 %v2199
  %2822 = vmatprep.subr.bf16.mxu0 %v2208
  %2823 = vmatpush1.bf16.msra.mxu0 %v2207
  %2824 = vmatprep.subr.bf16.mxu0 %v2216
  %2825 = vmatpush1.bf16.msra.mxu0 %v2215
  %2826 = vmatprep.subr.bf16.mxu0 %v2224
  %2827 = vmatpush1.bf16.msra.mxu0 %v2223
  %2828 = vmatprep.subr.bf16.mxu0 %v2232
  %2829 = vmatpush1.bf16.msra.mxu0 %v2231
  %2830 = vmatprep.subr.bf16.mxu0 %v2240
  %2831 = vmatpush1.bf16.msra.mxu0 %v2239
  %2832 = vmatprep.mubr.bf16.mxu0 %v830
  %2833 = vmatmul.mubr.bf16.gmra.mrb[0].mxu0 %v829
  %v2834 = vpop.f32.mrb[0].mxu0
  %v2835 = vadd.f32 %v2794, %v2834
  %v2836 = vpop.f32.mrb[0].mxu0
  %v2837 = vadd.f32 %v2796, %v2836
  %v2838 = vpop.f32.mrb[0].mxu0
  %v2839 = vpop.f32.mrb[0].mxu0
  %2840 = vdwg.mxu0
  %2841 = vmatprep.subr.bf16.mxu0 %v2248
  %2842 = vmatpush1.bf16.msra.mxu0 %v2247
  %2843 = vmatprep.subr.bf16.mxu0 %v2256
  %2844 = vmatpush1.bf16.msra.mxu0 %v2255
  %2845 = vmatprep.subr.bf16.mxu0 %v2264
  %2846 = vmatpush1.bf16.msra.mxu0 %v2263
  %2847 = vmatprep.subr.bf16.mxu0 %v2272
  %2848 = vmatpush1.bf16.msra.mxu0 %v2271
  %2849 = vmatprep.subr.bf16.mxu0 %v2280
  %2850 = vmatpush1.bf16.msra.mxu0 %v2279
  %2851 = vmatprep.subr.bf16.mxu0 %v2288
  %2852 = vmatpush1.bf16.msra.mxu0 %v2287
  %2853 = vmatprep.subr.bf16.mxu0 %v2296
  %2854 = vmatpush1.bf16.msra.mxu0 %v2295
  %2855 = vmatprep.subr.bf16.mxu0 %v2304
  %2856 = vmatpush1.bf16.msra.mxu0 %v2303
  %2857 = vmatprep.subr.bf16.mxu0 %v2312
  %2858 = vmatpush1.bf16.msra.mxu0 %v2311
  %2859 = vmatprep.subr.bf16.mxu0 %v2320
  %2860 = vmatpush1.bf16.msra.mxu0 %v2319
  %2861 = vmatprep.subr.bf16.mxu0 %v2328
  %2862 = vmatpush1.bf16.msra.mxu0 %v2327
  %2863 = vmatprep.subr.bf16.mxu0 %v2336
  %2864 = vmatpush1.bf16.msra.mxu0 %v2335
  %2865 = vmatprep.subr.bf16.mxu0 %v2344
  %2866 = vmatpush1.bf16.msra.mxu0 %v2343
  %2867 = vmatprep.subr.bf16.mxu0 %v2352
  %2868 = vmatpush1.bf16.msra.mxu0 %v2351
  %2869 = vmatprep.subr.bf16.mxu0 %v2360
  %2870 = vmatpush1.bf16.msra.mxu0 %v2359
  %2871 = vmatprep.subr.bf16.mxu0 %v2368
  %2872 = vmatpush1.bf16.msra.mxu0 %v2367
  %2873 = vmatprep.mubr.bf16.mxu0 %v832
  %2874 = vmatmul.mubr.bf16.gmra.mrb[0].mxu0 %v831
  %v2875 = vpop.f32.mrb[0].mxu0
  %v2876 = vadd.f32 %v2835, %v2875
  %v2877 = vpop.f32.mrb[0].mxu0
  %v2878 = vadd.f32 %v2837, %v2877
  %v2879 = vpop.f32.mrb[0].mxu0
  %v2880 = vpop.f32.mrb[0].mxu0
  %2881 = vdwg.mxu0
  %2882 = vmatprep.subr.bf16.mxu0 %v1994
  %2883 = vmatpush1.bf16.msra.mxu0 %v1993
  %2884 = vmatprep.subr.bf16.mxu0 %v2002
  %2885 = vmatpush1.bf16.msra.mxu0 %v2001
  %2886 = vmatprep.subr.bf16.mxu0 %v2010
  %2887 = vmatpush1.bf16.msra.mxu0 %v2009
  %2888 = vmatprep.subr.bf16.mxu0 %v2018
  %2889 = vmatpush1.bf16.msra.mxu0 %v2017
  %2890 = vmatprep.subr.bf16.mxu0 %v2026
  %2891 = vmatpush1.bf16.msra.mxu0 %v2025
  %2892 = vmatprep.subr.bf16.mxu0 %v2034
  %2893 = vmatpush1.bf16.msra.mxu0 %v2033
  %2894 = vmatprep.subr.bf16.mxu0 %v2042
  %2895 = vmatpush1.bf16.msra.mxu0 %v2041
  %2896 = vmatprep.subr.bf16.mxu0 %v2050
  %2897 = vmatpush1.bf16.msra.mxu0 %v2049
  %2898 = vmatprep.subr.bf16.mxu0 %v2058
  %2899 = vmatpush1.bf16.msra.mxu0 %v2057
  %2900 = vmatprep.subr.bf16.mxu0 %v2066
  %2901 = vmatpush1.bf16.msra.mxu0 %v2065
  %2902 = vmatprep.subr.bf16.mxu0 %v2074
  %2903 = vmatpush1.bf16.msra.mxu0 %v2073
  %2904 = vmatprep.subr.bf16.mxu0 %v2082
  %2905 = vmatpush1.bf16.msra.mxu0 %v2081
  %2906 = vmatprep.subr.bf16.mxu0 %v2090
  %2907 = vmatpush1.bf16.msra.mxu0 %v2089
  %2908 = vmatprep.subr.bf16.mxu0 %v2098
  %2909 = vmatpush1.bf16.msra.mxu0 %v2097
  %2910 = vmatprep.subr.bf16.mxu0 %v2106
  %2911 = vmatpush1.bf16.msra.mxu0 %v2105
  %2912 = vmatprep.subr.bf16.mxu0 %v2114
  %2913 = vmatpush1.bf16.msra.mxu0 %v2113
  %2914 = vmatprep.mubr.bf16.mxu0 %v828
  %2915 = vmatmul.mubr.bf16.gmra.mrb[0].mxu0 %v827
  %v2916 = vpop.f32.mrb[0].mxu0
  %v2917 = vadd.f32 %v789, %v2916
  %v2918 = vpop.f32.mrb[0].mxu0
  %v2919 = vadd.f32 %v793, %v2918
  %v2920 = vpop.f32.mrb[0].mxu0
  %v2921 = vpop.f32.mrb[0].mxu0
  %2922 = vdwg.mxu0
  %2923 = vmatprep.subr.bf16.mxu0 %v2122
  %2924 = vmatpush1.bf16.msra.mxu0 %v2121
  %2925 = vmatprep.subr.bf16.mxu0 %v2130
  %2926 = vmatpush1.bf16.msra.mxu0 %v2129
  %2927 = vmatprep.subr.bf16.mxu0 %v2138
  %2928 = vmatpush1.bf16.msra.mxu0 %v2137
  %2929 = vmatprep.subr.bf16.mxu0 %v2146
  %2930 = vmatpush1.bf16.msra.mxu0 %v2145
  %2931 = vmatprep.subr.bf16.mxu0 %v2154
  %2932 = vmatpush1.bf16.msra.mxu0 %v2153
  %2933 = vmatprep.subr.bf16.mxu0 %v2162
  %2934 = vmatpush1.bf16.msra.mxu0 %v2161
  %2935 = vmatprep.subr.bf16.mxu0 %v2170
  %2936 = vmatpush1.bf16.msra.mxu0 %v2169
  %2937 = vmatprep.subr.bf16.mxu0 %v2178
  %2938 = vmatpush1.bf16.msra.mxu0 %v2177
  %2939 = vmatprep.subr.bf16.mxu0 %v2186
  %2940 = vmatpush1.bf16.msra.mxu0 %v2185
  %2941 = vmatprep.subr.bf16.mxu0 %v2194
  %2942 = vmatpush1.bf16.msra.mxu0 %v2193
  %2943 = vmatprep.subr.bf16.mxu0 %v2202
  %2944 = vmatpush1.bf16.msra.mxu0 %v2201
  %2945 = vmatprep.subr.bf16.mxu0 %v2210
  %2946 = vmatpush1.bf16.msra.mxu0 %v2209
  %2947 = vmatprep.subr.bf16.mxu0 %v2218
  %2948 = vmatpush1.bf16.msra.mxu0 %v2217
  %2949 = vmatprep.subr.bf16.mxu0 %v2226
  %2950 = vmatpush1.bf16.msra.mxu0 %v2225
  %2951 = vmatprep.subr.bf16.mxu0 %v2234
  %2952 = vmatpush1.bf16.msra.mxu0 %v2233
  %2953 = vmatprep.subr.bf16.mxu0 %v2242
  %2954 = vmatpush1.bf16.msra.mxu0 %v2241
  %2955 = vmatprep.mubr.bf16.mxu0 %v830
  %2956 = vmatmul.mubr.bf16.gmra.mrb[0].mxu0 %v829
  %v2957 = vpop.f32.mrb[0].mxu0
  %v2958 = vadd.f32 %v2917, %v2957
  %v2959 = vpop.f32.mrb[0].mxu0
  %v2960 = vadd.f32 %v2919, %v2959
  %v2961 = vpop.f32.mrb[0].mxu0
  %v2962 = vpop.f32.mrb[0].mxu0
  %2963 = vdwg.mxu0
  %2964 = vmatprep.subr.bf16.mxu0 %v2250
  %2965 = vmatpush1.bf16.msra.mxu0 %v2249
  %2966 = vmatprep.subr.bf16.mxu0 %v2258
  %2967 = vmatpush1.bf16.msra.mxu0 %v2257
  %2968 = vmatprep.subr.bf16.mxu0 %v2266
  %2969 = vmatpush1.bf16.msra.mxu0 %v2265
  %2970 = vmatprep.subr.bf16.mxu0 %v2274
  %2971 = vmatpush1.bf16.msra.mxu0 %v2273
  %2972 = vmatprep.subr.bf16.mxu0 %v2282
  %2973 = vmatpush1.bf16.msra.mxu0 %v2281
  %2974 = vmatprep.subr.bf16.mxu0 %v2290
  %2975 = vmatpush1.bf16.msra.mxu0 %v2289
  %2976 = vmatprep.subr.bf16.mxu0 %v2298
  %2977 = vmatpush1.bf16.msra.mxu0 %v2297
  %2978 = vmatprep.subr.bf16.mxu0 %v2306
  %2979 = vmatpush1.bf16.msra.mxu0 %v2305
  %2980 = vmatprep.subr.bf16.mxu0 %v2314
  %2981 = vmatpush1.bf16.msra.mxu0 %v2313
  %2982 = vmatprep.subr.bf16.mxu0 %v2322
  %2983 = vmatpush1.bf16.msra.mxu0 %v2321
  %2984 = vmatprep.subr.bf16.mxu0 %v2330
  %2985 = vmatpush1.bf16.msra.mxu0 %v2329
  %2986 = vmatprep.subr.bf16.mxu0 %v2338
  %2987 = vmatpush1.bf16.msra.mxu0 %v2337
  %2988 = vmatprep.subr.bf16.mxu0 %v2346
  %2989 = vmatpush1.bf16.msra.mxu0 %v2345
  %2990 = vmatprep.subr.bf16.mxu0 %v2354
  %2991 = vmatpush1.bf16.msra.mxu0 %v2353
  %2992 = vmatprep.subr.bf16.mxu0 %v2362
  %2993 = vmatpush1.bf16.msra.mxu0 %v2361
  %2994 = vmatprep.subr.bf16.mxu0 %v2370
  %2995 = vmatpush1.bf16.msra.mxu0 %v2369
  %2996 = vmatprep.mubr.bf16.mxu0 %v832
  %2997 = vmatmul.mubr.bf16.gmra.mrb[0].mxu0 %v831
  %v2998 = vpop.f32.mrb[0].mxu0
  %v2999 = vadd.f32 %v2958, %v2998
  %v3000 = vpop.f32.mrb[0].mxu0
  %v3001 = vadd.f32 %v2960, %v3000
  %v3002 = vpop.f32.mrb[0].mxu0
  %v3003 = vpop.f32.mrb[0].mxu0
  %3004 = vdwg.mxu0
  %3005 = vmatprep.subr.bf16.mxu0 %v1996
  %3006 = vmatpush1.bf16.msra.mxu0 %v1995
  %3007 = vmatprep.subr.bf16.mxu0 %v2004
  %3008 = vmatpush1.bf16.msra.mxu0 %v2003
  %3009 = vmatprep.subr.bf16.mxu0 %v2012
  %3010 = vmatpush1.bf16.msra.mxu0 %v2011
  %3011 = vmatprep.subr.bf16.mxu0 %v2020
  %3012 = vmatpush1.bf16.msra.mxu0 %v2019
  %3013 = vmatprep.subr.bf16.mxu0 %v2028
  %3014 = vmatpush1.bf16.msra.mxu0 %v2027
  %3015 = vmatprep.subr.bf16.mxu0 %v2036
  %3016 = vmatpush1.bf16.msra.mxu0 %v2035
  %3017 = vmatprep.subr.bf16.mxu0 %v2044
  %3018 = vmatpush1.bf16.msra.mxu0 %v2043
  %3019 = vmatprep.subr.bf16.mxu0 %v2052
  %3020 = vmatpush1.bf16.msra.mxu0 %v2051
  %3021 = vmatprep.subr.bf16.mxu0 %v2060
  %3022 = vmatpush1.bf16.msra.mxu0 %v2059
  %3023 = vmatprep.subr.bf16.mxu0 %v2068
  %3024 = vmatpush1.bf16.msra.mxu0 %v2067
  %3025 = vmatprep.subr.bf16.mxu0 %v2076
  %3026 = vmatpush1.bf16.msra.mxu0 %v2075
  %3027 = vmatprep.subr.bf16.mxu0 %v2084
  %3028 = vmatpush1.bf16.msra.mxu0 %v2083
  %3029 = vmatprep.subr.bf16.mxu0 %v2092
  %3030 = vmatpush1.bf16.msra.mxu0 %v2091
  %3031 = vmatprep.subr.bf16.mxu0 %v2100
  %3032 = vmatpush1.bf16.msra.mxu0 %v2099
  %3033 = vmatprep.subr.bf16.mxu0 %v2108
  %3034 = vmatpush1.bf16.msra.mxu0 %v2107
  %3035 = vmatprep.subr.bf16.mxu0 %v2116
  %3036 = vmatpush1.bf16.msra.mxu0 %v2115
  %3037 = vmatprep.mubr.bf16.mxu0 %v828
  %3038 = vmatmul.mubr.bf16.gmra.mrb[0].mxu0 %v827
  %v3039 = vpop.f32.mrb[0].mxu0
  %v3040 = vadd.f32 %v797, %v3039
  %v3041 = vpop.f32.mrb[0].mxu0
  %v3042 = vadd.f32 %v801, %v3041
  %v3043 = vpop.f32.mrb[0].mxu0
  %v3044 = vpop.f32.mrb[0].mxu0
  %3045 = vdwg.mxu0
  %3046 = vmatprep.subr.bf16.mxu0 %v2124
  %3047 = vmatpush1.bf16.msra.mxu0 %v2123
  %3048 = vmatprep.subr.bf16.mxu0 %v2132
  %3049 = vmatpush1.bf16.msra.mxu0 %v2131
  %3050 = vmatprep.subr.bf16.mxu0 %v2140
  %3051 = vmatpush1.bf16.msra.mxu0 %v2139
  %3052 = vmatprep.subr.bf16.mxu0 %v2148
  %3053 = vmatpush1.bf16.msra.mxu0 %v2147
  %3054 = vmatprep.subr.bf16.mxu0 %v2156
  %3055 = vmatpush1.bf16.msra.mxu0 %v2155
  %3056 = vmatprep.subr.bf16.mxu0 %v2164
  %3057 = vmatpush1.bf16.msra.mxu0 %v2163
  %3058 = vmatprep.subr.bf16.mxu0 %v2172
  %3059 = vmatpush1.bf16.msra.mxu0 %v2171
  %3060 = vmatprep.subr.bf16.mxu0 %v2180
  %3061 = vmatpush1.bf16.msra.mxu0 %v2179
  %3062 = vmatprep.subr.bf16.mxu0 %v2188
  %3063 = vmatpush1.bf16.msra.mxu0 %v2187
  %3064 = vmatprep.subr.bf16.mxu0 %v2196
  %3065 = vmatpush1.bf16.msra.mxu0 %v2195
  %3066 = vmatprep.subr.bf16.mxu0 %v2204
  %3067 = vmatpush1.bf16.msra.mxu0 %v2203
  %3068 = vmatprep.subr.bf16.mxu0 %v2212
  %3069 = vmatpush1.bf16.msra.mxu0 %v2211
  %3070 = vmatprep.subr.bf16.mxu0 %v2220
  %3071 = vmatpush1.bf16.msra.mxu0 %v2219
  %3072 = vmatprep.subr.bf16.mxu0 %v2228
  %3073 = vmatpush1.bf16.msra.mxu0 %v2227
  %3074 = vmatprep.subr.bf16.mxu0 %v2236
  %3075 = vmatpush1.bf16.msra.mxu0 %v2235
  %3076 = vmatprep.subr.bf16.mxu0 %v2244
  %3077 = vmatpush1.bf16.msra.mxu0 %v2243
  %3078 = vmatprep.mubr.bf16.mxu0 %v830
  %3079 = vmatmul.mubr.bf16.gmra.mrb[0].mxu0 %v829
  %v3080 = vpop.f32.mrb[0].mxu0
  %v3081 = vadd.f32 %v3040, %v3080
  %v3082 = vpop.f32.mrb[0].mxu0
  %v3083 = vadd.f32 %v3042, %v3082
  %v3084 = vpop.f32.mrb[0].mxu0
  %v3085 = vpop.f32.mrb[0].mxu0
  %3086 = vdwg.mxu0
  %3087 = vmatprep.subr.bf16.mxu0 %v2252
  %3088 = vmatpush1.bf16.msra.mxu0 %v2251
  %3089 = vmatprep.subr.bf16.mxu0 %v2260
  %3090 = vmatpush1.bf16.msra.mxu0 %v2259
  %3091 = vmatprep.subr.bf16.mxu0 %v2268
  %3092 = vmatpush1.bf16.msra.mxu0 %v2267
  %3093 = vmatprep.subr.bf16.mxu0 %v2276
  %3094 = vmatpush1.bf16.msra.mxu0 %v2275
  %3095 = vmatprep.subr.bf16.mxu0 %v2284
  %3096 = vmatpush1.bf16.msra.mxu0 %v2283
  %3097 = vmatprep.subr.bf16.mxu0 %v2292
  %3098 = vmatpush1.bf16.msra.mxu0 %v2291
  %3099 = vmatprep.subr.bf16.mxu0 %v2300
  %3100 = vmatpush1.bf16.msra.mxu0 %v2299
  %3101 = vmatprep.subr.bf16.mxu0 %v2308
  %3102 = vmatpush1.bf16.msra.mxu0 %v2307
  %3103 = vmatprep.subr.bf16.mxu0 %v2316
  %3104 = vmatpush1.bf16.msra.mxu0 %v2315
  %3105 = vmatprep.subr.bf16.mxu0 %v2324
  %3106 = vmatpush1.bf16.msra.mxu0 %v2323
  %3107 = vmatprep.subr.bf16.mxu0 %v2332
  %3108 = vmatpush1.bf16.msra.mxu0 %v2331
  %3109 = vmatprep.subr.bf16.mxu0 %v2340
  %3110 = vmatpush1.bf16.msra.mxu0 %v2339
  %3111 = vmatprep.subr.bf16.mxu0 %v2348
  %3112 = vmatpush1.bf16.msra.mxu0 %v2347
  %3113 = vmatprep.subr.bf16.mxu0 %v2356
  %3114 = vmatpush1.bf16.msra.mxu0 %v2355
  %3115 = vmatprep.subr.bf16.mxu0 %v2364
  %3116 = vmatpush1.bf16.msra.mxu0 %v2363
  %3117 = vmatprep.subr.bf16.mxu0 %v2372
  %3118 = vmatpush1.bf16.msra.mxu0 %v2371
  %3119 = vmatprep.mubr.bf16.mxu0 %v832
  %3120 = vmatmul.mubr.bf16.gmra.mrb[0].mxu0 %v831
  %v3121 = vpop.f32.mrb[0].mxu0
  %v3122 = vadd.f32 %v3081, %v3121
  %v3123 = vpop.f32.mrb[0].mxu0
  %v3124 = vadd.f32 %v3083, %v3123
  %v3125 = vpop.f32.mrb[0].mxu0
  %v3126 = vpop.f32.mrb[0].mxu0
  %3127 = vdwg.mxu0
  %3128 = vmatprep.subr.bf16.mxu0 %v1998
  %3129 = vmatpush1.bf16.msra.mxu0 %v1997
  %3130 = vmatprep.subr.bf16.mxu0 %v2006
  %3131 = vmatpush1.bf16.msra.mxu0 %v2005
  %3132 = vmatprep.subr.bf16.mxu0 %v2014
  %3133 = vmatpush1.bf16.msra.mxu0 %v2013
  %3134 = vmatprep.subr.bf16.mxu0 %v2022
  %3135 = vmatpush1.bf16.msra.mxu0 %v2021
  %3136 = vmatprep.subr.bf16.mxu0 %v2030
  %3137 = vmatpush1.bf16.msra.mxu0 %v2029
  %3138 = vmatprep.subr.bf16.mxu0 %v2038
  %3139 = vmatpush1.bf16.msra.mxu0 %v2037
  %3140 = vmatprep.subr.bf16.mxu0 %v2046
  %3141 = vmatpush1.bf16.msra.mxu0 %v2045
  %3142 = vmatprep.subr.bf16.mxu0 %v2054
  %3143 = vmatpush1.bf16.msra.mxu0 %v2053
  %3144 = vmatprep.subr.bf16.mxu0 %v2062
  %3145 = vmatpush1.bf16.msra.mxu0 %v2061
  %3146 = vmatprep.subr.bf16.mxu0 %v2070
  %3147 = vmatpush1.bf16.msra.mxu0 %v2069
  %3148 = vmatprep.subr.bf16.mxu0 %v2078
  %3149 = vmatpush1.bf16.msra.mxu0 %v2077
  %3150 = vmatprep.subr.bf16.mxu0 %v2086
  %3151 = vmatpush1.bf16.msra.mxu0 %v2085
  %3152 = vmatprep.subr.bf16.mxu0 %v2094
  %3153 = vmatpush1.bf16.msra.mxu0 %v2093
  %3154 = vmatprep.subr.bf16.mxu0 %v2102
  %3155 = vmatpush1.bf16.msra.mxu0 %v2101
  %3156 = vmatprep.subr.bf16.mxu0 %v2110
  %3157 = vmatpush1.bf16.msra.mxu0 %v2109
  %3158 = vmatprep.subr.bf16.mxu0 %v2118
  %3159 = vmatpush1.bf16.msra.mxu0 %v2117
  %3160 = vmatprep.mubr.bf16.mxu0 %v828
  %3161 = vmatmul.mubr.bf16.gmra.mrb[0].mxu0 %v827
  %v3162 = vpop.f32.mrb[0].mxu0
  %v3163 = vadd.f32 %v805, %v3162
  %v3164 = vpop.f32.mrb[0].mxu0
  %v3165 = vadd.f32 %v809, %v3164
  %v3166 = vpop.f32.mrb[0].mxu0
  %v3167 = vpop.f32.mrb[0].mxu0
  %3168 = vdwg.mxu0
  %3169 = vmatprep.subr.bf16.mxu0 %v2126
  %3170 = vmatpush1.bf16.msra.mxu0 %v2125
  %3171 = vmatprep.subr.bf16.mxu0 %v2134
  %3172 = vmatpush1.bf16.msra.mxu0 %v2133
  %3173 = vmatprep.subr.bf16.mxu0 %v2142
  %3174 = vmatpush1.bf16.msra.mxu0 %v2141
  %3175 = vmatprep.subr.bf16.mxu0 %v2150
  %3176 = vmatpush1.bf16.msra.mxu0 %v2149
  %3177 = vmatprep.subr.bf16.mxu0 %v2158
  %3178 = vmatpush1.bf16.msra.mxu0 %v2157
  %3179 = vmatprep.subr.bf16.mxu0 %v2166
  %3180 = vmatpush1.bf16.msra.mxu0 %v2165
  %3181 = vmatprep.subr.bf16.mxu0 %v2174
  %3182 = vmatpush1.bf16.msra.mxu0 %v2173
  %3183 = vmatprep.subr.bf16.mxu0 %v2182
  %3184 = vmatpush1.bf16.msra.mxu0 %v2181
  %3185 = vmatprep.subr.bf16.mxu0 %v2190
  %3186 = vmatpush1.bf16.msra.mxu0 %v2189
  %3187 = vmatprep.subr.bf16.mxu0 %v2198
  %3188 = vmatpush1.bf16.msra.mxu0 %v2197
  %3189 = vmatprep.subr.bf16.mxu0 %v2206
  %3190 = vmatpush1.bf16.msra.mxu0 %v2205
  %3191 = vmatprep.subr.bf16.mxu0 %v2214
  %3192 = vmatpush1.bf16.msra.mxu0 %v2213
  %3193 = vmatprep.subr.bf16.mxu0 %v2222
  %3194 = vmatpush1.bf16.msra.mxu0 %v2221
  %3195 = vmatprep.subr.bf16.mxu0 %v2230
  %3196 = vmatpush1.bf16.msra.mxu0 %v2229
  %3197 = vmatprep.subr.bf16.mxu0 %v2238
  %3198 = vmatpush1.bf16.msra.mxu0 %v2237
  %3199 = vmatprep.subr.bf16.mxu0 %v2246
  %3200 = vmatpush1.bf16.msra.mxu0 %v2245
  %3201 = vmatprep.mubr.bf16.mxu0 %v830
  %3202 = vmatmul.mubr.bf16.gmra.mrb[0].mxu0 %v829
  %v3203 = vpop.f32.mrb[0].mxu0
  %v3204 = vadd.f32 %v3163, %v3203
  %v3205 = vpop.f32.mrb[0].mxu0
  %v3206 = vadd.f32 %v3165, %v3205
  %v3207 = vpop.f32.mrb[0].mxu0
  %v3208 = vpop.f32.mrb[0].mxu0
  %3209 = vdwg.mxu0
  %3210 = vmatprep.subr.bf16.mxu0 %v2254
  %3211 = vmatpush1.bf16.msra.mxu0 %v2253
  %3212 = vmatprep.subr.bf16.mxu0 %v2262
  %3213 = vmatpush1.bf16.msra.mxu0 %v2261
  %3214 = vmatprep.subr.bf16.mxu0 %v2270
  %3215 = vmatpush1.bf16.msra.mxu0 %v2269
  %3216 = vmatprep.subr.bf16.mxu0 %v2278
  %3217 = vmatpush1.bf16.msra.mxu0 %v2277
  %3218 = vmatprep.subr.bf16.mxu0 %v2286
  %3219 = vmatpush1.bf16.msra.mxu0 %v2285
  %3220 = vmatprep.subr.bf16.mxu0 %v2294
  %3221 = vmatpush1.bf16.msra.mxu0 %v2293
  %3222 = vmatprep.subr.bf16.mxu0 %v2302
  %3223 = vmatpush1.bf16.msra.mxu0 %v2301
  %3224 = vmatprep.subr.bf16.mxu0 %v2310
  %3225 = vmatpush1.bf16.msra.mxu0 %v2309
  %3226 = vmatprep.subr.bf16.mxu0 %v2318
  %3227 = vmatpush1.bf16.msra.mxu0 %v2317
  %3228 = vmatprep.subr.bf16.mxu0 %v2326
  %3229 = vmatpush1.bf16.msra.mxu0 %v2325
  %3230 = vmatprep.subr.bf16.mxu0 %v2334
  %3231 = vmatpush1.bf16.msra.mxu0 %v2333
  %3232 = vmatprep.subr.bf16.mxu0 %v2342
  %3233 = vmatpush1.bf16.msra.mxu0 %v2341
  %3234 = vmatprep.subr.bf16.mxu0 %v2350
  %3235 = vmatpush1.bf16.msra.mxu0 %v2349
  %3236 = vmatprep.subr.bf16.mxu0 %v2358
  %3237 = vmatpush1.bf16.msra.mxu0 %v2357
  %3238 = vmatprep.subr.bf16.mxu0 %v2366
  %3239 = vmatpush1.bf16.msra.mxu0 %v2365
  %3240 = vmatprep.subr.bf16.mxu0 %v2374
  %3241 = vmatpush1.bf16.msra.mxu0 %v2373
  %3242 = vmatprep.mubr.bf16.mxu0 %v832
  %3243 = vmatmul.mubr.bf16.gmra.mrb[0].mxu0 %v831
  %v3244 = vpop.f32.mrb[0].mxu0
  %v3245 = vadd.f32 %v3204, %v3244
  %v3246 = vpop.f32.mrb[0].mxu0
  %v3247 = vadd.f32 %v3206, %v3246
  %v3248 = vpop.f32.mrb[0].mxu0
  %v3249 = vpop.f32.mrb[0].mxu0
  %3250 = vdwg.mxu0
  %v3251 = vpack.c.bf16 %v2876, %v2876
  %v3252 = vpack.c.bf16 %v2878, %v2878
  %v3253 = vpack.c.bf16 %v2999, %v2999
  %v3254 = vpack.c.bf16 %v3001, %v3001
  %v3255 = vpack.c.bf16 %v3122, %v3122
  %v3256 = vpack.c.bf16 %v3124, %v3124
  %v3257 = vpack.c.bf16 %v3245, %v3245
  %v3258 = vpack.c.bf16 %v3247, %v3247
  %v3259 = vld [vmem:[%s25] sm:$0xf]
  %v3260 = vld [vmem:[%s25 + $0x4] sm:$0xf]
  %v3261 = vld [vmem:[%s25 + $0x8] sm:$0xf]
  %v3262 = vld [vmem:[%s25 + $0xc] sm:$0xf]
  %v3263 = vld [vmem:[%s25 + $0x10] sm:$0xf]
  %v3264 = vld [vmem:[%s25 + $0x14] sm:$0xf]
  %v3265 = vld [vmem:[%s25 + $0x18] sm:$0xf]
  %v3266 = vld [vmem:[%s25 + $0x1c] sm:$0xf]
  %v3267 = vld [vmem:[%s25 + $0x20] sm:$0xf]
  %v3268 = vld [vmem:[%s25 + $0x24] sm:$0xf]
  %v3269 = vld [vmem:[%s25 + $0x28] sm:$0xf]
  %v3270 = vld [vmem:[%s25 + $0x2c] sm:$0xf]
  %v3271 = vld [vmem:[%s25 + $0x30] sm:$0xf]
  %v3272 = vld [vmem:[%s25 + $0x34] sm:$0xf]
  %v3273 = vld [vmem:[%s25 + $0x38] sm:$0xf]
  %v3274 = vld [vmem:[%s25 + $0x3c] sm:$0xf]
  %v3275 = vld [vmem:[%s25 + $0x40] sm:$0xf]
  %v3276 = vld [vmem:[%s25 + $0x44] sm:$0xf]
  %v3277 = vld [vmem:[%s25 + $0x48] sm:$0xf]
  %v3278 = vld [vmem:[%s25 + $0x4c] sm:$0xf]
  %v3279 = vld [vmem:[%s25 + $0x50] sm:$0xf]
  %v3280 = vld [vmem:[%s25 + $0x54] sm:$0xf]
  %v3281 = vld [vmem:[%s25 + $0x58] sm:$0xf]
  %v3282 = vld [vmem:[%s25 + $0x5c] sm:$0xf]
  %v3283 = vld [vmem:[%s25 + $0x60] sm:$0xf]
  %v3284 = vld [vmem:[%s25 + $0x64] sm:$0xf]
  %v3285 = vld [vmem:[%s25 + $0x68] sm:$0xf]
  %v3286 = vld [vmem:[%s25 + $0x6c] sm:$0xf]
  %v3287 = vld [vmem:[%s25 + $0x70] sm:$0xf]
  %v3288 = vld [vmem:[%s25 + $0x74] sm:$0xf]
  %v3289 = vld [vmem:[%s25 + $0x78] sm:$0xf]
  %v3290 = vld [vmem:[%s25 + $0x7c] sm:$0xf]
  %v3291 = vld [vmem:[%s25 + $0x80] sm:$0xf]
  %v3292 = vld [vmem:[%s25 + $0x84] sm:$0xf]
  %v3293 = vld [vmem:[%s25 + $0x88] sm:$0xf]
  %v3294 = vld [vmem:[%s25 + $0x8c] sm:$0xf]
  %v3295 = vld [vmem:[%s25 + $0x90] sm:$0xf]
  %v3296 = vld [vmem:[%s25 + $0x94] sm:$0xf]
  %v3297 = vld [vmem:[%s25 + $0x98] sm:$0xf]
  %v3298 = vld [vmem:[%s25 + $0x9c] sm:$0xf]
  %v3299 = vld [vmem:[%s25 + $0xa0] sm:$0xf]
  %v3300 = vld [vmem:[%s25 + $0xa4] sm:$0xf]
  %v3301 = vld [vmem:[%s25 + $0xa8] sm:$0xf]
  %v3302 = vld [vmem:[%s25 + $0xac] sm:$0xf]
  %v3303 = vld [vmem:[%s25 + $0xb0] sm:$0xf]
  %v3304 = vld [vmem:[%s25 + $0xb4] sm:$0xf]
  %v3305 = vld [vmem:[%s25 + $0xb8] sm:$0xf]
  %v3306 = vld [vmem:[%s25 + $0xbc] sm:$0xf]
  %v3307 = vld [vmem:[%s25 + $0xc0] sm:$0xf]
  %v3308 = vld [vmem:[%s25 + $0xc4] sm:$0xf]
  %v3309 = vld [vmem:[%s25 + $0xc8] sm:$0xf]
  %v3310 = vld [vmem:[%s25 + $0xcc] sm:$0xf]
  %v3311 = vld [vmem:[%s25 + $0xd0] sm:$0xf]
  %v3312 = vld [vmem:[%s25 + $0xd4] sm:$0xf]
  %v3313 = vld [vmem:[%s25 + $0xd8] sm:$0xf]
  %v3314 = vld [vmem:[%s25 + $0xdc] sm:$0xf]
  %v3315 = vld [vmem:[%s25 + $0xe0] sm:$0xf]
  %v3316 = vld [vmem:[%s25 + $0xe4] sm:$0xf]
  %v3317 = vld [vmem:[%s25 + $0xe8] sm:$0xf]
  %v3318 = vld [vmem:[%s25 + $0xec] sm:$0xf]
  %v3319 = vld [vmem:[%s25 + $0xf0] sm:$0xf]
  %v3320 = vld [vmem:[%s25 + $0xf4] sm:$0xf]
  %v3321 = vld [vmem:[%s25 + $0xf8] sm:$0xf]
  %v3322 = vld [vmem:[%s25 + $0xfc] sm:$0xf]
  %v3323 = vld [vmem:[%s25 + $0x100] sm:$0xf]
  %v3324 = vld [vmem:[%s25 + $0x104] sm:$0xf]
  %v3325 = vld [vmem:[%s25 + $0x108] sm:$0xf]
  %v3326 = vld [vmem:[%s25 + $0x10c] sm:$0xf]
  %v3327 = vld [vmem:[%s25 + $0x110] sm:$0xf]
  %v3328 = vld [vmem:[%s25 + $0x114] sm:$0xf]
  %v3329 = vld [vmem:[%s25 + $0x118] sm:$0xf]
  %v3330 = vld [vmem:[%s25 + $0x11c] sm:$0xf]
  %v3331 = vld [vmem:[%s25 + $0x120] sm:$0xf]
  %v3332 = vld [vmem:[%s25 + $0x124] sm:$0xf]
  %v3333 = vld [vmem:[%s25 + $0x128] sm:$0xf]
  %v3334 = vld [vmem:[%s25 + $0x12c] sm:$0xf]
  %v3335 = vld [vmem:[%s25 + $0x130] sm:$0xf]
  %v3336 = vld [vmem:[%s25 + $0x134] sm:$0xf]
  %v3337 = vld [vmem:[%s25 + $0x138] sm:$0xf]
  %v3338 = vld [vmem:[%s25 + $0x13c] sm:$0xf]
  %v3339 = vld [vmem:[%s25 + $0x140] sm:$0xf]
  %v3340 = vld [vmem:[%s25 + $0x144] sm:$0xf]
  %v3341 = vld [vmem:[%s25 + $0x148] sm:$0xf]
  %v3342 = vld [vmem:[%s25 + $0x14c] sm:$0xf]
  %v3343 = vld [vmem:[%s25 + $0x150] sm:$0xf]
  %v3344 = vld [vmem:[%s25 + $0x154] sm:$0xf]
  %v3345 = vld [vmem:[%s25 + $0x158] sm:$0xf]
  %v3346 = vld [vmem:[%s25 + $0x15c] sm:$0xf]
  %v3347 = vld [vmem:[%s25 + $0x160] sm:$0xf]
  %v3348 = vld [vmem:[%s25 + $0x164] sm:$0xf]
  %v3349 = vld [vmem:[%s25 + $0x168] sm:$0xf]
  %v3350 = vld [vmem:[%s25 + $0x16c] sm:$0xf]
  %v3351 = vld [vmem:[%s25 + $0x170] sm:$0xf]
  %v3352 = vld [vmem:[%s25 + $0x174] sm:$0xf]
  %v3353 = vld [vmem:[%s25 + $0x178] sm:$0xf]
  %v3354 = vld [vmem:[%s25 + $0x17c] sm:$0xf]
  %v3355 = vld [vmem:[%s25 + $0x180] sm:$0xf]
  %v3356 = vld [vmem:[%s25 + $0x184] sm:$0xf]
  %v3357 = vld [vmem:[%s25 + $0x188] sm:$0xf]
  %v3358 = vld [vmem:[%s25 + $0x18c] sm:$0xf]
  %v3359 = vld [vmem:[%s25 + $0x190] sm:$0xf]
  %v3360 = vld [vmem:[%s25 + $0x194] sm:$0xf]
  %v3361 = vld [vmem:[%s25 + $0x198] sm:$0xf]
  %v3362 = vld [vmem:[%s25 + $0x19c] sm:$0xf]
  %v3363 = vld [vmem:[%s25 + $0x1a0] sm:$0xf]
  %v3364 = vld [vmem:[%s25 + $0x1a4] sm:$0xf]
  %v3365 = vld [vmem:[%s25 + $0x1a8] sm:$0xf]
  %v3366 = vld [vmem:[%s25 + $0x1ac] sm:$0xf]
  %v3367 = vld [vmem:[%s25 + $0x1b0] sm:$0xf]
  %v3368 = vld [vmem:[%s25 + $0x1b4] sm:$0xf]
  %v3369 = vld [vmem:[%s25 + $0x1b8] sm:$0xf]
  %v3370 = vld [vmem:[%s25 + $0x1bc] sm:$0xf]
  %v3371 = vld [vmem:[%s25 + $0x1c0] sm:$0xf]
  %v3372 = vld [vmem:[%s25 + $0x1c4] sm:$0xf]
  %v3373 = vld [vmem:[%s25 + $0x1c8] sm:$0xf]
  %v3374 = vld [vmem:[%s25 + $0x1cc] sm:$0xf]
  %v3375 = vld [vmem:[%s25 + $0x1d0] sm:$0xf]
  %v3376 = vld [vmem:[%s25 + $0x1d4] sm:$0xf]
  %v3377 = vld [vmem:[%s25 + $0x1d8] sm:$0xf]
  %v3378 = vld [vmem:[%s25 + $0x1dc] sm:$0xf]
  %v3379 = vld [vmem:[%s25 + $0x1e0] sm:$0xf]
  %v3380 = vld [vmem:[%s25 + $0x1e4] sm:$0xf]
  %v3381 = vld [vmem:[%s25 + $0x1e8] sm:$0xf]
  %v3382 = vld [vmem:[%s25 + $0x1ec] sm:$0xf]
  %v3383 = vld [vmem:[%s25 + $0x1f0] sm:$0xf]
  %v3384 = vld [vmem:[%s25 + $0x1f4] sm:$0xf]
  %v3385 = vld [vmem:[%s25 + $0x1f8] sm:$0xf]
  %v3386 = vld [vmem:[%s25 + $0x1fc] sm:$0xf]
  %v3387 = vld [vmem:[%s27] sm:$0x1]
  %v3389 = vlaneseq
  %v3390 = vshrl.u32 %v3389, 7
  %v3391 = vsub.s32 0, %v3390
  %v3392 = vrot.slane %v3387, %v3391
  %v3522 = vunpack.c.l.b16 %v3259
  %v3523 = vunpack.c.l.b16 %v3260
  %v3524 = vunpack.c.l.b16 %v3261
  %v3525 = vunpack.c.l.b16 %v3262
  %v3526 = vunpack.c.l.b16 %v3263
  %v3527 = vunpack.c.l.b16 %v3264
  %v3528 = vunpack.c.l.b16 %v3265
  %v3529 = vunpack.c.l.b16 %v3266
  %v3530 = vunpack.c.l.b16 %v3267
  %v3531 = vunpack.c.l.b16 %v3268
  %v3532 = vunpack.c.l.b16 %v3269
  %v3533 = vunpack.c.l.b16 %v3270
  %v3534 = vunpack.c.l.b16 %v3271
  %v3535 = vunpack.c.l.b16 %v3272
  %v3536 = vunpack.c.l.b16 %v3273
  %v3537 = vunpack.c.l.b16 %v3274
  %v3538 = vunpack.c.l.b16 %v3275
  %v3539 = vunpack.c.l.b16 %v3276
  %v3540 = vunpack.c.l.b16 %v3277
  %v3541 = vunpack.c.l.b16 %v3278
  %v3542 = vunpack.c.l.b16 %v3279
  %v3543 = vunpack.c.l.b16 %v3280
  %v3544 = vunpack.c.l.b16 %v3281
  %v3545 = vunpack.c.l.b16 %v3282
  %v3546 = vunpack.c.l.b16 %v3283
  %v3547 = vunpack.c.l.b16 %v3284
  %v3548 = vunpack.c.l.b16 %v3285
  %v3549 = vunpack.c.l.b16 %v3286
  %v3550 = vunpack.c.l.b16 %v3287
  %v3551 = vunpack.c.l.b16 %v3288
  %v3552 = vunpack.c.l.b16 %v3289
  %v3553 = vunpack.c.l.b16 %v3290
  %v3554 = vunpack.c.l.b16 %v3291
  %v3555 = vunpack.c.l.b16 %v3292
  %v3556 = vunpack.c.l.b16 %v3293
  %v3557 = vunpack.c.l.b16 %v3294
  %v3558 = vunpack.c.l.b16 %v3295
  %v3559 = vunpack.c.l.b16 %v3296
  %v3560 = vunpack.c.l.b16 %v3297
  %v3561 = vunpack.c.l.b16 %v3298
  %v3562 = vunpack.c.l.b16 %v3299
  %v3563 = vunpack.c.l.b16 %v3300
  %v3564 = vunpack.c.l.b16 %v3301
  %v3565 = vunpack.c.l.b16 %v3302
  %v3566 = vunpack.c.l.b16 %v3303
  %v3567 = vunpack.c.l.b16 %v3304
  %v3568 = vunpack.c.l.b16 %v3305
  %v3569 = vunpack.c.l.b16 %v3306
  %v3570 = vunpack.c.l.b16 %v3307
  %v3571 = vunpack.c.l.b16 %v3308
  %v3572 = vunpack.c.l.b16 %v3309
  %v3573 = vunpack.c.l.b16 %v3310
  %v3574 = vunpack.c.l.b16 %v3311
  %v3575 = vunpack.c.l.b16 %v3312
  %v3576 = vunpack.c.l.b16 %v3313
  %v3577 = vunpack.c.l.b16 %v3314
  %v3578 = vunpack.c.l.b16 %v3315
  %v3579 = vunpack.c.l.b16 %v3316
  %v3580 = vunpack.c.l.b16 %v3317
  %v3581 = vunpack.c.l.b16 %v3318
  %v3582 = vunpack.c.l.b16 %v3319
  %v3583 = vunpack.c.l.b16 %v3320
  %v3584 = vunpack.c.l.b16 %v3321
  %v3585 = vunpack.c.l.b16 %v3322
  %v3586 = vunpack.c.l.b16 %v3323
  %v3587 = vunpack.c.l.b16 %v3324
  %v3588 = vunpack.c.l.b16 %v3325
  %v3589 = vunpack.c.l.b16 %v3326
  %v3590 = vunpack.c.l.b16 %v3327
  %v3591 = vunpack.c.l.b16 %v3328
  %v3592 = vunpack.c.l.b16 %v3329
  %v3593 = vunpack.c.l.b16 %v3330
  %v3594 = vunpack.c.l.b16 %v3331
  %v3595 = vunpack.c.l.b16 %v3332
  %v3596 = vunpack.c.l.b16 %v3333
  %v3597 = vunpack.c.l.b16 %v3334
  %v3598 = vunpack.c.l.b16 %v3335
  %v3599 = vunpack.c.l.b16 %v3336
  %v3600 = vunpack.c.l.b16 %v3337
  %v3601 = vunpack.c.l.b16 %v3338
  %v3602 = vunpack.c.l.b16 %v3339
  %v3603 = vunpack.c.l.b16 %v3340
  %v3604 = vunpack.c.l.b16 %v3341
  %v3605 = vunpack.c.l.b16 %v3342
  %v3606 = vunpack.c.l.b16 %v3343
  %v3607 = vunpack.c.l.b16 %v3344
  %v3608 = vunpack.c.l.b16 %v3345
  %v3609 = vunpack.c.l.b16 %v3346
  %v3610 = vunpack.c.l.b16 %v3347
  %v3611 = vunpack.c.l.b16 %v3348
  %v3612 = vunpack.c.l.b16 %v3349
  %v3613 = vunpack.c.l.b16 %v3350
  %v3614 = vunpack.c.l.b16 %v3351
  %v3615 = vunpack.c.l.b16 %v3352
  %v3616 = vunpack.c.l.b16 %v3353
  %v3617 = vunpack.c.l.b16 %v3354
  %v3618 = vunpack.c.l.b16 %v3355
  %v3619 = vunpack.c.l.b16 %v3356
  %v3620 = vunpack.c.l.b16 %v3357
  %v3621 = vunpack.c.l.b16 %v3358
  %v3622 = vunpack.c.l.b16 %v3359
  %v3623 = vunpack.c.l.b16 %v3360
  %v3624 = vunpack.c.l.b16 %v3361
  %v3625 = vunpack.c.l.b16 %v3362
  %v3626 = vunpack.c.l.b16 %v3363
  %v3627 = vunpack.c.l.b16 %v3364
  %v3628 = vunpack.c.l.b16 %v3365
  %v3629 = vunpack.c.l.b16 %v3366
  %v3630 = vunpack.c.l.b16 %v3367
  %v3631 = vunpack.c.l.b16 %v3368
  %v3632 = vunpack.c.l.b16 %v3369
  %v3633 = vunpack.c.l.b16 %v3370
  %v3634 = vunpack.c.l.b16 %v3371
  %v3635 = vunpack.c.l.b16 %v3372
  %v3636 = vunpack.c.l.b16 %v3373
  %v3637 = vunpack.c.l.b16 %v3374
  %v3638 = vunpack.c.l.b16 %v3375
  %v3639 = vunpack.c.l.b16 %v3376
  %v3640 = vunpack.c.l.b16 %v3377
  %v3641 = vunpack.c.l.b16 %v3378
  %v3642 = vunpack.c.l.b16 %v3379
  %v3643 = vunpack.c.l.b16 %v3380
  %v3644 = vunpack.c.l.b16 %v3381
  %v3645 = vunpack.c.l.b16 %v3382
  %v3646 = vunpack.c.l.b16 %v3383
  %v3647 = vunpack.c.l.b16 %v3384
  %v3648 = vunpack.c.l.b16 %v3385
  %v3649 = vunpack.c.l.b16 %v3386
  %v3650 = vpack.c.b16 %v3523, %v3522
  %v3651 = vpack.c.b16 %v3525, %v3524
  %v3652 = vpack.c.b16 %v3527, %v3526
  %v3653 = vpack.c.b16 %v3529, %v3528
  %v3654 = vpack.c.b16 %v3531, %v3530
  %v3655 = vpack.c.b16 %v3533, %v3532
  %v3656 = vpack.c.b16 %v3535, %v3534
  %v3657 = vpack.c.b16 %v3537, %v3536
  %v3658 = vpack.c.b16 %v3539, %v3538
  %v3659 = vpack.c.b16 %v3541, %v3540
  %v3660 = vpack.c.b16 %v3543, %v3542
  %v3661 = vpack.c.b16 %v3545, %v3544
  %v3662 = vpack.c.b16 %v3547, %v3546
  %v3663 = vpack.c.b16 %v3549, %v3548
  %v3664 = vpack.c.b16 %v3551, %v3550
  %v3665 = vpack.c.b16 %v3553, %v3552
  %v3666 = vpack.c.b16 %v3555, %v3554
  %v3667 = vpack.c.b16 %v3557, %v3556
  %v3668 = vpack.c.b16 %v3559, %v3558
  %v3669 = vpack.c.b16 %v3561, %v3560
  %v3670 = vpack.c.b16 %v3563, %v3562
  %v3671 = vpack.c.b16 %v3565, %v3564
  %v3672 = vpack.c.b16 %v3567, %v3566
  %v3673 = vpack.c.b16 %v3569, %v3568
  %v3674 = vpack.c.b16 %v3571, %v3570
  %v3675 = vpack.c.b16 %v3573, %v3572
  %v3676 = vpack.c.b16 %v3575, %v3574
  %v3677 = vpack.c.b16 %v3577, %v3576
  %v3678 = vpack.c.b16 %v3579, %v3578
  %v3679 = vpack.c.b16 %v3581, %v3580
  %v3680 = vpack.c.b16 %v3583, %v3582
  %v3681 = vpack.c.b16 %v3585, %v3584
  %v3682 = vpack.c.b16 %v3587, %v3586
  %v3683 = vpack.c.b16 %v3589, %v3588
  %v3684 = vpack.c.b16 %v3591, %v3590
  %v3685 = vpack.c.b16 %v3593, %v3592
  %v3686 = vpack.c.b16 %v3595, %v3594
  %v3687 = vpack.c.b16 %v3597, %v3596
  %v3688 = vpack.c.b16 %v3599, %v3598
  %v3689 = vpack.c.b16 %v3601, %v3600
  %v3690 = vpack.c.b16 %v3603, %v3602
  %v3691 = vpack.c.b16 %v3605, %v3604
  %v3692 = vpack.c.b16 %v3607, %v3606
  %v3693 = vpack.c.b16 %v3609, %v3608
  %v3694 = vpack.c.b16 %v3611, %v3610
  %v3695 = vpack.c.b16 %v3613, %v3612
  %v3696 = vpack.c.b16 %v3615, %v3614
  %v3697 = vpack.c.b16 %v3617, %v3616
  %v3698 = vpack.c.b16 %v3619, %v3618
  %v3699 = vpack.c.b16 %v3621, %v3620
  %v3700 = vpack.c.b16 %v3623, %v3622
  %v3701 = vpack.c.b16 %v3625, %v3624
  %v3702 = vpack.c.b16 %v3627, %v3626
  %v3703 = vpack.c.b16 %v3629, %v3628
  %v3704 = vpack.c.b16 %v3631, %v3630
  %v3705 = vpack.c.b16 %v3633, %v3632
  %v3706 = vpack.c.b16 %v3635, %v3634
  %v3707 = vpack.c.b16 %v3637, %v3636
  %v3708 = vpack.c.b16 %v3639, %v3638
  %v3709 = vpack.c.b16 %v3641, %v3640
  %v3710 = vpack.c.b16 %v3643, %v3642
  %v3711 = vpack.c.b16 %v3645, %v3644
  %v3712 = vpack.c.b16 %v3647, %v3646
  %v3713 = vpack.c.b16 %v3649, %v3648
  %3778 = vmatprep.subr.bf16.mxu0 0
  %3779 = vmatpush1.bf16.msra.mxu0 %v3650
  %3780 = vmatprep.subr.bf16.mxu0 0
  %3781 = vmatpush1.bf16.msra.mxu0 %v3651
  %3782 = vmatprep.subr.bf16.mxu0 0
  %3783 = vmatpush1.bf16.msra.mxu0 %v3652
  %3784 = vmatprep.subr.bf16.mxu0 0
  %3785 = vmatpush1.bf16.msra.mxu0 %v3653
  %3786 = vmatprep.subr.bf16.mxu0 0
  %3787 = vmatpush1.bf16.msra.mxu0 %v3654
  %3788 = vmatprep.subr.bf16.mxu0 0
  %3789 = vmatpush1.bf16.msra.mxu0 %v3655
  %3790 = vmatprep.subr.bf16.mxu0 0
  %3791 = vmatpush1.bf16.msra.mxu0 %v3656
  %3792 = vmatprep.subr.bf16.mxu0 0
  %3793 = vmatpush1.bf16.msra.mxu0 %v3657
  %3794 = vmatprep.subr.bf16.mxu0 0
  %3795 = vmatpush1.bf16.msra.mxu0 %v3658
  %3796 = vmatprep.subr.bf16.mxu0 0
  %3797 = vmatpush1.bf16.msra.mxu0 %v3659
  %3798 = vmatprep.subr.bf16.mxu0 0
  %3799 = vmatpush1.bf16.msra.mxu0 %v3660
  %3800 = vmatprep.subr.bf16.mxu0 0
  %3801 = vmatpush1.bf16.msra.mxu0 %v3661
  %3802 = vmatprep.subr.bf16.mxu0 0
  %3803 = vmatpush1.bf16.msra.mxu0 %v3662
  %3804 = vmatprep.subr.bf16.mxu0 0
  %3805 = vmatpush1.bf16.msra.mxu0 %v3663
  %3806 = vmatprep.subr.bf16.mxu0 0
  %3807 = vmatpush1.bf16.msra.mxu0 %v3664
  %3808 = vmatprep.subr.bf16.mxu0 0
  %3809 = vmatpush1.bf16.msra.mxu0 %v3665
  %3810 = vmatprep.mubr.bf16.mxu0 %v3252
  %3811 = vmatmul.mubr.bf16.gmra.mrb[0].mxu0 %v3251
  %v3812 = vpop.f32.mrb[0].mxu0
  %v3813 = vadd.f32 %v3392, %v3812
  %v3814 = vpop.f32.mrb[0].mxu0
  %v3815 = vpop.f32.mrb[0].mxu0
  %v3816 = vpop.f32.mrb[0].mxu0
  %3817 = vdwg.mxu0
  %3818 = vmatprep.subr.bf16.mxu0 0
  %3819 = vmatpush1.bf16.msra.mxu0 %v3666
  %3820 = vmatprep.subr.bf16.mxu0 0
  %3821 = vmatpush1.bf16.msra.mxu0 %v3667
  %3822 = vmatprep.subr.bf16.mxu0 0
  %3823 = vmatpush1.bf16.msra.mxu0 %v3668
  %3824 = vmatprep.subr.bf16.mxu0 0
  %3825 = vmatpush1.bf16.msra.mxu0 %v3669
  %3826 = vmatprep.subr.bf16.mxu0 0
  %3827 = vmatpush1.bf16.msra.mxu0 %v3670
  %3828 = vmatprep.subr.bf16.mxu0 0
  %3829 = vmatpush1.bf16.msra.mxu0 %v3671
  %3830 = vmatprep.subr.bf16.mxu0 0
  %3831 = vmatpush1.bf16.msra.mxu0 %v3672
  %3832 = vmatprep.subr.bf16.mxu0 0
  %3833 = vmatpush1.bf16.msra.mxu0 %v3673
  %3834 = vmatprep.subr.bf16.mxu0 0
  %3835 = vmatpush1.bf16.msra.mxu0 %v3674
  %3836 = vmatprep.subr.bf16.mxu0 0
  %3837 = vmatpush1.bf16.msra.mxu0 %v3675
  %3838 = vmatprep.subr.bf16.mxu0 0
  %3839 = vmatpush1.bf16.msra.mxu0 %v3676
  %3840 = vmatprep.subr.bf16.mxu0 0
  %3841 = vmatpush1.bf16.msra.mxu0 %v3677
  %3842 = vmatprep.subr.bf16.mxu0 0
  %3843 = vmatpush1.bf16.msra.mxu0 %v3678
  %3844 = vmatprep.subr.bf16.mxu0 0
  %3845 = vmatpush1.bf16.msra.mxu0 %v3679
  %3846 = vmatprep.subr.bf16.mxu0 0
  %3847 = vmatpush1.bf16.msra.mxu0 %v3680
  %3848 = vmatprep.subr.bf16.mxu0 0
  %3849 = vmatpush1.bf16.msra.mxu0 %v3681
  %3850 = vmatprep.mubr.bf16.mxu0 %v3254
  %3851 = vmatmul.mubr.bf16.gmra.mrb[0].mxu0 %v3253
  %v3852 = vpop.f32.mrb[0].mxu0
  %v3853 = vadd.f32 %v3813, %v3852
  %v3854 = vpop.f32.mrb[0].mxu0
  %v3855 = vpop.f32.mrb[0].mxu0
  %v3856 = vpop.f32.mrb[0].mxu0
  %3857 = vdwg.mxu0
  %3858 = vmatprep.subr.bf16.mxu0 0
  %3859 = vmatpush1.bf16.msra.mxu0 %v3682
  %3860 = vmatprep.subr.bf16.mxu0 0
  %3861 = vmatpush1.bf16.msra.mxu0 %v3683
  %3862 = vmatprep.subr.bf16.mxu0 0
  %3863 = vmatpush1.bf16.msra.mxu0 %v3684
  %3864 = vmatprep.subr.bf16.mxu0 0
  %3865 = vmatpush1.bf16.msra.mxu0 %v3685
  %3866 = vmatprep.subr.bf16.mxu0 0
  %3867 = vmatpush1.bf16.msra.mxu0 %v3686
  %3868 = vmatprep.subr.bf16.mxu0 0
  %3869 = vmatpush1.bf16.msra.mxu0 %v3687
  %3870 = vmatprep.subr.bf16.mxu0 0
  %3871 = vmatpush1.bf16.msra.mxu0 %v3688
  %3872 = vmatprep.subr.bf16.mxu0 0
  %3873 = vmatpush1.bf16.msra.mxu0 %v3689
  %3874 = vmatprep.subr.bf16.mxu0 0
  %3875 = vmatpush1.bf16.msra.mxu0 %v3690
  %3876 = vmatprep.subr.bf16.mxu0 0
  %3877 = vmatpush1.bf16.msra.mxu0 %v3691
  %3878 = vmatprep.subr.bf16.mxu0 0
  %3879 = vmatpush1.bf16.msra.mxu0 %v3692
  %3880 = vmatprep.subr.bf16.mxu0 0
  %3881 = vmatpush1.bf16.msra.mxu0 %v3693
  %3882 = vmatprep.subr.bf16.mxu0 0
  %3883 = vmatpush1.bf16.msra.mxu0 %v3694
  %3884 = vmatprep.subr.bf16.mxu0 0
  %3885 = vmatpush1.bf16.msra.mxu0 %v3695
  %3886 = vmatprep.subr.bf16.mxu0 0
  %3887 = vmatpush1.bf16.msra.mxu0 %v3696
  %3888 = vmatprep.subr.bf16.mxu0 0
  %3889 = vmatpush1.bf16.msra.mxu0 %v3697
  %3890 = vmatprep.mubr.bf16.mxu0 %v3256
  %3891 = vmatmul.mubr.bf16.gmra.mrb[0].mxu0 %v3255
  %v3892 = vpop.f32.mrb[0].mxu0
  %v3893 = vadd.f32 %v3853, %v3892
  %v3894 = vpop.f32.mrb[0].mxu0
  %v3895 = vpop.f32.mrb[0].mxu0
  %v3896 = vpop.f32.mrb[0].mxu0
  %3897 = vdwg.mxu0
  %3898 = vmatprep.subr.bf16.mxu0 0
  %3899 = vmatpush1.bf16.msra.mxu0 %v3698
  %3900 = vmatprep.subr.bf16.mxu0 0
  %3901 = vmatpush1.bf16.msra.mxu0 %v3699
  %3902 = vmatprep.subr.bf16.mxu0 0
  %3903 = vmatpush1.bf16.msra.mxu0 %v3700
  %3904 = vmatprep.subr.bf16.mxu0 0
  %3905 = vmatpush1.bf16.msra.mxu0 %v3701
  %3906 = vmatprep.subr.bf16.mxu0 0
  %3907 = vmatpush1.bf16.msra.mxu0 %v3702
  %3908 = vmatprep.subr.bf16.mxu0 0
  %3909 = vmatpush1.bf16.msra.mxu0 %v3703
  %3910 = vmatprep.subr.bf16.mxu0 0
  %3911 = vmatpush1.bf16.msra.mxu0 %v3704
  %3912 = vmatprep.subr.bf16.mxu0 0
  %3913 = vmatpush1.bf16.msra.mxu0 %v3705
  %3914 = vmatprep.subr.bf16.mxu0 0
  %3915 = vmatpush1.bf16.msra.mxu0 %v3706
  %3916 = vmatprep.subr.bf16.mxu0 0
  %3917 = vmatpush1.bf16.msra.mxu0 %v3707
  %3918 = vmatprep.subr.bf16.mxu0 0
  %3919 = vmatpush1.bf16.msra.mxu0 %v3708
  %3920 = vmatprep.subr.bf16.mxu0 0
  %3921 = vmatpush1.bf16.msra.mxu0 %v3709
  %3922 = vmatprep.subr.bf16.mxu0 0
  %3923 = vmatpush1.bf16.msra.mxu0 %v3710
  %3924 = vmatprep.subr.bf16.mxu0 0
  %3925 = vmatpush1.bf16.msra.mxu0 %v3711
  %3926 = vmatprep.subr.bf16.mxu0 0
  %3927 = vmatpush1.bf16.msra.mxu0 %v3712
  %3928 = vmatprep.subr.bf16.mxu0 0
  %3929 = vmatpush1.bf16.msra.mxu0 %v3713
  %3930 = vmatprep.mubr.bf16.mxu0 %v3258
  %3931 = vmatmul.mubr.bf16.gmra.mrb[0].mxu0 %v3257
  %v3932 = vpop.f32.mrb[0].mxu0
  %v3933 = vadd.f32 %v3893, %v3932
  %v3934 = vpop.f32.mrb[0].mxu0
  %v3935 = vpop.f32.mrb[0].mxu0
  %v3936 = vpop.f32.mrb[0].mxu0
  %3937 = vdwg.mxu0
  %v3938 = vld [vmem:[%s5] sm:$0xf]
  %v3939 = vld [vmem:[%s29] sm:$0xf]
  %v3940 = vld [vmem:[%s29 + $0x4] sm:$0xf]
  %v3943 = vunpack.c.l.b16 %v3939
  %v3944 = vunpack.c.l.b16 %v3940
  %v3945 = vpack.c.b16 %v3944, %v3943
  %vm3947 = vcmask 130048
  %v3949 = vsel %vm3947, %v3938, 0
  %3951 = vmatprep.subr.bf16.mxu0 0
  %3952 = vmatpush1.bf16.msra.mxu0 %v3945
  %3953 = vmatprep.subr.bf16.mxu0 0
  %3954 = vmatpush1.bf16.msra.mxu0 0
  %3955 = vmatprep.subr.bf16.mxu0 0
  %3956 = vmatpush1.bf16.msra.mxu0 0
  %3957 = vmatprep.subr.bf16.mxu0 0
  %3958 = vmatpush1.bf16.msra.mxu0 0
  %3959 = vmatprep.subr.bf16.mxu0 0
  %3960 = vmatpush1.bf16.msra.mxu0 0
  %3961 = vmatprep.subr.bf16.mxu0 0
  %3962 = vmatpush1.bf16.msra.mxu0 0
  %3963 = vmatprep.subr.bf16.mxu0 0
  %3964 = vmatpush1.bf16.msra.mxu0 0
  %3965 = vmatprep.subr.bf16.mxu0 0
  %3966 = vmatpush1.bf16.msra.mxu0 0
  %3967 = vmatprep.subr.bf16.mxu0 0
  %3968 = vmatpush1.bf16.msra.mxu0 0
  %3969 = vmatprep.subr.bf16.mxu0 0
  %3970 = vmatpush1.bf16.msra.mxu0 0
  %3971 = vmatprep.subr.bf16.mxu0 0
  %3972 = vmatpush1.bf16.msra.mxu0 0
  %3973 = vmatprep.subr.bf16.mxu0 0
  %3974 = vmatpush1.bf16.msra.mxu0 0
  %3975 = vmatprep.subr.bf16.mxu0 0
  %3976 = vmatpush1.bf16.msra.mxu0 0
  %3977 = vmatprep.subr.bf16.mxu0 0
  %3978 = vmatpush1.bf16.msra.mxu0 0
  %3979 = vmatprep.subr.bf16.mxu0 0
  %3980 = vmatpush1.bf16.msra.mxu0 0
  %3981 = vmatprep.subr.bf16.mxu0 0
  %3982 = vmatpush1.bf16.msra.mxu0 0
  %3983 = vmatprep.mubr.bf16.mxu0 0
  %3984 = vmatmul.mubr.bf16.gmra.mrb[0].mxu0 %v3949
  %v3985 = vpop.f32.mrb[0].mxu0
  %v3986 = vadd.f32 0.0, %v3985
  %v3987 = vpop.f32.mrb[0].mxu0
  %v3988 = vpop.f32.mrb[0].mxu0
  %v3989 = vpop.f32.mrb[0].mxu0
  %3990 = vdwg.mxu0
  %v3991 = vld [vmem:[%s33] sm:$0xff]
  %v3992 = vld [vmem:[%s33 + $0x8] sm:$0xff]
  %v3993 = vld [vmem:[%s33 + $0x10] sm:$0xff]
  %v3994 = vld [vmem:[%s33 + $0x18] sm:$0xff]
  %v3995 = vld [vmem:[%s33 + $0x20] sm:$0xff]
  %v3996 = vld [vmem:[%s33 + $0x28] sm:$0xff]
  %v3997 = vld [vmem:[%s33 + $0x30] sm:$0xff]
  %v3998 = vld [vmem:[%s33 + $0x38] sm:$0xff]
  %v3999 = vld [vmem:[%s33 + $0x40] sm:$0xff]
  %v4000 = vld [vmem:[%s33 + $0x48] sm:$0xff]
  %v4001 = vld [vmem:[%s33 + $0x50] sm:$0xff]
  %v4002 = vld [vmem:[%s33 + $0x58] sm:$0xff]
  %v4003 = vld [vmem:[%s33 + $0x60] sm:$0xff]
  %v4004 = vld [vmem:[%s33 + $0x68] sm:$0xff]
  %v4005 = vld [vmem:[%s33 + $0x70] sm:$0xff]
  %v4006 = vld [vmem:[%s33 + $0x78] sm:$0xff]
  %4007 = vmatprep.subr.mxu0 0.0
  %4008 = vmatpush1.msra.mxu0 %v3991
  %4009 = vmatprep.subr.mxu0 0.0
  %4010 = vmatpush1.msra.mxu0 %v3992
  %4011 = vmatprep.subr.mxu0 0.0
  %4012 = vmatpush1.msra.mxu0 %v3993
  %4013 = vmatprep.subr.mxu0 0.0
  %4014 = vmatpush1.msra.mxu0 %v3994
  %4015 = vmatprep.subr.mxu0 0.0
  %4016 = vmatpush1.msra.mxu0 %v3995
  %4017 = vmatprep.subr.mxu0 0.0
  %4018 = vmatpush1.msra.mxu0 %v3996
  %4019 = vmatprep.subr.mxu0 0.0
  %4020 = vmatpush1.msra.mxu0 %v3997
  %4021 = vmatprep.subr.mxu0 0.0
  %4022 = vmatpush1.msra.mxu0 %v3998
  %4023 = vmatprep.subr.mxu0 0.0
  %4024 = vmatpush1.msra.mxu0 %v3999
  %4025 = vmatprep.subr.mxu0 0.0
  %4026 = vmatpush1.msra.mxu0 %v4000
  %4027 = vmatprep.subr.mxu0 0.0
  %4028 = vmatpush1.msra.mxu0 %v4001
  %4029 = vmatprep.subr.mxu0 0.0
  %4030 = vmatpush1.msra.mxu0 %v4002
  %4031 = vmatprep.subr.mxu0 0.0
  %4032 = vmatpush1.msra.mxu0 %v4003
  %4033 = vmatprep.subr.mxu0 0.0
  %4034 = vmatpush1.msra.mxu0 %v4004
  %4035 = vmatprep.subr.mxu0 0.0
  %4036 = vmatpush1.msra.mxu0 %v4005
  %4037 = vmatprep.subr.mxu0 0.0
  %4038 = vmatpush1.msra.mxu0 %v4006
  %4039 = vmatprep.subr.mxu0 0.0
  %4040 = vmatpush1.msra.mxu0 0.0
  %4041 = vmatprep.subr.mxu0 0.0
  %4042 = vmatpush1.msra.mxu0 0.0
  %4043 = vmatprep.subr.mxu0 0.0
  %4044 = vmatpush1.msra.mxu0 0.0
  %4045 = vmatprep.subr.mxu0 0.0
  %4046 = vmatpush1.msra.mxu0 0.0
  %4047 = vmatprep.subr.mxu0 0.0
  %4048 = vmatpush1.msra.mxu0 0.0
  %4049 = vmatprep.subr.mxu0 0.0
  %4050 = vmatpush1.msra.mxu0 0.0
  %4051 = vmatprep.subr.mxu0 0.0
  %4052 = vmatpush1.msra.mxu0 0.0
  %4053 = vmatprep.subr.mxu0 0.0
  %4054 = vmatpush1.msra.mxu0 0.0
  %4055 = vmatprep.subr.mxu0 0.0
  %4056 = vmatpush1.msra.mxu0 0.0
  %4057 = vmatprep.subr.mxu0 0.0
  %4058 = vmatpush1.msra.mxu0 0.0
  %4059 = vmatprep.subr.mxu0 0.0
  %4060 = vmatpush1.msra.mxu0 0.0
  %4061 = vmatprep.subr.mxu0 0.0
  %4062 = vmatpush1.msra.mxu0 0.0
  %4063 = vmatprep.subr.mxu0 0.0
  %4064 = vmatpush1.msra.mxu0 0.0
  %4065 = vmatprep.subr.mxu0 0.0
  %4066 = vmatpush1.msra.mxu0 0.0
  %4067 = vmatprep.subr.mxu0 0.0
  %4068 = vmatpush1.msra.mxu0 0.0
  %4069 = vmatprep.subr.mxu0 0.0
  %4070 = vmatpush1.msra.mxu0 0.0
  %4071 = vmatprep.mubr.f32.mxu0 0.0
  %4072 = vmatmul.mubr.f32.gmra.mrb[0].mxu0 %v3986
  %v4073 = vpop.f32.mrb[0].mxu0
  %v4074 = vadd.f32 0.0, %v4073
  %v4075 = vpop.f32.mrb[0].mxu0
  %4076 = vdwg.mxu0
  %v4077 = vld [vmem:[%s31] sm:$0xff]
  %4078 = vmatprep.subr.mxu0 0.0
  %4079 = vmatpush1.xpose.msra.mxu0 %v3986
  %4080 = vmatprep.subr.mxu0 0.0
  %4081 = vmatpush1.xpose.msra.mxu0 0.0
  %4082 = vmatprep.subr.mxu0 0.0
  %4083 = vmatpush1.xpose.msra.mxu0 0.0
  %4084 = vmatprep.subr.mxu0 0.0
  %4085 = vmatpush1.xpose.msra.mxu0 0.0
  %4086 = vmatprep.subr.mxu0 0.0
  %4087 = vmatpush1.xpose.msra.mxu0 0.0
  %4088 = vmatprep.subr.mxu0 0.0
  %4089 = vmatpush1.xpose.msra.mxu0 0.0
  %4090 = vmatprep.subr.mxu0 0.0
  %4091 = vmatpush1.xpose.msra.mxu0 0.0
  %4092 = vmatprep.subr.mxu0 0.0
  %4093 = vmatpush1.xpose.msra.mxu0 0.0
  %4094 = vmatprep.subr.mxu0 0.0
  %4095 = vmatpush1.xpose.msra.mxu0 0.0
  %4096 = vmatprep.subr.mxu0 0.0
  %4097 = vmatpush1.xpose.msra.mxu0 0.0
  %4098 = vmatprep.subr.mxu0 0.0
  %4099 = vmatpush1.xpose.msra.mxu0 0.0
  %4100 = vmatprep.subr.mxu0 0.0
  %4101 = vmatpush1.xpose.msra.mxu0 0.0
  %4102 = vmatprep.subr.mxu0 0.0
  %4103 = vmatpush1.xpose.msra.mxu0 0.0
  %4104 = vmatprep.subr.mxu0 0.0
  %4105 = vmatpush1.xpose.msra.mxu0 0.0
  %4106 = vmatprep.subr.mxu0 0.0
  %4107 = vmatpush1.xpose.msra.mxu0 0.0
  %4108 = vmatprep.subr.mxu0 0.0
  %4109 = vmatpush1.xpose.msra.mxu0 0.0
  %4110 = vmatprep.subr.mxu0 0.0
  %4111 = vmatpush1.xpose.msra.mxu0 0.0
  %4112 = vmatprep.subr.mxu0 0.0
  %4113 = vmatpush1.xpose.msra.mxu0 0.0
  %4114 = vmatprep.subr.mxu0 0.0
  %4115 = vmatpush1.xpose.msra.mxu0 0.0
  %4116 = vmatprep.subr.mxu0 0.0
  %4117 = vmatpush1.xpose.msra.mxu0 0.0
  %4118 = vmatprep.subr.mxu0 0.0
  %4119 = vmatpush1.xpose.msra.mxu0 0.0
  %4120 = vmatprep.subr.mxu0 0.0
  %4121 = vmatpush1.xpose.msra.mxu0 0.0
  %4122 = vmatprep.subr.mxu0 0.0
  %4123 = vmatpush1.xpose.msra.mxu0 0.0
  %4124 = vmatprep.subr.mxu0 0.0
  %4125 = vmatpush1.xpose.msra.mxu0 0.0
  %4126 = vmatprep.subr.mxu0 0.0
  %4127 = vmatpush1.xpose.msra.mxu0 0.0
  %4128 = vmatprep.subr.mxu0 0.0
  %4129 = vmatpush1.xpose.msra.mxu0 0.0
  %4130 = vmatprep.subr.mxu0 0.0
  %4131 = vmatpush1.xpose.msra.mxu0 0.0
  %4132 = vmatprep.subr.mxu0 0.0
  %4133 = vmatpush1.xpose.msra.mxu0 0.0
  %4134 = vmatprep.subr.mxu0 0.0
  %4135 = vmatpush1.xpose.msra.mxu0 0.0
  %4136 = vmatprep.subr.mxu0 0.0
  %4137 = vmatpush1.xpose.msra.mxu0 0.0
  %4138 = vmatprep.subr.mxu0 0.0
  %4139 = vmatpush1.xpose.msra.mxu0 0.0
  %4140 = vmatprep.subr.mxu0 0.0
  %4141 = vmatpush1.xpose.msra.mxu0 0.0
  %4142 = vmatprep.mubr.f32.mxu0 0.0
  %4143 = vmatmul.mubr.f32.gmra.mrb[0].mxu0 %v4077
  %v4144 = vpop.f32.mrb[0].mxu0
  %v4145 = vadd.f32 0.0, %v4144
  %v4146 = vpop.f32.mrb[0].mxu0
  %4147 = vdwg.mxu0
  %4149 = vset.pattern.permute.xlu0 0
  %4150 = vperm.xlu0 %4149, %v4074
  %v4151 = vpop.permute.xlu0 %4150
  %v4153 = vlaneseq
  %v4154 = vshrl.u32 %v4153, 7
  %v4155 = vsub.s32 0, %v4154
  %v4156 = vrot.slane %v4145, %v4155
  %v4157 = vadd.f32 %v4151, %v4156
  %4158 = vset.pattern.permute.xlu0 1
  %4159 = vperm.xlu0 %4158, %v4074
  %v4160 = vpop.permute.xlu0 %4159
  %v4162 = vlaneseq
  %v4163 = vshrl.u32 %v4162, 7
  %v4164 = vsub.s32 1, %v4163
  %v4165 = vrot.slane %v4145, %v4164
  %v4166 = vadd.f32 %v4160, %v4165
  %4167 = vset.pattern.permute.xlu0 2
  %4168 = vperm.xlu0 %4167, %v4074
  %v4169 = vpop.permute.xlu0 %4168
  %v4171 = vlaneseq
  %v4172 = vshrl.u32 %v4171, 7
  %v4173 = vsub.s32 2, %v4172
  %v4174 = vrot.slane %v4145, %v4173
  %v4175 = vadd.f32 %v4169, %v4174
  %4176 = vset.pattern.permute.xlu0 3
  %4177 = vperm.xlu0 %4176, %v4074
  %v4178 = vpop.permute.xlu0 %4177
  %v4180 = vlaneseq
  %v4181 = vshrl.u32 %v4180, 7
  %v4182 = vsub.s32 3, %v4181
  %v4183 = vrot.slane %v4145, %v4182
  %v4184 = vadd.f32 %v4178, %v4183
  %vm4185 = vcmp.gt.f32.partialorder %v4157, 0.0
  %vm4186 = vcmp.gt.f32.partialorder %v4166, 0.0
  %vm4187 = vcmp.gt.f32.partialorder %v4175, 0.0
  %vm4188 = vcmp.gt.f32.partialorder %v4184, 0.0
  %v4189 = vmul.f32 %v4157, 0.2
  %v4190 = vmul.f32 %v4166, 0.2
  %v4191 = vmul.f32 %v4175, 0.2
  %v4192 = vmul.f32 %v4184, 0.2
  %v4193 = vsel %vm4185, %v4157, %v4189
  %v4194 = vsel %vm4186, %v4166, %v4190
  %v4195 = vsel %vm4187, %v4175, %v4191
  %v4196 = vsel %vm4188, %v4184, %v4192
  %v4197 = vld [vmem:[%s7] sm:$0xff]
  %v4198 = vld [vmem:[%s7 + $0x8] sm:$0xff]
  %v4199 = vld [vmem:[%s7 + $0x10] sm:$0xff]
  %v4200 = vld [vmem:[%s7 + $0x18] sm:$0xff]
  %v4201 = vadd.f32 %v4193, %v4197
  %v4202 = vadd.f32 %v4194, %v4198
  %v4203 = vadd.f32 %v4195, %v4199
  %v4204 = vadd.f32 %v4196, %v4200
  %v4205 = vsel %vm151, %v4201, -inf
  %4206 = vmax.xlane.f32.xlu0 %v4205
  %v4207 = vpop.xlane.xlu0 %4206
  %v4208 = vsel %vm151, %v4202, -inf
  %4209 = vmax.xlane.f32.xlu0 %v4208
  %v4210 = vpop.xlane.xlu0 %4209
  %v4211 = vsel %vm151, %v4203, -inf
  %4212 = vmax.xlane.f32.xlu0 %v4211
  %v4213 = vpop.xlane.xlu0 %4212
  %v4214 = vsel %vm151, %v4204, -inf
  %4215 = vmax.xlane.f32.xlu0 %v4214
  %v4216 = vpop.xlane.xlu0 %4215
  %v4217 = vsub.f32 %v4201, %v4207
  %v4218 = vsub.f32 %v4202, %v4210
  %v4219 = vsub.f32 %v4203, %v4213
  %v4220 = vsub.f32 %v4204, %v4216
  %v4221 = vmul.f32 %v4217, 1.442695
  %v4222 = vpow.pop %v4221
  %v4223 = vmul.f32 %v4218, 1.442695
  %v4224 = vpow.pop %v4223
  %v4225 = vmul.f32 %v4219, 1.442695
  %v4226 = vpow.pop %v4225
  %v4227 = vmul.f32 %v4220, 1.442695
  %v4228 = vpow.pop %v4227
  %v4229 = vsel %vm151, %v4222, 0.0
  %4230 = vadd.xlane.f32.xlu0 %v4229
  %v4231 = vpop.xlane.xlu0 %4230
  %v4232 = vsel %vm151, %v4224, 0.0
  %4233 = vadd.xlane.f32.xlu0 %v4232
  %v4234 = vpop.xlane.xlu0 %4233
  %v4235 = vsel %vm151, %v4226, 0.0
  %4236 = vadd.xlane.f32.xlu0 %v4235
  %v4237 = vpop.xlane.xlu0 %4236
  %v4238 = vsel %vm151, %v4228, 0.0
  %4239 = vadd.xlane.f32.xlu0 %v4238
  %v4240 = vpop.xlane.xlu0 %4239
  %v4241 = vrcp.pop %v4231
  %v4242 = vmul.f32 %v4222, %v4241
  %v4243 = vrcp.pop %v4234
  %v4244 = vmul.f32 %v4224, %v4243
  %v4245 = vrcp.pop %v4237
  %v4246 = vmul.f32 %v4226, %v4245
  %v4247 = vrcp.pop %v4240
  %v4248 = vmul.f32 %v4228, %v4247
  %v4250 = vsel %vm151, %v4242, 0
  %v4253 = vsel %vm151, %v4244, 0
  %v4256 = vsel %vm151, %v4246, 0
  %v4259 = vsel %vm151, %v4248, 0
  %4261 = vmatprep.subr.mxu0 0.0
  %4262 = vmatpush1.msra.mxu0 %v3986
  %4263 = vmatprep.subr.mxu0 0.0
  %4264 = vmatpush1.msra.mxu0 0.0
  %4265 = vmatprep.subr.mxu0 0.0
  %4266 = vmatpush1.msra.mxu0 0.0
  %4267 = vmatprep.subr.mxu0 0.0
  %4268 = vmatpush1.msra.mxu0 0.0
  %4269 = vmatprep.subr.mxu0 0.0
  %4270 = vmatpush1.msra.mxu0 0.0
  %4271 = vmatprep.subr.mxu0 0.0
  %4272 = vmatpush1.msra.mxu0 0.0
  %4273 = vmatprep.subr.mxu0 0.0
  %4274 = vmatpush1.msra.mxu0 0.0
  %4275 = vmatprep.subr.mxu0 0.0
  %4276 = vmatpush1.msra.mxu0 0.0
  %4277 = vmatprep.subr.mxu0 0.0
  %4278 = vmatpush1.msra.mxu0 0.0
  %4279 = vmatprep.subr.mxu0 0.0
  %4280 = vmatpush1.msra.mxu0 0.0
  %4281 = vmatprep.subr.mxu0 0.0
  %4282 = vmatpush1.msra.mxu0 0.0
  %4283 = vmatprep.subr.mxu0 0.0
  %4284 = vmatpush1.msra.mxu0 0.0
  %4285 = vmatprep.subr.mxu0 0.0
  %4286 = vmatpush1.msra.mxu0 0.0
  %4287 = vmatprep.subr.mxu0 0.0
  %4288 = vmatpush1.msra.mxu0 0.0
  %4289 = vmatprep.subr.mxu0 0.0
  %4290 = vmatpush1.msra.mxu0 0.0
  %4291 = vmatprep.subr.mxu0 0.0
  %4292 = vmatpush1.msra.mxu0 0.0
  %4293 = vmatprep.subr.mxu0 0.0
  %4294 = vmatpush1.msra.mxu0 0.0
  %4295 = vmatprep.subr.mxu0 0.0
  %4296 = vmatpush1.msra.mxu0 0.0
  %4297 = vmatprep.subr.mxu0 0.0
  %4298 = vmatpush1.msra.mxu0 0.0
  %4299 = vmatprep.subr.mxu0 0.0
  %4300 = vmatpush1.msra.mxu0 0.0
  %4301 = vmatprep.subr.mxu0 0.0
  %4302 = vmatpush1.msra.mxu0 0.0
  %4303 = vmatprep.subr.mxu0 0.0
  %4304 = vmatpush1.msra.mxu0 0.0
  %4305 = vmatprep.subr.mxu0 0.0
  %4306 = vmatpush1.msra.mxu0 0.0
  %4307 = vmatprep.subr.mxu0 0.0
  %4308 = vmatpush1.msra.mxu0 0.0
  %4309 = vmatprep.subr.mxu0 0.0
  %4310 = vmatpush1.msra.mxu0 0.0
  %4311 = vmatprep.subr.mxu0 0.0
  %4312 = vmatpush1.msra.mxu0 0.0
  %4313 = vmatprep.subr.mxu0 0.0
  %4314 = vmatpush1.msra.mxu0 0.0
  %4315 = vmatprep.subr.mxu0 0.0
  %4316 = vmatpush1.msra.mxu0 0.0
  %4317 = vmatprep.subr.mxu0 0.0
  %4318 = vmatpush1.msra.mxu0 0.0
  %4319 = vmatprep.subr.mxu0 0.0
  %4320 = vmatpush1.msra.mxu0 0.0
  %4321 = vmatprep.subr.mxu0 0.0
  %4322 = vmatpush1.msra.mxu0 0.0
  %4323 = vmatprep.subr.mxu0 0.0
  %4324 = vmatpush1.msra.mxu0 0.0
  %4325 = vmatprep.mubr.f32.mxu0 0.0
  %4326 = vmatmul.mubr.f32.gmra.mrb[0].mxu0 %v4250
  %v4327 = vpop.f32.mrb[0].mxu0
  %v4328 = vadd.f32 0.0, %v4327
  %v4329 = vpop.f32.mrb[0].mxu0
  %4330 = vmatprep.mubr.f32.mxu0 0.0
  %4331 = vmatmul.mubr.f32.gmra.mrb[0].mxu0 %v4253
  %v4332 = vpop.f32.mrb[0].mxu0
  %v4333 = vadd.f32 0.0, %v4332
  %v4334 = vpop.f32.mrb[0].mxu0
  %4335 = vmatprep.mubr.f32.mxu0 0.0
  %4336 = vmatmul.mubr.f32.gmra.mrb[0].mxu0 %v4256
  %v4337 = vpop.f32.mrb[0].mxu0
  %v4338 = vadd.f32 0.0, %v4337
  %v4339 = vpop.f32.mrb[0].mxu0
  %4340 = vmatprep.mubr.f32.mxu0 0.0
  %4341 = vmatmul.mubr.f32.gmra.mrb[0].mxu0 %v4259
  %v4342 = vpop.f32.mrb[0].mxu0
  %v4343 = vadd.f32 0.0, %v4342
  %v4344 = vpop.f32.mrb[0].mxu0
  %4345 = vdwg.mxu0
  %v4346 = vld [vmem:[%s9] sm:$0xff]
  %v4347 = vld [vmem:[%s9 + $0x8] sm:$0xff]
  %v4348 = vld [vmem:[%s9 + $0x10] sm:$0xff]
  %v4349 = vld [vmem:[%s9 + $0x18] sm:$0xff]
  %v4350 = vmul.f32 %v4328, %v4346
  %v4351 = vmul.f32 %v4333, %v4347
  %v4352 = vmul.f32 %v4338, %v4348
  %v4353 = vmul.f32 %v4343, %v4349
  %v4354 = vadd.f32 %v4350, %v4351
  %v4355 = vadd.f32 %v4354, %v4352
  %v4356 = vadd.f32 %v4355, %v4353
  %v4357 = vld [vmem:[%s35] sm:$0x1]
  %v4359 = vlaneseq
  %v4360 = vshrl.u32 %v4359, 7
  %v4361 = vsub.s32 0, %v4360
  %v4362 = vrot.slane %v4357, %v4361
  %v4364 = vadd.f32 %v4356, %v4362
  %v4365 = vpack.c.bf16 %v4364, %v4364
  %v4366 = vld [vmem:[%s37] sm:$0xf]
  %v4367 = vld [vmem:[%s37 + $0x4] sm:$0xf]
  %v4368 = vld [vmem:[%s37 + $0x8] sm:$0xf]
  %v4369 = vld [vmem:[%s37 + $0xc] sm:$0xf]
  %v4370 = vld [vmem:[%s37 + $0x10] sm:$0xf]
  %v4371 = vld [vmem:[%s37 + $0x14] sm:$0xf]
  %v4372 = vld [vmem:[%s37 + $0x18] sm:$0xf]
  %v4373 = vld [vmem:[%s37 + $0x1c] sm:$0xf]
  %v4374 = vld [vmem:[%s37 + $0x20] sm:$0xf]
  %v4375 = vld [vmem:[%s37 + $0x24] sm:$0xf]
  %v4376 = vld [vmem:[%s37 + $0x28] sm:$0xf]
  %v4377 = vld [vmem:[%s37 + $0x2c] sm:$0xf]
  %v4378 = vld [vmem:[%s37 + $0x30] sm:$0xf]
  %v4379 = vld [vmem:[%s37 + $0x34] sm:$0xf]
  %v4380 = vld [vmem:[%s37 + $0x38] sm:$0xf]
  %v4381 = vld [vmem:[%s37 + $0x3c] sm:$0xf]
  %v4398 = vunpack.c.l.b16 %v4366
  %v4399 = vunpack.c.l.b16 %v4367
  %v4400 = vunpack.c.l.b16 %v4368
  %v4401 = vunpack.c.l.b16 %v4369
  %v4402 = vunpack.c.l.b16 %v4370
  %v4403 = vunpack.c.l.b16 %v4371
  %v4404 = vunpack.c.l.b16 %v4372
  %v4405 = vunpack.c.l.b16 %v4373
  %v4406 = vunpack.c.l.b16 %v4374
  %v4407 = vunpack.c.l.b16 %v4375
  %v4408 = vunpack.c.l.b16 %v4376
  %v4409 = vunpack.c.l.b16 %v4377
  %v4410 = vunpack.c.l.b16 %v4378
  %v4411 = vunpack.c.l.b16 %v4379
  %v4412 = vunpack.c.l.b16 %v4380
  %v4413 = vunpack.c.l.b16 %v4381
  %v4414 = vpack.c.b16 %v4399, %v4398
  %v4415 = vpack.c.b16 %v4401, %v4400
  %v4416 = vpack.c.b16 %v4403, %v4402
  %v4417 = vpack.c.b16 %v4405, %v4404
  %v4418 = vpack.c.b16 %v4407, %v4406
  %v4419 = vpack.c.b16 %v4409, %v4408
  %v4420 = vpack.c.b16 %v4411, %v4410
  %v4421 = vpack.c.b16 %v4413, %v4412
  %4430 = vmatprep.subr.bf16.mxu0 0
  %4431 = vmatpush1.bf16.msra.mxu0 %v4414
  %4432 = vmatprep.subr.bf16.mxu0 0
  %4433 = vmatpush1.bf16.msra.mxu0 %v4415
  %4434 = vmatprep.subr.bf16.mxu0 0
  %4435 = vmatpush1.bf16.msra.mxu0 %v4416
  %4436 = vmatprep.subr.bf16.mxu0 0
  %4437 = vmatpush1.bf16.msra.mxu0 %v4417
  %4438 = vmatprep.subr.bf16.mxu0 0
  %4439 = vmatpush1.bf16.msra.mxu0 %v4418
  %4440 = vmatprep.subr.bf16.mxu0 0
  %4441 = vmatpush1.bf16.msra.mxu0 %v4419
  %4442 = vmatprep.subr.bf16.mxu0 0
  %4443 = vmatpush1.bf16.msra.mxu0 %v4420
  %4444 = vmatprep.subr.bf16.mxu0 0
  %4445 = vmatpush1.bf16.msra.mxu0 %v4421
  %4446 = vmatprep.subr.bf16.mxu0 0
  %4447 = vmatpush1.bf16.msra.mxu0 0
  %4448 = vmatprep.subr.bf16.mxu0 0
  %4449 = vmatpush1.bf16.msra.mxu0 0
  %4450 = vmatprep.subr.bf16.mxu0 0
  %4451 = vmatpush1.bf16.msra.mxu0 0
  %4452 = vmatprep.subr.bf16.mxu0 0
  %4453 = vmatpush1.bf16.msra.mxu0 0
  %4454 = vmatprep.subr.bf16.mxu0 0
  %4455 = vmatpush1.bf16.msra.mxu0 0
  %4456 = vmatprep.subr.bf16.mxu0 0
  %4457 = vmatpush1.bf16.msra.mxu0 0
  %4458 = vmatprep.subr.bf16.mxu0 0
  %4459 = vmatpush1.bf16.msra.mxu0 0
  %4460 = vmatprep.subr.bf16.mxu0 0
  %4461 = vmatpush1.bf16.msra.mxu0 0
  %4462 = vmatprep.mubr.bf16.mxu0 0
  %4463 = vmatmul.mubr.bf16.gmra.mrb[0].mxu0 %v4365
  %v4464 = vpop.f32.mrb[0].mxu0
  %v4465 = vadd.f32 0.0, %v4464
  %v4466 = vpop.f32.mrb[0].mxu0
  %v4467 = vpop.f32.mrb[0].mxu0
  %v4468 = vpop.f32.mrb[0].mxu0
  %4469 = vdwg.mxu0
  %v4470 = vld [vmem:[%s41] sm:$0xff]
  %v4471 = vld [vmem:[%s41 + $0x8] sm:$0xff]
  %v4472 = vld [vmem:[%s41 + $0x10] sm:$0xff]
  %v4473 = vld [vmem:[%s41 + $0x18] sm:$0xff]
  %v4474 = vld [vmem:[%s41 + $0x20] sm:$0xff]
  %v4475 = vld [vmem:[%s41 + $0x28] sm:$0xff]
  %v4476 = vld [vmem:[%s41 + $0x30] sm:$0xff]
  %v4477 = vld [vmem:[%s41 + $0x38] sm:$0xff]
  %vm4478 = vcmask 523264
  %v4480 = vsel %vm4478, %v4465, 0
  %4482 = vmatprep.subr.mxu0 0.0
  %4483 = vmatpush1.msra.mxu0 %v4470
  %4484 = vmatprep.subr.mxu0 0.0
  %4485 = vmatpush1.msra.mxu0 %v4471
  %4486 = vmatprep.subr.mxu0 0.0
  %4487 = vmatpush1.msra.mxu0 %v4472
  %4488 = vmatprep.subr.mxu0 0.0
  %4489 = vmatpush1.msra.mxu0 %v4473
  %4490 = vmatprep.subr.mxu0 0.0
  %4491 = vmatpush1.msra.mxu0 %v4474
  %4492 = vmatprep.subr.mxu0 0.0
  %4493 = vmatpush1.msra.mxu0 %v4475
  %4494 = vmatprep.subr.mxu0 0.0
  %4495 = vmatpush1.msra.mxu0 %v4476
  %4496 = vmatprep.subr.mxu0 0.0
  %4497 = vmatpush1.msra.mxu0 %v4477
  %4498 = vmatprep.subr.mxu0 0.0
  %4499 = vmatpush1.msra.mxu0 0.0
  %4500 = vmatprep.subr.mxu0 0.0
  %4501 = vmatpush1.msra.mxu0 0.0
  %4502 = vmatprep.subr.mxu0 0.0
  %4503 = vmatpush1.msra.mxu0 0.0
  %4504 = vmatprep.subr.mxu0 0.0
  %4505 = vmatpush1.msra.mxu0 0.0
  %4506 = vmatprep.subr.mxu0 0.0
  %4507 = vmatpush1.msra.mxu0 0.0
  %4508 = vmatprep.subr.mxu0 0.0
  %4509 = vmatpush1.msra.mxu0 0.0
  %4510 = vmatprep.subr.mxu0 0.0
  %4511 = vmatpush1.msra.mxu0 0.0
  %4512 = vmatprep.subr.mxu0 0.0
  %4513 = vmatpush1.msra.mxu0 0.0
  %4514 = vmatprep.subr.mxu0 0.0
  %4515 = vmatpush1.msra.mxu0 0.0
  %4516 = vmatprep.subr.mxu0 0.0
  %4517 = vmatpush1.msra.mxu0 0.0
  %4518 = vmatprep.subr.mxu0 0.0
  %4519 = vmatpush1.msra.mxu0 0.0
  %4520 = vmatprep.subr.mxu0 0.0
  %4521 = vmatpush1.msra.mxu0 0.0
  %4522 = vmatprep.subr.mxu0 0.0
  %4523 = vmatpush1.msra.mxu0 0.0
  %4524 = vmatprep.subr.mxu0 0.0
  %4525 = vmatpush1.msra.mxu0 0.0
  %4526 = vmatprep.subr.mxu0 0.0
  %4527 = vmatpush1.msra.mxu0 0.0
  %4528 = vmatprep.subr.mxu0 0.0
  %4529 = vmatpush1.msra.mxu0 0.0
  %4530 = vmatprep.subr.mxu0 0.0
  %4531 = vmatpush1.msra.mxu0 0.0
  %4532 = vmatprep.subr.mxu0 0.0
  %4533 = vmatpush1.msra.mxu0 0.0
  %4534 = vmatprep.subr.mxu0 0.0
  %4535 = vmatpush1.msra.mxu0 0.0
  %4536 = vmatprep.subr.mxu0 0.0
  %4537 = vmatpush1.msra.mxu0 0.0
  %4538 = vmatprep.subr.mxu0 0.0
  %4539 = vmatpush1.msra.mxu0 0.0
  %4540 = vmatprep.subr.mxu0 0.0
  %4541 = vmatpush1.msra.mxu0 0.0
  %4542 = vmatprep.subr.mxu0 0.0
  %4543 = vmatpush1.msra.mxu0 0.0
  %4544 = vmatprep.subr.mxu0 0.0
  %4545 = vmatpush1.msra.mxu0 0.0
  %4546 = vmatprep.mubr.f32.mxu0 0.0
  %4547 = vmatmul.mubr.f32.gmra.mrb[0].mxu0 %v4480
  %v4548 = vpop.f32.mrb[0].mxu0
  %v4549 = vadd.f32 0.0, %v4548
  %v4550 = vpop.f32.mrb[0].mxu0
  %4551 = vdwg.mxu0
  %v4552 = vld [vmem:[%s39] sm:$0xff]
  %v4554 = vsel %vm4478, %v4552, 0
  %4556 = vmatprep.subr.mxu0 0.0
  %4557 = vmatpush1.xpose.msra.mxu0 %v4480
  %4558 = vmatprep.subr.mxu0 0.0
  %4559 = vmatpush1.xpose.msra.mxu0 0.0
  %4560 = vmatprep.subr.mxu0 0.0
  %4561 = vmatpush1.xpose.msra.mxu0 0.0
  %4562 = vmatprep.subr.mxu0 0.0
  %4563 = vmatpush1.xpose.msra.mxu0 0.0
  %4564 = vmatprep.subr.mxu0 0.0
  %4565 = vmatpush1.xpose.msra.mxu0 0.0
  %4566 = vmatprep.subr.mxu0 0.0
  %4567 = vmatpush1.xpose.msra.mxu0 0.0
  %4568 = vmatprep.subr.mxu0 0.0
  %4569 = vmatpush1.xpose.msra.mxu0 0.0
  %4570 = vmatprep.subr.mxu0 0.0
  %4571 = vmatpush1.xpose.msra.mxu0 0.0
  %4572 = vmatprep.subr.mxu0 0.0
  %4573 = vmatpush1.xpose.msra.mxu0 0.0
  %4574 = vmatprep.subr.mxu0 0.0
  %4575 = vmatpush1.xpose.msra.mxu0 0.0
  %4576 = vmatprep.subr.mxu0 0.0
  %4577 = vmatpush1.xpose.msra.mxu0 0.0
  %4578 = vmatprep.subr.mxu0 0.0
  %4579 = vmatpush1.xpose.msra.mxu0 0.0
  %4580 = vmatprep.subr.mxu0 0.0
  %4581 = vmatpush1.xpose.msra.mxu0 0.0
  %4582 = vmatprep.subr.mxu0 0.0
  %4583 = vmatpush1.xpose.msra.mxu0 0.0
  %4584 = vmatprep.subr.mxu0 0.0
  %4585 = vmatpush1.xpose.msra.mxu0 0.0
  %4586 = vmatprep.subr.mxu0 0.0
  %4587 = vmatpush1.xpose.msra.mxu0 0.0
  %4588 = vmatprep.subr.mxu0 0.0
  %4589 = vmatpush1.xpose.msra.mxu0 0.0
  %4590 = vmatprep.subr.mxu0 0.0
  %4591 = vmatpush1.xpose.msra.mxu0 0.0
  %4592 = vmatprep.subr.mxu0 0.0
  %4593 = vmatpush1.xpose.msra.mxu0 0.0
  %4594 = vmatprep.subr.mxu0 0.0
  %4595 = vmatpush1.xpose.msra.mxu0 0.0
  %4596 = vmatprep.subr.mxu0 0.0
  %4597 = vmatpush1.xpose.msra.mxu0 0.0
  %4598 = vmatprep.subr.mxu0 0.0
  %4599 = vmatpush1.xpose.msra.mxu0 0.0
  %4600 = vmatprep.subr.mxu0 0.0
  %4601 = vmatpush1.xpose.msra.mxu0 0.0
  %4602 = vmatprep.subr.mxu0 0.0
  %4603 = vmatpush1.xpose.msra.mxu0 0.0
  %4604 = vmatprep.subr.mxu0 0.0
  %4605 = vmatpush1.xpose.msra.mxu0 0.0
  %4606 = vmatprep.subr.mxu0 0.0
  %4607 = vmatpush1.xpose.msra.mxu0 0.0
  %4608 = vmatprep.subr.mxu0 0.0
  %4609 = vmatpush1.xpose.msra.mxu0 0.0
  %4610 = vmatprep.subr.mxu0 0.0
  %4611 = vmatpush1.xpose.msra.mxu0 0.0
  %4612 = vmatprep.subr.mxu0 0.0
  %4613 = vmatpush1.xpose.msra.mxu0 0.0
  %4614 = vmatprep.subr.mxu0 0.0
  %4615 = vmatpush1.xpose.msra.mxu0 0.0
  %4616 = vmatprep.subr.mxu0 0.0
  %4617 = vmatpush1.xpose.msra.mxu0 0.0
  %4618 = vmatprep.subr.mxu0 0.0
  %4619 = vmatpush1.xpose.msra.mxu0 0.0
  %4620 = vmatprep.mubr.f32.mxu0 0.0
  %4621 = vmatmul.mubr.f32.gmra.mrb[0].mxu0 %v4554
  %v4622 = vpop.f32.mrb[0].mxu0
  %v4623 = vadd.f32 0.0, %v4622
  %v4624 = vpop.f32.mrb[0].mxu0
  %4625 = vdwg.mxu0
  %4627 = vset.pattern.permute.xlu0 0
  %4628 = vperm.xlu0 %4627, %v4549
  %v4629 = vpop.permute.xlu0 %4628
  %v4631 = vlaneseq
  %v4632 = vshrl.u32 %v4631, 7
  %v4633 = vsub.s32 0, %v4632
  %v4634 = vrot.slane %v4623, %v4633
  %v4635 = vadd.f32 %v4629, %v4634
  %4636 = vset.pattern.permute.xlu0 1
  %4637 = vperm.xlu0 %4636, %v4549
  %v4638 = vpop.permute.xlu0 %4637
  %v4640 = vlaneseq
  %v4641 = vshrl.u32 %v4640, 7
  %v4642 = vsub.s32 1, %v4641
  %v4643 = vrot.slane %v4623, %v4642
  %v4644 = vadd.f32 %v4638, %v4643
  %vm4645 = vcmp.gt.f32.partialorder %v4635, 0.0
  %vm4646 = vcmp.gt.f32.partialorder %v4644, 0.0
  %v4647 = vmul.f32 %v4635, 0.2
  %v4648 = vmul.f32 %v4644, 0.2
  %v4649 = vsel %vm4645, %v4635, %v4647
  %v4650 = vsel %vm4646, %v4644, %v4648
  %v4651 = vld [vmem:[%s7] sm:$0xff]
  %v4652 = vld [vmem:[%s7 + $0x8] sm:$0xff]
  %v4653 = vadd.f32 %v4649, %v4651
  %v4654 = vadd.f32 %v4650, %v4652
  %v4655 = vsel %vm151, %v4653, -inf
  %4656 = vmax.xlane.f32.xlu0 %v4655
  %v4657 = vpop.xlane.xlu0 %4656
  %v4658 = vsel %vm151, %v4654, -inf
  %4659 = vmax.xlane.f32.xlu0 %v4658
  %v4660 = vpop.xlane.xlu0 %4659
  %v4661 = vsub.f32 %v4653, %v4657
  %v4662 = vsub.f32 %v4654, %v4660
  %v4663 = vmul.f32 %v4661, 1.442695
  %v4664 = vpow.pop %v4663
  %v4665 = vmul.f32 %v4662, 1.442695
  %v4666 = vpow.pop %v4665
  %v4667 = vsel %vm151, %v4664, 0.0
  %4668 = vadd.xlane.f32.xlu0 %v4667
  %v4669 = vpop.xlane.xlu0 %4668
  %v4670 = vsel %vm151, %v4666, 0.0
  %4671 = vadd.xlane.f32.xlu0 %v4670
  %v4672 = vpop.xlane.xlu0 %4671
  %v4673 = vrcp.pop %v4669
  %v4674 = vmul.f32 %v4664, %v4673
  %v4675 = vrcp.pop %v4672
  %v4676 = vmul.f32 %v4666, %v4675
  %v4678 = vsel %vm151, %v4674, 0
  %v4681 = vsel %vm151, %v4676, 0
  %4683 = vmatprep.subr.mxu0 0.0
  %4684 = vmatpush1.msra.mxu0 %v4465
  %4685 = vmatprep.subr.mxu0 0.0
  %4686 = vmatpush1.msra.mxu0 0.0
  %4687 = vmatprep.subr.mxu0 0.0
  %4688 = vmatpush1.msra.mxu0 0.0
  %4689 = vmatprep.subr.mxu0 0.0
  %4690 = vmatpush1.msra.mxu0 0.0
  %4691 = vmatprep.subr.mxu0 0.0
  %4692 = vmatpush1.msra.mxu0 0.0
  %4693 = vmatprep.subr.mxu0 0.0
  %4694 = vmatpush1.msra.mxu0 0.0
  %4695 = vmatprep.subr.mxu0 0.0
  %4696 = vmatpush1.msra.mxu0 0.0
  %4697 = vmatprep.subr.mxu0 0.0
  %4698 = vmatpush1.msra.mxu0 0.0
  %4699 = vmatprep.subr.mxu0 0.0
  %4700 = vmatpush1.msra.mxu0 0.0
  %4701 = vmatprep.subr.mxu0 0.0
  %4702 = vmatpush1.msra.mxu0 0.0
  %4703 = vmatprep.subr.mxu0 0.0
  %4704 = vmatpush1.msra.mxu0 0.0
  %4705 = vmatprep.subr.mxu0 0.0
  %4706 = vmatpush1.msra.mxu0 0.0
  %4707 = vmatprep.subr.mxu0 0.0
  %4708 = vmatpush1.msra.mxu0 0.0
  %4709 = vmatprep.subr.mxu0 0.0
  %4710 = vmatpush1.msra.mxu0 0.0
  %4711 = vmatprep.subr.mxu0 0.0
  %4712 = vmatpush1.msra.mxu0 0.0
  %4713 = vmatprep.subr.mxu0 0.0
  %4714 = vmatpush1.msra.mxu0 0.0
  %4715 = vmatprep.subr.mxu0 0.0
  %4716 = vmatpush1.msra.mxu0 0.0
  %4717 = vmatprep.subr.mxu0 0.0
  %4718 = vmatpush1.msra.mxu0 0.0
  %4719 = vmatprep.subr.mxu0 0.0
  %4720 = vmatpush1.msra.mxu0 0.0
  %4721 = vmatprep.subr.mxu0 0.0
  %4722 = vmatpush1.msra.mxu0 0.0
  %4723 = vmatprep.subr.mxu0 0.0
  %4724 = vmatpush1.msra.mxu0 0.0
  %4725 = vmatprep.subr.mxu0 0.0
  %4726 = vmatpush1.msra.mxu0 0.0
  %4727 = vmatprep.subr.mxu0 0.0
  %4728 = vmatpush1.msra.mxu0 0.0
  %4729 = vmatprep.subr.mxu0 0.0
  %4730 = vmatpush1.msra.mxu0 0.0
  %4731 = vmatprep.subr.mxu0 0.0
  %4732 = vmatpush1.msra.mxu0 0.0
  %4733 = vmatprep.subr.mxu0 0.0
  %4734 = vmatpush1.msra.mxu0 0.0
  %4735 = vmatprep.subr.mxu0 0.0
  %4736 = vmatpush1.msra.mxu0 0.0
  %4737 = vmatprep.subr.mxu0 0.0
  %4738 = vmatpush1.msra.mxu0 0.0
  %4739 = vmatprep.subr.mxu0 0.0
  %4740 = vmatpush1.msra.mxu0 0.0
  %4741 = vmatprep.subr.mxu0 0.0
  %4742 = vmatpush1.msra.mxu0 0.0
  %4743 = vmatprep.subr.mxu0 0.0
  %4744 = vmatpush1.msra.mxu0 0.0
  %4745 = vmatprep.subr.mxu0 0.0
  %4746 = vmatpush1.msra.mxu0 0.0
  %4747 = vmatprep.mubr.f32.mxu0 0.0
  %4748 = vmatmul.mubr.f32.gmra.mrb[0].mxu0 %v4678
  %v4749 = vpop.f32.mrb[0].mxu0
  %v4750 = vadd.f32 0.0, %v4749
  %v4751 = vpop.f32.mrb[0].mxu0
  %4752 = vmatprep.mubr.f32.mxu0 0.0
  %4753 = vmatmul.mubr.f32.gmra.mrb[0].mxu0 %v4681
  %v4754 = vpop.f32.mrb[0].mxu0
  %v4755 = vadd.f32 0.0, %v4754
  %v4756 = vpop.f32.mrb[0].mxu0
  %4757 = vdwg.mxu0
  %v4758 = vld [vmem:[%s11] sm:$0xff]
  %v4759 = vld [vmem:[%s11 + $0x8] sm:$0xff]
  %v4760 = vmul.f32 %v4750, %v4758
  %v4761 = vmul.f32 %v4755, %v4759
  %v4762 = vadd.f32 %v4760, %v4761
  %4764 = vrot.lane.b32.xlu0 %v4762, 96
  %v4765 = vpop.permute.xlu0 %4764
  %v4767 = vadd.f32 %v4762, %v4765
  %v4768 = vmul.f32 %v4767, 0.5
  %v4769 = vld [vmem:[%s43] sm:$0x1]
  %v4771 = vlaneseq
  %v4772 = vshrl.u32 %v4771, 7
  %v4773 = vsub.s32 0, %v4772
  %v4774 = vrot.slane %v4769, %v4773
  %v4776 = vadd.f32 %v4768, %v4774
  %4778 = vrot.lane.b32.xlu0 %v3933, 32
  %v4779 = vpop.permute.xlu0 %4778
  %4782 = vrot.lane.b32.xlu0 %v4776, 64
  %v4783 = vpop.permute.xlu0 %4782
  %v4785 = vsel %vm289, %v386, %v4779
  %v4786 = vsel %vm4478, %v4785, %v4783
  %v4787 = vpack.c.bf16 %v4786, %v4786
  %v4788 = vld [vmem:[%s45] sm:$0xf]
  %v4789 = vld [vmem:[%s45 + $0x4] sm:$0xf]
  %v4790 = vld [vmem:[%s45 + $0x8] sm:$0xf]
  %v4791 = vld [vmem:[%s45 + $0xc] sm:$0xf]
  %v4792 = vld [vmem:[%s45 + $0x10] sm:$0xf]
  %v4793 = vld [vmem:[%s45 + $0x14] sm:$0xf]
  %v4794 = vld [vmem:[%s45 + $0x18] sm:$0xf]
  %v4795 = vld [vmem:[%s45 + $0x1c] sm:$0xf]
  %v4796 = vld [vmem:[%s45 + $0x20] sm:$0xf]
  %v4797 = vld [vmem:[%s45 + $0x24] sm:$0xf]
  %v4798 = vld [vmem:[%s45 + $0x28] sm:$0xf]
  %v4799 = vld [vmem:[%s45 + $0x2c] sm:$0xf]
  %v4800 = vld [vmem:[%s47] sm:$0x1]
  %v4802 = vlaneseq
  %v4803 = vshrl.u32 %v4802, 7
  %v4804 = vsub.s32 0, %v4803
  %v4805 = vrot.slane %v4800, %v4804
  %v4819 = vunpack.c.l.b16 %v4788
  %v4820 = vunpack.c.l.b16 %v4789
  %v4821 = vunpack.c.l.b16 %v4790
  %v4822 = vunpack.c.l.b16 %v4791
  %v4823 = vunpack.c.l.b16 %v4792
  %v4824 = vunpack.c.l.b16 %v4793
  %v4825 = vunpack.c.l.b16 %v4794
  %v4826 = vunpack.c.l.b16 %v4795
  %v4827 = vunpack.c.l.b16 %v4796
  %v4828 = vunpack.c.l.b16 %v4797
  %v4829 = vunpack.c.l.b16 %v4798
  %v4830 = vunpack.c.l.b16 %v4799
  %v4831 = vpack.c.b16 %v4820, %v4819
  %v4832 = vpack.c.b16 %v4822, %v4821
  %v4833 = vpack.c.b16 %v4824, %v4823
  %v4834 = vpack.c.b16 %v4826, %v4825
  %v4835 = vpack.c.b16 %v4828, %v4827
  %v4836 = vpack.c.b16 %v4830, %v4829
  %vm4843 = vcmask 785408
  %v4845 = vsel %vm4843, %v4787, 0
  %4847 = vmatprep.subr.bf16.mxu0 0
  %4848 = vmatpush1.bf16.msra.mxu0 %v4831
  %4849 = vmatprep.subr.bf16.mxu0 0
  %4850 = vmatpush1.bf16.msra.mxu0 %v4832
  %4851 = vmatprep.subr.bf16.mxu0 0
  %4852 = vmatpush1.bf16.msra.mxu0 %v4833
  %4853 = vmatprep.subr.bf16.mxu0 0
  %4854 = vmatpush1.bf16.msra.mxu0 %v4834
  %4855 = vmatprep.subr.bf16.mxu0 0
  %4856 = vmatpush1.bf16.msra.mxu0 %v4835
  %4857 = vmatprep.subr.bf16.mxu0 0
  %4858 = vmatpush1.bf16.msra.mxu0 %v4836
  %4859 = vmatprep.subr.bf16.mxu0 0
  %4860 = vmatpush1.bf16.msra.mxu0 0
  %4861 = vmatprep.subr.bf16.mxu0 0
  %4862 = vmatpush1.bf16.msra.mxu0 0
  %4863 = vmatprep.subr.bf16.mxu0 0
  %4864 = vmatpush1.bf16.msra.mxu0 0
  %4865 = vmatprep.subr.bf16.mxu0 0
  %4866 = vmatpush1.bf16.msra.mxu0 0
  %4867 = vmatprep.subr.bf16.mxu0 0
  %4868 = vmatpush1.bf16.msra.mxu0 0
  %4869 = vmatprep.subr.bf16.mxu0 0
  %4870 = vmatpush1.bf16.msra.mxu0 0
  %4871 = vmatprep.subr.bf16.mxu0 0
  %4872 = vmatpush1.bf16.msra.mxu0 0
  %4873 = vmatprep.subr.bf16.mxu0 0
  %4874 = vmatpush1.bf16.msra.mxu0 0
  %4875 = vmatprep.subr.bf16.mxu0 0
  %4876 = vmatpush1.bf16.msra.mxu0 0
  %4877 = vmatprep.subr.bf16.mxu0 0
  %4878 = vmatpush1.bf16.msra.mxu0 0
  %4879 = vmatprep.mubr.bf16.mxu0 0
  %4880 = vmatmul.mubr.bf16.gmra.mrb[0].mxu0 %v4845
  %v4881 = vpop.f32.mrb[0].mxu0
  %v4882 = vadd.f32 %v4805, %v4881
  %v4883 = vpop.f32.mrb[0].mxu0
  %v4884 = vpop.f32.mrb[0].mxu0
  %v4885 = vpop.f32.mrb[0].mxu0
  %4886 = vdwg.mxu0
  %v4887 = vmax.f32 %v4882, 0.0
  %v4888 = vpack.c.bf16 %v4887, %v4887
  %v4889 = vld [vmem:[%s49] sm:$0xf]
  %v4890 = vld [vmem:[%s49 + $0x4] sm:$0xf]
  %v4891 = vld [vmem:[%s49 + $0x8] sm:$0xf]
  %v4892 = vld [vmem:[%s49 + $0xc] sm:$0xf]
  %v4893 = vld [vmem:[%s51] sm:$0x1]
  %v4895 = vlaneseq
  %v4896 = vshrl.u32 %v4895, 7
  %v4897 = vsub.s32 0, %v4896
  %v4898 = vrot.slane %v4893, %v4897
  %v4904 = vunpack.c.l.b16 %v4889
  %v4905 = vunpack.c.l.b16 %v4890
  %v4906 = vunpack.c.l.b16 %v4891
  %v4907 = vunpack.c.l.b16 %v4892
  %v4908 = vpack.c.b16 %v4905, %v4904
  %v4909 = vpack.c.b16 %v4907, %v4906
  %v4913 = vsel %vm289, %v4888, 0
  %4915 = vmatprep.subr.bf16.mxu0 0
  %4916 = vmatpush1.bf16.msra.mxu0 %v4908
  %4917 = vmatprep.subr.bf16.mxu0 0
  %4918 = vmatpush1.bf16.msra.mxu0 %v4909
  %4919 = vmatprep.subr.bf16.mxu0 0
  %4920 = vmatpush1.bf16.msra.mxu0 0
  %4921 = vmatprep.subr.bf16.mxu0 0
  %4922 = vmatpush1.bf16.msra.mxu0 0
  %4923 = vmatprep.subr.bf16.mxu0 0
  %4924 = vmatpush1.bf16.msra.mxu0 0
  %4925 = vmatprep.subr.bf16.mxu0 0
  %4926 = vmatpush1.bf16.msra.mxu0 0
  %4927 = vmatprep.subr.bf16.mxu0 0
  %4928 = vmatpush1.bf16.msra.mxu0 0
  %4929 = vmatprep.subr.bf16.mxu0 0
  %4930 = vmatpush1.bf16.msra.mxu0 0
  %4931 = vmatprep.subr.bf16.mxu0 0
  %4932 = vmatpush1.bf16.msra.mxu0 0
  %4933 = vmatprep.subr.bf16.mxu0 0
  %4934 = vmatpush1.bf16.msra.mxu0 0
  %4935 = vmatprep.subr.bf16.mxu0 0
  %4936 = vmatpush1.bf16.msra.mxu0 0
  %4937 = vmatprep.subr.bf16.mxu0 0
  %4938 = vmatpush1.bf16.msra.mxu0 0
  %4939 = vmatprep.subr.bf16.mxu0 0
  %4940 = vmatpush1.bf16.msra.mxu0 0
  %4941 = vmatprep.subr.bf16.mxu0 0
  %4942 = vmatpush1.bf16.msra.mxu0 0
  %4943 = vmatprep.subr.bf16.mxu0 0
  %4944 = vmatpush1.bf16.msra.mxu0 0
  %4945 = vmatprep.subr.bf16.mxu0 0
  %4946 = vmatpush1.bf16.msra.mxu0 0
  %4947 = vmatprep.mubr.bf16.mxu0 0
  %4948 = vmatmul.mubr.bf16.gmra.mrb[0].mxu0 %v4913
  %v4949 = vpop.f32.mrb[0].mxu0
  %v4950 = vadd.f32 %v4898, %v4949
  %v4951 = vpop.f32.mrb[0].mxu0
  %v4952 = vpop.f32.mrb[0].mxu0
  %v4953 = vpop.f32.mrb[0].mxu0
  %4954 = vdwg.mxu0
  %4955 = vmax.xlane.f32.xlu0 %v4950
  %v4956 = vpop.xlane.xlu0 %4955
  %v4957 = vsub.f32 %v4950, %v4956
  %v4958 = vmul.f32 %v4957, 1.442695
  %v4959 = vpow.pop %v4958
  %4960 = vadd.xlane.f32.xlu0 %v4959
  %v4961 = vpop.xlane.xlu0 %4960
  %v4962 = vrcp.pop %v4961
  %v4963 = vmul.f32 %v4959, %v4962
  %4965 = vset.pattern.permute.xlu0 0
  %4966 = vperm.xlu0 %4965, %v4963
  %v4967 = vpop.permute.xlu0 %4966
  %v4969 = vmul.f32 %v4967, %v386
  %4970 = vset.pattern.permute.xlu0 1
  %4971 = vperm.xlu0 %4970, %v4963
  %v4972 = vpop.permute.xlu0 %4971
  %v4974 = vmul.f32 %v4972, %v3933
  %v4975 = vadd.f32 %v4969, %v4974
  %4976 = vset.pattern.permute.xlu0 2
  %4977 = vperm.xlu0 %4976, %v4963
  %v4978 = vpop.permute.xlu0 %4977
  %v4980 = vmul.f32 %v4978, %v4776
  %v4981 = vadd.f32 %v4975, %v4980
  %v4982 = vpack.c.bf16 %v4981, %v4981
  %v4983 = vld [vmem:[%s53] sm:$0xff]
  %v4984 = vld [vmem:[%s53 + $0x8] sm:$0xff]
  %v4985 = vld [vmem:[%s53 + $0x10] sm:$0xff]
  %v4986 = vld [vmem:[%s53 + $0x18] sm:$0xff]
  %v4987 = vld [vmem:[%s55] sm:$0x3]
  %v4989 = vlaneseq
  %v4990 = vshrl.u32 %v4989, 7
  %v4991 = vsub.s32 0, %v4990
  %v4992 = vrot.slane %v4987, %v4991
  %v4993 = vlaneseq
  %v4994 = vshrl.u32 %v4993, 7
  %v4995 = vsub.s32 1, %v4994
  %v4996 = vrot.slane %v4987, %v4995
  %v5003 = vunpack.c.l.b16 %v4983
  %v5004 = vunpack.c.h.b16 %v4983
  %v5005 = vunpack.c.l.b16 %v4984
  %v5006 = vunpack.c.h.b16 %v4984
  %v5007 = vunpack.c.l.b16 %v4985
  %v5008 = vunpack.c.h.b16 %v4985
  %v5009 = vunpack.c.l.b16 %v4986
  %v5010 = vunpack.c.h.b16 %v4986
  %v5011 = vpack.c.b16 %v5005, %v5003
  %v5012 = vpack.c.b16 %v5006, %v5004
  %v5013 = vpack.c.b16 %v5009, %v5007
  %v5014 = vpack.c.b16 %v5010, %v5008
  %v5020 = vsel %vm289, %v4982, 0
  %5022 = vmatprep.subr.bf16.mxu0 %v5012
  %5023 = vmatpush1.bf16.msra.mxu0 %v5011
  %5024 = vmatprep.subr.bf16.mxu0 %v5014
  %5025 = vmatpush1.bf16.msra.mxu0 %v5013
  %5026 = vmatprep.subr.bf16.mxu0 0
  %5027 = vmatpush1.bf16.msra.mxu0 0
  %5028 = vmatprep.subr.bf16.mxu0 0
  %5029 = vmatpush1.bf16.msra.mxu0 0
  %5030 = vmatprep.subr.bf16.mxu0 0
  %5031 = vmatpush1.bf16.msra.mxu0 0
  %5032 = vmatprep.subr.bf16.mxu0 0
  %5033 = vmatpush1.bf16.msra.mxu0 0
  %5034 = vmatprep.subr.bf16.mxu0 0
  %5035 = vmatpush1.bf16.msra.mxu0 0
  %5036 = vmatprep.subr.bf16.mxu0 0
  %5037 = vmatpush1.bf16.msra.mxu0 0
  %5038 = vmatprep.subr.bf16.mxu0 0
  %5039 = vmatpush1.bf16.msra.mxu0 0
  %5040 = vmatprep.subr.bf16.mxu0 0
  %5041 = vmatpush1.bf16.msra.mxu0 0
  %5042 = vmatprep.subr.bf16.mxu0 0
  %5043 = vmatpush1.bf16.msra.mxu0 0
  %5044 = vmatprep.subr.bf16.mxu0 0
  %5045 = vmatpush1.bf16.msra.mxu0 0
  %5046 = vmatprep.subr.bf16.mxu0 0
  %5047 = vmatpush1.bf16.msra.mxu0 0
  %5048 = vmatprep.subr.bf16.mxu0 0
  %5049 = vmatpush1.bf16.msra.mxu0 0
  %5050 = vmatprep.subr.bf16.mxu0 0
  %5051 = vmatpush1.bf16.msra.mxu0 0
  %5052 = vmatprep.subr.bf16.mxu0 0
  %5053 = vmatpush1.bf16.msra.mxu0 0
  %5054 = vmatprep.mubr.bf16.mxu0 0
  %5055 = vmatmul.mubr.bf16.gmra.mrb[0].mxu0 %v5020
  %v5056 = vpop.f32.mrb[0].mxu0
  %v5057 = vadd.f32 %v4992, %v5056
  %v5058 = vpop.f32.mrb[0].mxu0
  %v5059 = vadd.f32 %v4996, %v5058
  %v5060 = vpop.f32.mrb[0].mxu0
  %v5061 = vpop.f32.mrb[0].mxu0
  %5062 = vdwg.mxu0
  %v5063 = vmax.f32 %v5057, 0.0
  %v5064 = vmax.f32 %v5059, 0.0
  %v5065 = vpack.c.bf16 %v5063, %v5063
  %v5066 = vpack.c.bf16 %v5064, %v5064
  %v5067 = vld [vmem:[%s57] sm:$0xf]
  %v5068 = vld [vmem:[%s57 + $0x4] sm:$0xf]
  %v5069 = vld [vmem:[%s57 + $0x8] sm:$0xf]
  %v5070 = vld [vmem:[%s57 + $0xc] sm:$0xf]
  %v5071 = vld [vmem:[%s57 + $0x10] sm:$0xf]
  %v5072 = vld [vmem:[%s57 + $0x14] sm:$0xf]
  %v5073 = vld [vmem:[%s57 + $0x18] sm:$0xf]
  %v5074 = vld [vmem:[%s57 + $0x1c] sm:$0xf]
  %v5075 = vld [vmem:[%s57 + $0x20] sm:$0xf]
  %v5076 = vld [vmem:[%s57 + $0x24] sm:$0xf]
  %v5077 = vld [vmem:[%s57 + $0x28] sm:$0xf]
  %v5078 = vld [vmem:[%s57 + $0x2c] sm:$0xf]
  %v5079 = vld [vmem:[%s57 + $0x30] sm:$0xf]
  %v5080 = vld [vmem:[%s57 + $0x34] sm:$0xf]
  %v5081 = vld [vmem:[%s57 + $0x38] sm:$0xf]
  %v5082 = vld [vmem:[%s57 + $0x3c] sm:$0xf]
  %v5083 = vld [vmem:[%s57 + $0x40] sm:$0xf]
  %v5084 = vld [vmem:[%s57 + $0x44] sm:$0xf]
  %v5085 = vld [vmem:[%s57 + $0x48] sm:$0xf]
  %v5086 = vld [vmem:[%s57 + $0x4c] sm:$0xf]
  %v5087 = vld [vmem:[%s57 + $0x50] sm:$0xf]
  %v5088 = vld [vmem:[%s57 + $0x54] sm:$0xf]
  %v5089 = vld [vmem:[%s57 + $0x58] sm:$0xf]
  %v5090 = vld [vmem:[%s57 + $0x5c] sm:$0xf]
  %v5091 = vld [vmem:[%s57 + $0x60] sm:$0xf]
  %v5092 = vld [vmem:[%s57 + $0x64] sm:$0xf]
  %v5093 = vld [vmem:[%s57 + $0x68] sm:$0xf]
  %v5094 = vld [vmem:[%s57 + $0x6c] sm:$0xf]
  %v5095 = vld [vmem:[%s57 + $0x70] sm:$0xf]
  %v5096 = vld [vmem:[%s57 + $0x74] sm:$0xf]
  %v5097 = vld [vmem:[%s57 + $0x78] sm:$0xf]
  %v5098 = vld [vmem:[%s57 + $0x7c] sm:$0xf]
  %v5099 = vld [vmem:[%s59] sm:$0x1]
  %v5101 = vlaneseq
  %v5102 = vshrl.u32 %v5101, 7
  %v5103 = vsub.s32 0, %v5102
  %v5104 = vrot.slane %v5099, %v5103
  %v5138 = vunpack.c.l.b16 %v5067
  %v5139 = vunpack.c.l.b16 %v5068
  %v5140 = vunpack.c.l.b16 %v5069
  %v5141 = vunpack.c.l.b16 %v5070
  %v5142 = vunpack.c.l.b16 %v5071
  %v5143 = vunpack.c.l.b16 %v5072
  %v5144 = vunpack.c.l.b16 %v5073
  %v5145 = vunpack.c.l.b16 %v5074
  %v5146 = vunpack.c.l.b16 %v5075
  %v5147 = vunpack.c.l.b16 %v5076
  %v5148 = vunpack.c.l.b16 %v5077
  %v5149 = vunpack.c.l.b16 %v5078
  %v5150 = vunpack.c.l.b16 %v5079
  %v5151 = vunpack.c.l.b16 %v5080
  %v5152 = vunpack.c.l.b16 %v5081
  %v5153 = vunpack.c.l.b16 %v5082
  %v5154 = vunpack.c.l.b16 %v5083
  %v5155 = vunpack.c.l.b16 %v5084
  %v5156 = vunpack.c.l.b16 %v5085
  %v5157 = vunpack.c.l.b16 %v5086
  %v5158 = vunpack.c.l.b16 %v5087
  %v5159 = vunpack.c.l.b16 %v5088
  %v5160 = vunpack.c.l.b16 %v5089
  %v5161 = vunpack.c.l.b16 %v5090
  %v5162 = vunpack.c.l.b16 %v5091
  %v5163 = vunpack.c.l.b16 %v5092
  %v5164 = vunpack.c.l.b16 %v5093
  %v5165 = vunpack.c.l.b16 %v5094
  %v5166 = vunpack.c.l.b16 %v5095
  %v5167 = vunpack.c.l.b16 %v5096
  %v5168 = vunpack.c.l.b16 %v5097
  %v5169 = vunpack.c.l.b16 %v5098
  %v5170 = vpack.c.b16 %v5139, %v5138
  %v5171 = vpack.c.b16 %v5141, %v5140
  %v5172 = vpack.c.b16 %v5143, %v5142
  %v5173 = vpack.c.b16 %v5145, %v5144
  %v5174 = vpack.c.b16 %v5147, %v5146
  %v5175 = vpack.c.b16 %v5149, %v5148
  %v5176 = vpack.c.b16 %v5151, %v5150
  %v5177 = vpack.c.b16 %v5153, %v5152
  %v5178 = vpack.c.b16 %v5155, %v5154
  %v5179 = vpack.c.b16 %v5157, %v5156
  %v5180 = vpack.c.b16 %v5159, %v5158
  %v5181 = vpack.c.b16 %v5161, %v5160
  %v5182 = vpack.c.b16 %v5163, %v5162
  %v5183 = vpack.c.b16 %v5165, %v5164
  %v5184 = vpack.c.b16 %v5167, %v5166
  %v5185 = vpack.c.b16 %v5169, %v5168
  %5202 = vmatprep.subr.bf16.mxu0 0
  %5203 = vmatpush1.bf16.msra.mxu0 %v5170
  %5204 = vmatprep.subr.bf16.mxu0 0
  %5205 = vmatpush1.bf16.msra.mxu0 %v5171
  %5206 = vmatprep.subr.bf16.mxu0 0
  %5207 = vmatpush1.bf16.msra.mxu0 %v5172
  %5208 = vmatprep.subr.bf16.mxu0 0
  %5209 = vmatpush1.bf16.msra.mxu0 %v5173
  %5210 = vmatprep.subr.bf16.mxu0 0
  %5211 = vmatpush1.bf16.msra.mxu0 %v5174
  %5212 = vmatprep.subr.bf16.mxu0 0
  %5213 = vmatpush1.bf16.msra.mxu0 %v5175
  %5214 = vmatprep.subr.bf16.mxu0 0
  %5215 = vmatpush1.bf16.msra.mxu0 %v5176
  %5216 = vmatprep.subr.bf16.mxu0 0
  %5217 = vmatpush1.bf16.msra.mxu0 %v5177
  %5218 = vmatprep.subr.bf16.mxu0 0
  %5219 = vmatpush1.bf16.msra.mxu0 %v5178
  %5220 = vmatprep.subr.bf16.mxu0 0
  %5221 = vmatpush1.bf16.msra.mxu0 %v5179
  %5222 = vmatprep.subr.bf16.mxu0 0
  %5223 = vmatpush1.bf16.msra.mxu0 %v5180
  %5224 = vmatprep.subr.bf16.mxu0 0
  %5225 = vmatpush1.bf16.msra.mxu0 %v5181
  %5226 = vmatprep.subr.bf16.mxu0 0
  %5227 = vmatpush1.bf16.msra.mxu0 %v5182
  %5228 = vmatprep.subr.bf16.mxu0 0
  %5229 = vmatpush1.bf16.msra.mxu0 %v5183
  %5230 = vmatprep.subr.bf16.mxu0 0
  %5231 = vmatpush1.bf16.msra.mxu0 %v5184
  %5232 = vmatprep.subr.bf16.mxu0 0
  %5233 = vmatpush1.bf16.msra.mxu0 %v5185
  %5234 = vmatprep.mubr.bf16.mxu0 %v5066
  %5235 = vmatmul.mubr.bf16.gmra.mrb[0].mxu0 %v5065
  %v5236 = vpop.f32.mrb[0].mxu0
  %v5237 = vadd.f32 %v5104, %v5236
  %v5238 = vpop.f32.mrb[0].mxu0
  %v5239 = vpop.f32.mrb[0].mxu0
  %v5240 = vpop.f32.mrb[0].mxu0
  %5241 = vdwg.mxu0
  %v5242 = vmax.f32 %v5237, 0.0
  %v5243 = vpack.c.bf16 %v5242, %v5242
  %v5244 = vld [vmem:[%s61] sm:$0xf]
  %v5245 = vld [vmem:[%s61 + $0x4] sm:$0xf]
  %v5246 = vld [vmem:[%s61 + $0x8] sm:$0xf]
  %v5247 = vld [vmem:[%s61 + $0xc] sm:$0xf]
  %v5248 = vld [vmem:[%s61 + $0x10] sm:$0xf]
  %v5249 = vld [vmem:[%s61 + $0x14] sm:$0xf]
  %v5250 = vld [vmem:[%s61 + $0x18] sm:$0xf]
  %v5251 = vld [vmem:[%s61 + $0x1c] sm:$0xf]
  %v5252 = vld [vmem:[%s61 + $0x20] sm:$0xf]
  %v5253 = vld [vmem:[%s61 + $0x24] sm:$0xf]
  %v5254 = vld [vmem:[%s61 + $0x28] sm:$0xf]
  %v5255 = vld [vmem:[%s61 + $0x2c] sm:$0xf]
  %v5256 = vld [vmem:[%s61 + $0x30] sm:$0xf]
  %v5257 = vld [vmem:[%s61 + $0x34] sm:$0xf]
  %v5258 = vld [vmem:[%s61 + $0x38] sm:$0xf]
  %v5259 = vld [vmem:[%s61 + $0x3c] sm:$0xf]
  %v5260 = vld [vmem:[%s63] sm:$0x1]
  %v5262 = vlaneseq
  %v5263 = vshrl.u32 %v5262, 7
  %v5264 = vsub.s32 0, %v5263
  %v5265 = vrot.slane %v5260, %v5264
  %v5283 = vunpack.c.l.b16 %v5244
  %v5284 = vunpack.c.l.b16 %v5245
  %v5285 = vunpack.c.l.b16 %v5246
  %v5286 = vunpack.c.l.b16 %v5247
  %v5287 = vunpack.c.l.b16 %v5248
  %v5288 = vunpack.c.l.b16 %v5249
  %v5289 = vunpack.c.l.b16 %v5250
  %v5290 = vunpack.c.l.b16 %v5251
  %v5291 = vunpack.c.l.b16 %v5252
  %v5292 = vunpack.c.l.b16 %v5253
  %v5293 = vunpack.c.l.b16 %v5254
  %v5294 = vunpack.c.l.b16 %v5255
  %v5295 = vunpack.c.l.b16 %v5256
  %v5296 = vunpack.c.l.b16 %v5257
  %v5297 = vunpack.c.l.b16 %v5258
  %v5298 = vunpack.c.l.b16 %v5259
  %v5299 = vpack.c.b16 %v5284, %v5283
  %v5300 = vpack.c.b16 %v5286, %v5285
  %v5301 = vpack.c.b16 %v5288, %v5287
  %v5302 = vpack.c.b16 %v5290, %v5289
  %v5303 = vpack.c.b16 %v5292, %v5291
  %v5304 = vpack.c.b16 %v5294, %v5293
  %v5305 = vpack.c.b16 %v5296, %v5295
  %v5306 = vpack.c.b16 %v5298, %v5297
  %5315 = vmatprep.subr.bf16.mxu0 0
  %5316 = vmatpush1.bf16.msra.mxu0 %v5299
  %5317 = vmatprep.subr.bf16.mxu0 0
  %5318 = vmatpush1.bf16.msra.mxu0 %v5300
  %5319 = vmatprep.subr.bf16.mxu0 0
  %5320 = vmatpush1.bf16.msra.mxu0 %v5301
  %5321 = vmatprep.subr.bf16.mxu0 0
  %5322 = vmatpush1.bf16.msra.mxu0 %v5302
  %5323 = vmatprep.subr.bf16.mxu0 0
  %5324 = vmatpush1.bf16.msra.mxu0 %v5303
  %5325 = vmatprep.subr.bf16.mxu0 0
  %5326 = vmatpush1.bf16.msra.mxu0 %v5304
  %5327 = vmatprep.subr.bf16.mxu0 0
  %5328 = vmatpush1.bf16.msra.mxu0 %v5305
  %5329 = vmatprep.subr.bf16.mxu0 0
  %5330 = vmatpush1.bf16.msra.mxu0 %v5306
  %5331 = vmatprep.subr.bf16.mxu0 0
  %5332 = vmatpush1.bf16.msra.mxu0 0
  %5333 = vmatprep.subr.bf16.mxu0 0
  %5334 = vmatpush1.bf16.msra.mxu0 0
  %5335 = vmatprep.subr.bf16.mxu0 0
  %5336 = vmatpush1.bf16.msra.mxu0 0
  %5337 = vmatprep.subr.bf16.mxu0 0
  %5338 = vmatpush1.bf16.msra.mxu0 0
  %5339 = vmatprep.subr.bf16.mxu0 0
  %5340 = vmatpush1.bf16.msra.mxu0 0
  %5341 = vmatprep.subr.bf16.mxu0 0
  %5342 = vmatpush1.bf16.msra.mxu0 0
  %5343 = vmatprep.subr.bf16.mxu0 0
  %5344 = vmatpush1.bf16.msra.mxu0 0
  %5345 = vmatprep.subr.bf16.mxu0 0
  %5346 = vmatpush1.bf16.msra.mxu0 0
  %5347 = vmatprep.mubr.bf16.mxu0 0
  %5348 = vmatmul.mubr.bf16.gmra.mrb[0].mxu0 %v5243
  %v5349 = vpop.f32.mrb[0].mxu0
  %v5350 = vadd.f32 %v5265, %v5349
  %v5351 = vpop.f32.mrb[0].mxu0
  %v5352 = vpop.f32.mrb[0].mxu0
  %v5353 = vpop.f32.mrb[0].mxu0
  %5354 = vdwg.mxu0
  %5355 = vmax.xlane.f32.xlu0 %v5350
  %v5356 = vpop.xlane.xlu0 %5355
  %v5357 = vsub.f32 %v5350, %v5356
  %v5358 = vmul.f32 %v5357, 1.442695
  %v5359 = vpow.pop %v5358
  %5360 = vadd.xlane.f32.xlu0 %v5359
  %v5361 = vpop.xlane.xlu0 %5360
  %v5362 = vrcp.pop %v5361
  %v5363 = vmul.f32 %v5359, %v5362
  %5364 = vst [vmem:[%s65] sm:$0xff] %v5363
  // Predicated region
  $region130: #{accident_prediction_forward.1} parent=0 // pred_check
    _
  $region131: #{accident_prediction_forward.1} parent=0 // pred_check_branch
    %5366 = sbr.rel (0) target = $region133
  $region132: #{accident_prediction_forward.1} parent=0 // pred_region
    _
  $region133: #{accident_prediction_forward.1} parent=0 // pred_fallthru
    _
  // Predicated region
  $region134: #{accident_prediction_forward.1} parent=0 // pred_check
    _
  $region135: #{accident_prediction_forward.1} parent=0 // pred_check_branch
    %5368 = sbr.rel (0) target = $region137
  $region136: #{accident_prediction_forward.1} parent=0 // pred_region
    _
  $region137: #{accident_prediction_forward.1} parent=0 // pred_fallthru
    _

</llo_original>
